<compile_context>
chip_gen: v7x
topology: tpu7x:2x2x1
jax: 0.10.0
libtpu: 0.0.40
codegen_flags: <defaults>
</compile_context>

<pallas_src>
import functools

import jax
import jax.numpy as jnp
from jax.experimental import pallas as pl
from jax.experimental.pallas import tpu as pltpu

# ----------------------------- model config --------------------------------
VOCAB = 20
EMBED = 32
HEADS = 4
LAYERS = 2
FF_DIM = 64
MAX_SEQ = 10
SEQ = 8
BATCH = 2

VPAD = 128          # lane-dense padded vocab dim for the output head
NEG = -1e30         # finite large-negative additive-mask value (no -inf)
PER_LAYER = 18      # parameter arrays per decoder layer


# ----------------------------- kernel helpers ------------------------------
def _mm(a, b):
    """a @ b on the MXU with bf16 operands and f32 accumulation."""
    return jnp.dot(a.astype(jnp.bfloat16), b.astype(jnp.bfloat16),
                   preferred_element_type=jnp.float32)


def _mm_nt(a, b):
    """a @ b.T on the MXU (transposed-rhs contraction; no explicit relayout)."""
    return jax.lax.dot_general(
        a.astype(jnp.bfloat16), b.astype(jnp.bfloat16),
        dimension_numbers=(((1,), (1,)), ((), ())),
        preferred_element_type=jnp.float32)


def _layernorm(x, g, b, eps=1e-5):
    mu = jnp.mean(x, axis=-1, keepdims=True)
    var = jnp.mean((x - mu) ** 2, axis=-1, keepdims=True)
    return (x - mu) * jax.lax.rsqrt(var + eps) * g + b


def _mha(xq, xkv, wqkv, bqkv, wo, bo, addmask, *, num_heads, fused_kv):
    """Multi-head attention over batch-flattened rows. xq/xkv: (N, E)."""
    E = xq.shape[-1]
    dh = E // num_heads
    scale = 1.0 / (dh ** 0.5)

    if fused_kv:                          # self-attention: single QKV matmul
        qkv = _mm(xq, wqkv) + bqkv
        q, k, v = qkv[:, :E], qkv[:, E:2 * E], qkv[:, 2 * E:]
    else:                                 # cross-attention: Q from xq, KV from memory
        q = _mm(xq, wqkv[:, :E]) + bqkv[:, :E]
        kv = _mm(xkv, wqkv[:, E:]) + bqkv[:, E:]
        k, v = kv[:, :E], kv[:, E:]

    outs = []
    for h in range(num_heads):            # small static unroll; each matmul is batched over B
        sl = slice(h * dh, (h + 1) * dh)
        qh, kh, vh = q[:, sl], k[:, sl], v[:, sl]
        s = _mm_nt(qh, kh) * scale + addmask        # (N, N)
        p = jax.nn.softmax(s, axis=-1)
        outs.append(_mm(p, vh))                     # (N, dh)
    o = jnp.concatenate(outs, axis=-1)              # (N, E)
    return _mm(o, wo) + bo


# --------------------------- fully fused kernel ------------------------------
def fused_forward_kernel(tok_ref, emb_ref, pos_ref, fcw_ref, fcb_ref, *rest,
                         num_heads, num_layers, seq, batch):
    layer_refs = rest[:-1]
    out_ref = rest[-1]
    N = batch * seq

    # --- masks built in-kernel (review item: no mask input / DMA) ---
    assert seq & (seq - 1) == 0, "seq must be a power of two for shift/mask index math"
    shift = seq.bit_length() - 1
    row = jax.lax.broadcasted_iota(jnp.int32, (N, N), 0)
    col = jax.lax.broadcasted_iota(jnp.int32, (N, N), 1)
    same_b = (row >> shift) == (col >> shift)            # block-diagonal (same batch elem)
    causal = (col & (seq - 1)) <= (row & (seq - 1))      # causal within the sequence
    self_mask = jnp.where(same_b & causal, 0.0, NEG).astype(jnp.float32)
    cross_mask = jnp.where(same_b, 0.0, NEG).astype(jnp.float32)

    # --- embedding lookup as one-hot matmul + positional encoding ---
    tok = tok_ref[...]                                           # (N, 1) int32
    viota = jax.lax.broadcasted_iota(jnp.int32, (N, VOCAB), 1)
    onehot = (tok == viota).astype(jnp.float32)                  # (N, V)
    x = jnp.dot(onehot, emb_ref[...], preferred_element_type=jnp.float32)
    x = x + pos_ref[...]                                         # (N, E)
    mem = x                                                      # memory fixed across layers

    # --- decoder layers (statically unrolled) ---
    for l in range(num_layers):
        (wqkv_s, bqkv_s, wo_s, bo_s,
         wqkv_c, bqkv_c, wo_c, bo_c,
         w1, b1, w2, b2,
         ln1g, ln1b, ln2g, ln2b, ln3g, ln3b) = [
            r[...] for r in layer_refs[l * PER_LAYER:(l + 1) * PER_LAYER]]

        # masked self-attention + residual + LayerNorm (dropout == identity)
        sa = _mha(x, x, wqkv_s, bqkv_s, wo_s, bo_s, self_mask,
                  num_heads=num_heads, fused_kv=True)
        x = _layernorm(x + sa, ln1g, ln1b)

        # cross-attention to memory + residual + LayerNorm
        ca = _mha(x, mem, wqkv_c, bqkv_c, wo_c, bo_c, cross_mask,
                  num_heads=num_heads, fused_kv=False)
        x = _layernorm(x + ca, ln2g, ln2b)

        # feed-forward (ReLU) + residual + LayerNorm
        h = jnp.maximum(_mm(x, w1) + b1, 0.0)
        ff = _mm(h, w2) + b2
        x = _layernorm(x + ff, ln3g, ln3b)

    # --- output head, written lane-dense into a (N, 128)-padded slab ---
    out_ref[...] = _mm(x, fcw_ref[...]) + fcb_ref[...]


# ----------------------------- parameter init --------------------------------
def init_params(key):
    def nrm(k, shape, scale=0.05):
        return jax.random.normal(k, shape, jnp.float32) * scale

    keys = jax.random.split(key, 3 + LAYERS)
    fc_w = nrm(keys[2], (EMBED, VOCAB))
    fc_w_pad = jnp.zeros((EMBED, VPAD), jnp.float32).at[:, :VOCAB].set(fc_w)
    params = {
        "embedding": nrm(keys[0], (VOCAB, EMBED), 1.0),          # like nn.Embedding
        # nn.Parameter(torch.zeros(...)) in the reference; random here just to
        # exercise the add — forward math is identical for any value.
        "pos_enc": nrm(keys[1], (1, MAX_SEQ, EMBED), 0.02),
        "fc_w_pad": fc_w_pad,                                    # fc_out weight^T, zero-padded
        "fc_b_pad": jnp.zeros((1, VPAD), jnp.float32),
        "layers": [],
    }
    for l in range(LAYERS):
        lk = jax.random.split(keys[3 + l], 6)
        layer = (
            # self-attn: fused Wqkv (E,3E), bias (1,3E), out-proj (E,E), bias
            nrm(lk[0], (EMBED, 3 * EMBED)), jnp.zeros((1, 3 * EMBED), jnp.float32),
            nrm(lk[1], (EMBED, EMBED)), jnp.zeros((1, EMBED), jnp.float32),
            # cross-attn: fused Wqkv, bias, out-proj, bias
            nrm(lk[2], (EMBED, 3 * EMBED)), jnp.zeros((1, 3 * EMBED), jnp.float32),
            nrm(lk[3], (EMBED, EMBED)), jnp.zeros((1, EMBED), jnp.float32),
            # FFN: linear1 (E,FF) + bias, linear2 (FF,E) + bias
            nrm(lk[4], (EMBED, FF_DIM)), jnp.zeros((1, FF_DIM), jnp.float32),
            nrm(lk[5], (FF_DIM, EMBED)), jnp.zeros((1, EMBED), jnp.float32),
            # LayerNorm 1/2/3 gamma, beta
            jnp.ones((1, EMBED), jnp.float32), jnp.zeros((1, EMBED), jnp.float32),
            jnp.ones((1, EMBED), jnp.float32), jnp.zeros((1, EMBED), jnp.float32),
            jnp.ones((1, EMBED), jnp.float32), jnp.zeros((1, EMBED), jnp.float32),
        )
        assert len(layer) == PER_LAYER
        params["layers"].append(layer)
    return params


# ------------------------------ full forward ---------------------------------
def model_forward(tokens, params):
    B, S = tokens.shape
    N = B * S
    tok2d = tokens.reshape(N, 1).astype(jnp.int32)
    # tile positional encoding over the batch (wrapper-side layout plumbing)
    pos = jnp.broadcast_to(params["pos_enc"][0, :S, :], (B, S, EMBED)).reshape(N, EMBED)
    flat_layer_params = [w for layer in params["layers"] for w in layer]
    n_inputs = 5 + len(flat_layer_params)

    kernel = functools.partial(fused_forward_kernel, num_heads=HEADS,
                               num_layers=LAYERS, seq=S, batch=B)
    logits_pad = pl.pallas_call(
        kernel,
        out_shape=jax.ShapeDtypeStruct((N, VPAD), jnp.float32),
        in_specs=[pl.BlockSpec(memory_space=pltpu.MemorySpace.VMEM)] * n_inputs,
        out_specs=pl.BlockSpec(memory_space=pltpu.MemorySpace.VMEM),
    )(tok2d, params["embedding"], pos, params["fc_w_pad"], params["fc_b_pad"],
      *flat_layer_params)

    return logits_pad[:, :VOCAB].reshape(B, S, VOCAB)


# TODO(synk): dropout (p=0.1) inside TransformerDecoderLayer is modeled as
# identity (eval-mode forward); training-mode stochastic dropout not implemented.

if __name__ == "__main__":
    key = jax.random.PRNGKey(0)
    pkey, tkey = jax.random.split(key)
    params = init_params(pkey)
    tokens = jax.random.randint(tkey, (BATCH, SEQ), 0, VOCAB, dtype=jnp.int32)

    logits = model_forward(tokens, params)
    logits = jax.block_until_ready(logits)

    assert logits.shape == (BATCH, SEQ, VOCAB)
    assert bool(jnp.all(jnp.isfinite(logits)))
    print("KERNEL_OK")
</pallas_src>

<mosaic_0001>
module attributes {stable_mosaic.version = 11 : i64} {
  func.func @fused_forward_kernel(%arg0: memref<16x1xi32, #tpu.memory_space<vmem>>, %arg1: memref<20x32xf32, #tpu.memory_space<vmem>>, %arg2: memref<16x32xf32, #tpu.memory_space<vmem>>, %arg3: memref<32x128xf32, #tpu.memory_space<vmem>>, %arg4: memref<1x128xf32, #tpu.memory_space<vmem>>, %arg5: memref<32x96xf32, #tpu.memory_space<vmem>>, %arg6: memref<1x96xf32, #tpu.memory_space<vmem>>, %arg7: memref<32x32xf32, #tpu.memory_space<vmem>>, %arg8: memref<1x32xf32, #tpu.memory_space<vmem>>, %arg9: memref<32x96xf32, #tpu.memory_space<vmem>>, %arg10: memref<1x96xf32, #tpu.memory_space<vmem>>, %arg11: memref<32x32xf32, #tpu.memory_space<vmem>>, %arg12: memref<1x32xf32, #tpu.memory_space<vmem>>, %arg13: memref<32x64xf32, #tpu.memory_space<vmem>>, %arg14: memref<1x64xf32, #tpu.memory_space<vmem>>, %arg15: memref<64x32xf32, #tpu.memory_space<vmem>>, %arg16: memref<1x32xf32, #tpu.memory_space<vmem>>, %arg17: memref<1x32xf32, #tpu.memory_space<vmem>>, %arg18: memref<1x32xf32, #tpu.memory_space<vmem>>, %arg19: memref<1x32xf32, #tpu.memory_space<vmem>>, %arg20: memref<1x32xf32, #tpu.memory_space<vmem>>, %arg21: memref<1x32xf32, #tpu.memory_space<vmem>>, %arg22: memref<1x32xf32, #tpu.memory_space<vmem>>, %arg23: memref<32x96xf32, #tpu.memory_space<vmem>>, %arg24: memref<1x96xf32, #tpu.memory_space<vmem>>, %arg25: memref<32x32xf32, #tpu.memory_space<vmem>>, %arg26: memref<1x32xf32, #tpu.memory_space<vmem>>, %arg27: memref<32x96xf32, #tpu.memory_space<vmem>>, %arg28: memref<1x96xf32, #tpu.memory_space<vmem>>, %arg29: memref<32x32xf32, #tpu.memory_space<vmem>>, %arg30: memref<1x32xf32, #tpu.memory_space<vmem>>, %arg31: memref<32x64xf32, #tpu.memory_space<vmem>>, %arg32: memref<1x64xf32, #tpu.memory_space<vmem>>, %arg33: memref<64x32xf32, #tpu.memory_space<vmem>>, %arg34: memref<1x32xf32, #tpu.memory_space<vmem>>, %arg35: memref<1x32xf32, #tpu.memory_space<vmem>>, %arg36: memref<1x32xf32, #tpu.memory_space<vmem>>, %arg37: memref<1x32xf32, #tpu.memory_space<vmem>>, %arg38: memref<1x32xf32, #tpu.memory_space<vmem>>, %arg39: memref<1x32xf32, #tpu.memory_space<vmem>>, %arg40: memref<1x32xf32, #tpu.memory_space<vmem>>, %arg41: memref<16x128xf32, #tpu.memory_space<vmem>>) attributes {dimension_semantics = [], scalar_prefetch = 0 : i64, scratch_operands = 0 : i64, tpu.core_type = #tpu.core_type<tc>} {
    %0 = tpu.iota {dimensions = array<i32: 0>} : vector<16x16xi32>
    %1 = tpu.iota {dimensions = array<i32: 1>} : vector<16x16xi32>
    %c3_i32 = arith.constant 3 : i32
    %2 = vector.broadcast %c3_i32 : i32 to vector<16x16xi32>
    %3 = arith.shrsi %0, %2 : vector<16x16xi32>
    %c3_i32_0 = arith.constant 3 : i32
    %4 = vector.broadcast %c3_i32_0 : i32 to vector<16x16xi32>
    %5 = arith.shrsi %1, %4 : vector<16x16xi32>
    %6 = arith.cmpi eq, %3, %5 : vector<16x16xi32>
    %c7_i32 = arith.constant 7 : i32
    %7 = vector.broadcast %c7_i32 : i32 to vector<16x16xi32>
    %8 = arith.andi %1, %7 : vector<16x16xi32>
    %c7_i32_1 = arith.constant 7 : i32
    %9 = vector.broadcast %c7_i32_1 : i32 to vector<16x16xi32>
    %10 = arith.andi %0, %9 : vector<16x16xi32>
    %11 = arith.cmpi sle, %8, %10 : vector<16x16xi32>
    %12 = arith.andi %6, %11 : vector<16x16xi1>
    %cst = arith.constant 0.000000e+00 : f32
    %cst_2 = arith.constant -1.000000e+30 : f32
    %13 = vector.broadcast %cst : f32 to vector<16x16xf32>
    %14 = vector.broadcast %cst_2 : f32 to vector<16x16xf32>
    %15 = arith.select %12, %13, %14 : vector<16x16xi1>, vector<16x16xf32>
    %cst_3 = arith.constant 0.000000e+00 : f32
    %cst_4 = arith.constant -1.000000e+30 : f32
    %16 = vector.broadcast %cst_3 : f32 to vector<16x16xf32>
    %17 = vector.broadcast %cst_4 : f32 to vector<16x16xf32>
    %18 = arith.select %6, %16, %17 : vector<16x16xi1>, vector<16x16xf32>
    %c0 = arith.constant 0 : index
    %c0_5 = arith.constant 0 : index
    %19 = vector.load %arg0[%c0, %c0_5] : memref<16x1xi32, #tpu.memory_space<vmem>>, vector<16x1xi32>
    %20 = tpu.iota {dimensions = array<i32: 1>} : vector<16x20xi32>
    %21 = vector.broadcast %19 : vector<16x1xi32> to vector<16x20xi32>
    %22 = arith.cmpi eq, %21, %20 : vector<16x20xi32>
    %23 = arith.extui %22 : vector<16x20xi1> to vector<16x20xi32>
    %24 = arith.sitofp %23 : vector<16x20xi32> to vector<16x20xf32>
    %c0_6 = arith.constant 0 : index
    %c0_7 = arith.constant 0 : index
    %25 = vector.load %arg1[%c0_6, %c0_7] : memref<20x32xf32, #tpu.memory_space<vmem>>, vector<20x32xf32>
    %cst_8 = arith.constant dense<0.000000e+00> : vector<16x32xf32>
    %26 = tpu.matmul %24, %25, %cst_8 {dimension_numbers = #tpu.dot_dimension_numbers<[1], [0], [0], [1], [0, 0, 1, 1], [], []>} : vector<16x20xf32>, vector<20x32xf32>, vector<16x32xf32> -> vector<16x32xf32>
    %c0_9 = arith.constant 0 : index
    %c0_10 = arith.constant 0 : index
    %27 = vector.load %arg2[%c0_9, %c0_10] : memref<16x32xf32, #tpu.memory_space<vmem>>, vector<16x32xf32>
    %28 = arith.addf %26, %27 : vector<16x32xf32>
    %c0_11 = arith.constant 0 : index
    %c0_12 = arith.constant 0 : index
    %29 = vector.load %arg5[%c0_11, %c0_12] : memref<32x96xf32, #tpu.memory_space<vmem>>, vector<32x96xf32>
    %c0_13 = arith.constant 0 : index
    %c0_14 = arith.constant 0 : index
    %30 = vector.load %arg6[%c0_13, %c0_14] : memref<1x96xf32, #tpu.memory_space<vmem>>, vector<1x96xf32>
    %c0_15 = arith.constant 0 : index
    %c0_16 = arith.constant 0 : index
    %31 = vector.load %arg7[%c0_15, %c0_16] : memref<32x32xf32, #tpu.memory_space<vmem>>, vector<32x32xf32>
    %c0_17 = arith.constant 0 : index
    %c0_18 = arith.constant 0 : index
    %32 = vector.load %arg8[%c0_17, %c0_18] : memref<1x32xf32, #tpu.memory_space<vmem>>, vector<1x32xf32>
    %c0_19 = arith.constant 0 : index
    %c0_20 = arith.constant 0 : index
    %33 = vector.load %arg9[%c0_19, %c0_20] : memref<32x96xf32, #tpu.memory_space<vmem>>, vector<32x96xf32>
    %c0_21 = arith.constant 0 : index
    %c0_22 = arith.constant 0 : index
    %34 = vector.load %arg10[%c0_21, %c0_22] : memref<1x96xf32, #tpu.memory_space<vmem>>, vector<1x96xf32>
    %c0_23 = arith.constant 0 : index
    %c0_24 = arith.constant 0 : index
    %35 = vector.load %arg11[%c0_23, %c0_24] : memref<32x32xf32, #tpu.memory_space<vmem>>, vector<32x32xf32>
    %c0_25 = arith.constant 0 : index
    %c0_26 = arith.constant 0 : index
    %36 = vector.load %arg12[%c0_25, %c0_26] : memref<1x32xf32, #tpu.memory_space<vmem>>, vector<1x32xf32>
    %c0_27 = arith.constant 0 : index
    %c0_28 = arith.constant 0 : index
    %37 = vector.load %arg13[%c0_27, %c0_28] : memref<32x64xf32, #tpu.memory_space<vmem>>, vector<32x64xf32>
    %c0_29 = arith.constant 0 : index
    %c0_30 = arith.constant 0 : index
    %38 = vector.load %arg14[%c0_29, %c0_30] : memref<1x64xf32, #tpu.memory_space<vmem>>, vector<1x64xf32>
    %c0_31 = arith.constant 0 : index
    %c0_32 = arith.constant 0 : index
    %39 = vector.load %arg15[%c0_31, %c0_32] : memref<64x32xf32, #tpu.memory_space<vmem>>, vector<64x32xf32>
    %c0_33 = arith.constant 0 : index
    %c0_34 = arith.constant 0 : index
    %40 = vector.load %arg16[%c0_33, %c0_34] : memref<1x32xf32, #tpu.memory_space<vmem>>, vector<1x32xf32>
    %c0_35 = arith.constant 0 : index
    %c0_36 = arith.constant 0 : index
    %41 = vector.load %arg17[%c0_35, %c0_36] : memref<1x32xf32, #tpu.memory_space<vmem>>, vector<1x32xf32>
    %c0_37 = arith.constant 0 : index
    %c0_38 = arith.constant 0 : index
    %42 = vector.load %arg18[%c0_37, %c0_38] : memref<1x32xf32, #tpu.memory_space<vmem>>, vector<1x32xf32>
    %c0_39 = arith.constant 0 : index
    %c0_40 = arith.constant 0 : index
    %43 = vector.load %arg19[%c0_39, %c0_40] : memref<1x32xf32, #tpu.memory_space<vmem>>, vector<1x32xf32>
    %c0_41 = arith.constant 0 : index
    %c0_42 = arith.constant 0 : index
    %44 = vector.load %arg20[%c0_41, %c0_42] : memref<1x32xf32, #tpu.memory_space<vmem>>, vector<1x32xf32>
    %c0_43 = arith.constant 0 : index
    %c0_44 = arith.constant 0 : index
    %45 = vector.load %arg21[%c0_43, %c0_44] : memref<1x32xf32, #tpu.memory_space<vmem>>, vector<1x32xf32>
    %c0_45 = arith.constant 0 : index
    %c0_46 = arith.constant 0 : index
    %46 = vector.load %arg22[%c0_45, %c0_46] : memref<1x32xf32, #tpu.memory_space<vmem>>, vector<1x32xf32>
    %47 = arith.truncf %28 : vector<16x32xf32> to vector<16x32xbf16>
    %48 = arith.truncf %29 : vector<32x96xf32> to vector<32x96xbf16>
    %cst_47 = arith.constant dense<0.000000e+00> : vector<16x96xf32>
    %49 = tpu.matmul %47, %48, %cst_47 {dimension_numbers = #tpu.dot_dimension_numbers<[1], [0], [0], [1], [0, 0, 1, 1], [], []>} : vector<16x32xbf16>, vector<32x96xbf16>, vector<16x96xf32> -> vector<16x96xf32>
    %50 = vector.broadcast %30 : vector<1x96xf32> to vector<16x96xf32>
    %51 = arith.addf %49, %50 : vector<16x96xf32>
    %52 = vector.extract_strided_slice %51 {offsets = [0, 0], sizes = [16, 32], strides = [1, 1]} : vector<16x96xf32> to vector<16x32xf32>
    %53 = vector.extract_strided_slice %51 {offsets = [0, 32], sizes = [16, 32], strides = [1, 1]} : vector<16x96xf32> to vector<16x32xf32>
    %54 = vector.extract_strided_slice %51 {offsets = [0, 64], sizes = [16, 32], strides = [1, 1]} : vector<16x96xf32> to vector<16x32xf32>
    %55 = vector.extract_strided_slice %52 {offsets = [0, 0], sizes = [16, 8], strides = [1, 1]} : vector<16x32xf32> to vector<16x8xf32>
    %56 = vector.extract_strided_slice %53 {offsets = [0, 0], sizes = [16, 8], strides = [1, 1]} : vector<16x32xf32> to vector<16x8xf32>
    %57 = vector.extract_strided_slice %54 {offsets = [0, 0], sizes = [16, 8], strides = [1, 1]} : vector<16x32xf32> to vector<16x8xf32>
    %58 = arith.truncf %55 : vector<16x8xf32> to vector<16x8xbf16>
    %59 = arith.truncf %56 : vector<16x8xf32> to vector<16x8xbf16>
    %cst_48 = arith.constant dense<0.000000e+00> : vector<16x16xf32>
    %60 = tpu.matmul %58, %59, %cst_48 {dimension_numbers = #tpu.dot_dimension_numbers<[1], [1], [0], [0], [0, 0, 1, 0], [], []>} : vector<16x8xbf16>, vector<16x8xbf16>, vector<16x16xf32> -> vector<16x16xf32>
    %cst_49 = arith.constant 0.353553385 : f32
    %61 = vector.broadcast %cst_49 : f32 to vector<16x16xf32>
    %62 = arith.mulf %60, %61 : vector<16x16xf32>
    %63 = arith.addf %62, %15 : vector<16x16xf32>
    %cst_50 = arith.constant dense<0xFF800000> : vector<16xf32>
    %64 = vector.multi_reduction <maximumf>, %63, %cst_50 [1] : vector<16x16xf32> to vector<16xf32>
    %cst_51 = arith.constant 0xFF800000 : f32
    %65 = vector.broadcast %cst_51 : f32 to vector<16xf32>
    %66 = arith.maximumf %65, %64 : vector<16xf32>
    %67 = vector.shape_cast %66 : vector<16xf32> to vector<16x1xf32>
    %68 = vector.broadcast %67 : vector<16x1xf32> to vector<16x16xf32>
    %69 = arith.subf %63, %68 : vector<16x16xf32>
    %70 = math.exp %69 : vector<16x16xf32>
    %cst_52 = arith.constant dense<0.000000e+00> : vector<16xf32>
    %71 = vector.multi_reduction <add>, %70, %cst_52 [1] : vector<16x16xf32> to vector<16xf32>
    %72 = vector.shape_cast %71 : vector<16xf32> to vector<16x1xf32>
    %73 = vector.broadcast %72 : vector<16x1xf32> to vector<16x16xf32>
    %74 = arith.divf %70, %73 : vector<16x16xf32>
    %75 = arith.truncf %74 : vector<16x16xf32> to vector<16x16xbf16>
    %76 = arith.truncf %57 : vector<16x8xf32> to vector<16x8xbf16>
    %cst_53 = arith.constant dense<0.000000e+00> : vector<16x8xf32>
    %77 = tpu.matmul %75, %76, %cst_53 {dimension_numbers = #tpu.dot_dimension_numbers<[1], [0], [0], [1], [0, 0, 1, 1], [], []>} : vector<16x16xbf16>, vector<16x8xbf16>, vector<16x8xf32> -> vector<16x8xf32>
    %78 = vector.extract_strided_slice %52 {offsets = [0, 8], sizes = [16, 8], strides = [1, 1]} : vector<16x32xf32> to vector<16x8xf32>
    %79 = vector.extract_strided_slice %53 {offsets = [0, 8], sizes = [16, 8], strides = [1, 1]} : vector<16x32xf32> to vector<16x8xf32>
    %80 = vector.extract_strided_slice %54 {offsets = [0, 8], sizes = [16, 8], strides = [1, 1]} : vector<16x32xf32> to vector<16x8xf32>
    %81 = arith.truncf %78 : vector<16x8xf32> to vector<16x8xbf16>
    %82 = arith.truncf %79 : vector<16x8xf32> to vector<16x8xbf16>
    %cst_54 = arith.constant dense<0.000000e+00> : vector<16x16xf32>
    %83 = tpu.matmul %81, %82, %cst_54 {dimension_numbers = #tpu.dot_dimension_numbers<[1], [1], [0], [0], [0, 0, 1, 0], [], []>} : vector<16x8xbf16>, vector<16x8xbf16>, vector<16x16xf32> -> vector<16x16xf32>
    %cst_55 = arith.constant 0.353553385 : f32
    %84 = vector.broadcast %cst_55 : f32 to vector<16x16xf32>
    %85 = arith.mulf %83, %84 : vector<16x16xf32>
    %86 = arith.addf %85, %15 : vector<16x16xf32>
    %cst_56 = arith.constant dense<0xFF800000> : vector<16xf32>
    %87 = vector.multi_reduction <maximumf>, %86, %cst_56 [1] : vector<16x16xf32> to vector<16xf32>
    %cst_57 = arith.constant 0xFF800000 : f32
    %88 = vector.broadcast %cst_57 : f32 to vector<16xf32>
    %89 = arith.maximumf %88, %87 : vector<16xf32>
    %90 = vector.shape_cast %89 : vector<16xf32> to vector<16x1xf32>
    %91 = vector.broadcast %90 : vector<16x1xf32> to vector<16x16xf32>
    %92 = arith.subf %86, %91 : vector<16x16xf32>
    %93 = math.exp %92 : vector<16x16xf32>
    %cst_58 = arith.constant dense<0.000000e+00> : vector<16xf32>
    %94 = vector.multi_reduction <add>, %93, %cst_58 [1] : vector<16x16xf32> to vector<16xf32>
    %95 = vector.shape_cast %94 : vector<16xf32> to vector<16x1xf32>
    %96 = vector.broadcast %95 : vector<16x1xf32> to vector<16x16xf32>
    %97 = arith.divf %93, %96 : vector<16x16xf32>
    %98 = arith.truncf %97 : vector<16x16xf32> to vector<16x16xbf16>
    %99 = arith.truncf %80 : vector<16x8xf32> to vector<16x8xbf16>
    %cst_59 = arith.constant dense<0.000000e+00> : vector<16x8xf32>
    %100 = tpu.matmul %98, %99, %cst_59 {dimension_numbers = #tpu.dot_dimension_numbers<[1], [0], [0], [1], [0, 0, 1, 1], [], []>} : vector<16x16xbf16>, vector<16x8xbf16>, vector<16x8xf32> -> vector<16x8xf32>
    %101 = vector.extract_strided_slice %52 {offsets = [0, 16], sizes = [16, 8], strides = [1, 1]} : vector<16x32xf32> to vector<16x8xf32>
    %102 = vector.extract_strided_slice %53 {offsets = [0, 16], sizes = [16, 8], strides = [1, 1]} : vector<16x32xf32> to vector<16x8xf32>
    %103 = vector.extract_strided_slice %54 {offsets = [0, 16], sizes = [16, 8], strides = [1, 1]} : vector<16x32xf32> to vector<16x8xf32>
    %104 = arith.truncf %101 : vector<16x8xf32> to vector<16x8xbf16>
    %105 = arith.truncf %102 : vector<16x8xf32> to vector<16x8xbf16>
    %cst_60 = arith.constant dense<0.000000e+00> : vector<16x16xf32>
    %106 = tpu.matmul %104, %105, %cst_60 {dimension_numbers = #tpu.dot_dimension_numbers<[1], [1], [0], [0], [0, 0, 1, 0], [], []>} : vector<16x8xbf16>, vector<16x8xbf16>, vector<16x16xf32> -> vector<16x16xf32>
    %cst_61 = arith.constant 0.353553385 : f32
    %107 = vector.broadcast %cst_61 : f32 to vector<16x16xf32>
    %108 = arith.mulf %106, %107 : vector<16x16xf32>
    %109 = arith.addf %108, %15 : vector<16x16xf32>
    %cst_62 = arith.constant dense<0xFF800000> : vector<16xf32>
    %110 = vector.multi_reduction <maximumf>, %109, %cst_62 [1] : vector<16x16xf32> to vector<16xf32>
    %cst_63 = arith.constant 0xFF800000 : f32
    %111 = vector.broadcast %cst_63 : f32 to vector<16xf32>
    %112 = arith.maximumf %111, %110 : vector<16xf32>
    %113 = vector.shape_cast %112 : vector<16xf32> to vector<16x1xf32>
    %114 = vector.broadcast %113 : vector<16x1xf32> to vector<16x16xf32>
    %115 = arith.subf %109, %114 : vector<16x16xf32>
    %116 = math.exp %115 : vector<16x16xf32>
    %cst_64 = arith.constant dense<0.000000e+00> : vector<16xf32>
    %117 = vector.multi_reduction <add>, %116, %cst_64 [1] : vector<16x16xf32> to vector<16xf32>
    %118 = vector.shape_cast %117 : vector<16xf32> to vector<16x1xf32>
    %119 = vector.broadcast %118 : vector<16x1xf32> to vector<16x16xf32>
    %120 = arith.divf %116, %119 : vector<16x16xf32>
    %121 = arith.truncf %120 : vector<16x16xf32> to vector<16x16xbf16>
    %122 = arith.truncf %103 : vector<16x8xf32> to vector<16x8xbf16>
    %cst_65 = arith.constant dense<0.000000e+00> : vector<16x8xf32>
    %123 = tpu.matmul %121, %122, %cst_65 {dimension_numbers = #tpu.dot_dimension_numbers<[1], [0], [0], [1], [0, 0, 1, 1], [], []>} : vector<16x16xbf16>, vector<16x8xbf16>, vector<16x8xf32> -> vector<16x8xf32>
    %124 = vector.extract_strided_slice %52 {offsets = [0, 24], sizes = [16, 8], strides = [1, 1]} : vector<16x32xf32> to vector<16x8xf32>
    %125 = vector.extract_strided_slice %53 {offsets = [0, 24], sizes = [16, 8], strides = [1, 1]} : vector<16x32xf32> to vector<16x8xf32>
    %126 = vector.extract_strided_slice %54 {offsets = [0, 24], sizes = [16, 8], strides = [1, 1]} : vector<16x32xf32> to vector<16x8xf32>
    %127 = arith.truncf %124 : vector<16x8xf32> to vector<16x8xbf16>
    %128 = arith.truncf %125 : vector<16x8xf32> to vector<16x8xbf16>
    %cst_66 = arith.constant dense<0.000000e+00> : vector<16x16xf32>
    %129 = tpu.matmul %127, %128, %cst_66 {dimension_numbers = #tpu.dot_dimension_numbers<[1], [1], [0], [0], [0, 0, 1, 0], [], []>} : vector<16x8xbf16>, vector<16x8xbf16>, vector<16x16xf32> -> vector<16x16xf32>
    %cst_67 = arith.constant 0.353553385 : f32
    %130 = vector.broadcast %cst_67 : f32 to vector<16x16xf32>
    %131 = arith.mulf %129, %130 : vector<16x16xf32>
    %132 = arith.addf %131, %15 : vector<16x16xf32>
    %cst_68 = arith.constant dense<0xFF800000> : vector<16xf32>
    %133 = vector.multi_reduction <maximumf>, %132, %cst_68 [1] : vector<16x16xf32> to vector<16xf32>
    %cst_69 = arith.constant 0xFF800000 : f32
    %134 = vector.broadcast %cst_69 : f32 to vector<16xf32>
    %135 = arith.maximumf %134, %133 : vector<16xf32>
    %136 = vector.shape_cast %135 : vector<16xf32> to vector<16x1xf32>
    %137 = vector.broadcast %136 : vector<16x1xf32> to vector<16x16xf32>
    %138 = arith.subf %132, %137 : vector<16x16xf32>
    %139 = math.exp %138 : vector<16x16xf32>
    %cst_70 = arith.constant dense<0.000000e+00> : vector<16xf32>
    %140 = vector.multi_reduction <add>, %139, %cst_70 [1] : vector<16x16xf32> to vector<16xf32>
    %141 = vector.shape_cast %140 : vector<16xf32> to vector<16x1xf32>
    %142 = vector.broadcast %141 : vector<16x1xf32> to vector<16x16xf32>
    %143 = arith.divf %139, %142 : vector<16x16xf32>
    %144 = arith.truncf %143 : vector<16x16xf32> to vector<16x16xbf16>
    %145 = arith.truncf %126 : vector<16x8xf32> to vector<16x8xbf16>
    %cst_71 = arith.constant dense<0.000000e+00> : vector<16x8xf32>
    %146 = tpu.matmul %144, %145, %cst_71 {dimension_numbers = #tpu.dot_dimension_numbers<[1], [0], [0], [1], [0, 0, 1, 1], [], []>} : vector<16x16xbf16>, vector<16x8xbf16>, vector<16x8xf32> -> vector<16x8xf32>
    %147 = tpu.concatenate %77, %100, %123, %146 in 1 : vector<16x8xf32>, vector<16x8xf32>, vector<16x8xf32>, vector<16x8xf32> -> vector<16x32xf32>
    %148 = arith.truncf %147 : vector<16x32xf32> to vector<16x32xbf16>
    %149 = arith.truncf %31 : vector<32x32xf32> to vector<32x32xbf16>
    %cst_72 = arith.constant dense<0.000000e+00> : vector<16x32xf32>
    %150 = tpu.matmul %148, %149, %cst_72 {dimension_numbers = #tpu.dot_dimension_numbers<[1], [0], [0], [1], [0, 0, 1, 1], [], []>} : vector<16x32xbf16>, vector<32x32xbf16>, vector<16x32xf32> -> vector<16x32xf32>
    %151 = vector.broadcast %32 : vector<1x32xf32> to vector<16x32xf32>
    %152 = arith.addf %150, %151 : vector<16x32xf32>
    %153 = arith.addf %28, %152 : vector<16x32xf32>
    %cst_73 = arith.constant dense<0.000000e+00> : vector<16xf32>
    %154 = vector.multi_reduction <add>, %153, %cst_73 [1] : vector<16x32xf32> to vector<16xf32>
    %155 = vector.shape_cast %154 : vector<16xf32> to vector<16x1xf32>
    %cst_74 = arith.constant 3.200000e+01 : f32
    %156 = vector.broadcast %cst_74 : f32 to vector<16x1xf32>
    %157 = arith.divf %155, %156 : vector<16x1xf32>
    %158 = vector.broadcast %157 : vector<16x1xf32> to vector<16x32xf32>
    %159 = arith.subf %153, %158 : vector<16x32xf32>
    %160 = arith.mulf %159, %159 : vector<16x32xf32>
    %cst_75 = arith.constant dense<0.000000e+00> : vector<16xf32>
    %161 = vector.multi_reduction <add>, %160, %cst_75 [1] : vector<16x32xf32> to vector<16xf32>
    %162 = vector.shape_cast %161 : vector<16xf32> to vector<16x1xf32>
    %cst_76 = arith.constant 3.200000e+01 : f32
    %163 = vector.broadcast %cst_76 : f32 to vector<16x1xf32>
    %164 = arith.divf %162, %163 : vector<16x1xf32>
    %165 = vector.broadcast %157 : vector<16x1xf32> to vector<16x32xf32>
    %166 = arith.subf %153, %165 : vector<16x32xf32>
    %cst_77 = arith.constant 9.99999974E-6 : f32
    %167 = vector.broadcast %cst_77 : f32 to vector<16x1xf32>
    %168 = arith.addf %164, %167 : vector<16x1xf32>
    %169 = math.rsqrt %168 : vector<16x1xf32>
    %170 = vector.broadcast %169 : vector<16x1xf32> to vector<16x32xf32>
    %171 = arith.mulf %166, %170 : vector<16x32xf32>
    %172 = vector.broadcast %41 : vector<1x32xf32> to vector<16x32xf32>
    %173 = arith.mulf %171, %172 : vector<16x32xf32>
    %174 = vector.broadcast %42 : vector<1x32xf32> to vector<16x32xf32>
    %175 = arith.addf %173, %174 : vector<16x32xf32>
    %176 = vector.extract_strided_slice %33 {offsets = [0, 0], sizes = [32, 32], strides = [1, 1]} : vector<32x96xf32> to vector<32x32xf32>
    %177 = arith.truncf %175 : vector<16x32xf32> to vector<16x32xbf16>
    %178 = arith.truncf %176 : vector<32x32xf32> to vector<32x32xbf16>
    %cst_78 = arith.constant dense<0.000000e+00> : vector<16x32xf32>
    %179 = tpu.matmul %177, %178, %cst_78 {dimension_numbers = #tpu.dot_dimension_numbers<[1], [0], [0], [1], [0, 0, 1, 1], [], []>} : vector<16x32xbf16>, vector<32x32xbf16>, vector<16x32xf32> -> vector<16x32xf32>
    %180 = vector.extract_strided_slice %34 {offsets = [0, 0], sizes = [1, 32], strides = [1, 1]} : vector<1x96xf32> to vector<1x32xf32>
    %181 = vector.broadcast %180 : vector<1x32xf32> to vector<16x32xf32>
    %182 = arith.addf %179, %181 : vector<16x32xf32>
    %183 = vector.extract_strided_slice %33 {offsets = [0, 32], sizes = [32, 64], strides = [1, 1]} : vector<32x96xf32> to vector<32x64xf32>
    %184 = arith.truncf %28 : vector<16x32xf32> to vector<16x32xbf16>
    %185 = arith.truncf %183 : vector<32x64xf32> to vector<32x64xbf16>
    %cst_79 = arith.constant dense<0.000000e+00> : vector<16x64xf32>
    %186 = tpu.matmul %184, %185, %cst_79 {dimension_numbers = #tpu.dot_dimension_numbers<[1], [0], [0], [1], [0, 0, 1, 1], [], []>} : vector<16x32xbf16>, vector<32x64xbf16>, vector<16x64xf32> -> vector<16x64xf32>
    %187 = vector.extract_strided_slice %34 {offsets = [0, 32], sizes = [1, 64], strides = [1, 1]} : vector<1x96xf32> to vector<1x64xf32>
    %188 = vector.broadcast %187 : vector<1x64xf32> to vector<16x64xf32>
    %189 = arith.addf %186, %188 : vector<16x64xf32>
    %190 = vector.extract_strided_slice %189 {offsets = [0, 0], sizes = [16, 32], strides = [1, 1]} : vector<16x64xf32> to vector<16x32xf32>
    %191 = vector.extract_strided_slice %189 {offsets = [0, 32], sizes = [16, 32], strides = [1, 1]} : vector<16x64xf32> to vector<16x32xf32>
    %192 = vector.extract_strided_slice %182 {offsets = [0, 0], sizes = [16, 8], strides = [1, 1]} : vector<16x32xf32> to vector<16x8xf32>
    %193 = vector.extract_strided_slice %190 {offsets = [0, 0], sizes = [16, 8], strides = [1, 1]} : vector<16x32xf32> to vector<16x8xf32>
    %194 = vector.extract_strided_slice %191 {offsets = [0, 0], sizes = [16, 8], strides = [1, 1]} : vector<16x32xf32> to vector<16x8xf32>
    %195 = arith.truncf %192 : vector<16x8xf32> to vector<16x8xbf16>
    %196 = arith.truncf %193 : vector<16x8xf32> to vector<16x8xbf16>
    %cst_80 = arith.constant dense<0.000000e+00> : vector<16x16xf32>
    %197 = tpu.matmul %195, %196, %cst_80 {dimension_numbers = #tpu.dot_dimension_numbers<[1], [1], [0], [0], [0, 0, 1, 0], [], []>} : vector<16x8xbf16>, vector<16x8xbf16>, vector<16x16xf32> -> vector<16x16xf32>
    %cst_81 = arith.constant 0.353553385 : f32
    %198 = vector.broadcast %cst_81 : f32 to vector<16x16xf32>
    %199 = arith.mulf %197, %198 : vector<16x16xf32>
    %200 = arith.addf %199, %18 : vector<16x16xf32>
    %cst_82 = arith.constant dense<0xFF800000> : vector<16xf32>
    %201 = vector.multi_reduction <maximumf>, %200, %cst_82 [1] : vector<16x16xf32> to vector<16xf32>
    %cst_83 = arith.constant 0xFF800000 : f32
    %202 = vector.broadcast %cst_83 : f32 to vector<16xf32>
    %203 = arith.maximumf %202, %201 : vector<16xf32>
    %204 = vector.shape_cast %203 : vector<16xf32> to vector<16x1xf32>
    %205 = vector.broadcast %204 : vector<16x1xf32> to vector<16x16xf32>
    %206 = arith.subf %200, %205 : vector<16x16xf32>
    %207 = math.exp %206 : vector<16x16xf32>
    %cst_84 = arith.constant dense<0.000000e+00> : vector<16xf32>
    %208 = vector.multi_reduction <add>, %207, %cst_84 [1] : vector<16x16xf32> to vector<16xf32>
    %209 = vector.shape_cast %208 : vector<16xf32> to vector<16x1xf32>
    %210 = vector.broadcast %209 : vector<16x1xf32> to vector<16x16xf32>
    %211 = arith.divf %207, %210 : vector<16x16xf32>
    %212 = arith.truncf %211 : vector<16x16xf32> to vector<16x16xbf16>
    %213 = arith.truncf %194 : vector<16x8xf32> to vector<16x8xbf16>
    %cst_85 = arith.constant dense<0.000000e+00> : vector<16x8xf32>
    %214 = tpu.matmul %212, %213, %cst_85 {dimension_numbers = #tpu.dot_dimension_numbers<[1], [0], [0], [1], [0, 0, 1, 1], [], []>} : vector<16x16xbf16>, vector<16x8xbf16>, vector<16x8xf32> -> vector<16x8xf32>
    %215 = vector.extract_strided_slice %182 {offsets = [0, 8], sizes = [16, 8], strides = [1, 1]} : vector<16x32xf32> to vector<16x8xf32>
    %216 = vector.extract_strided_slice %190 {offsets = [0, 8], sizes = [16, 8], strides = [1, 1]} : vector<16x32xf32> to vector<16x8xf32>
    %217 = vector.extract_strided_slice %191 {offsets = [0, 8], sizes = [16, 8], strides = [1, 1]} : vector<16x32xf32> to vector<16x8xf32>
    %218 = arith.truncf %215 : vector<16x8xf32> to vector<16x8xbf16>
    %219 = arith.truncf %216 : vector<16x8xf32> to vector<16x8xbf16>
    %cst_86 = arith.constant dense<0.000000e+00> : vector<16x16xf32>
    %220 = tpu.matmul %218, %219, %cst_86 {dimension_numbers = #tpu.dot_dimension_numbers<[1], [1], [0], [0], [0, 0, 1, 0], [], []>} : vector<16x8xbf16>, vector<16x8xbf16>, vector<16x16xf32> -> vector<16x16xf32>
    %cst_87 = arith.constant 0.353553385 : f32
    %221 = vector.broadcast %cst_87 : f32 to vector<16x16xf32>
    %222 = arith.mulf %220, %221 : vector<16x16xf32>
    %223 = arith.addf %222, %18 : vector<16x16xf32>
    %cst_88 = arith.constant dense<0xFF800000> : vector<16xf32>
    %224 = vector.multi_reduction <maximumf>, %223, %cst_88 [1] : vector<16x16xf32> to vector<16xf32>
    %cst_89 = arith.constant 0xFF800000 : f32
    %225 = vector.broadcast %cst_89 : f32 to vector<16xf32>
    %226 = arith.maximumf %225, %224 : vector<16xf32>
    %227 = vector.shape_cast %226 : vector<16xf32> to vector<16x1xf32>
    %228 = vector.broadcast %227 : vector<16x1xf32> to vector<16x16xf32>
    %229 = arith.subf %223, %228 : vector<16x16xf32>
    %230 = math.exp %229 : vector<16x16xf32>
    %cst_90 = arith.constant dense<0.000000e+00> : vector<16xf32>
    %231 = vector.multi_reduction <add>, %230, %cst_90 [1] : vector<16x16xf32> to vector<16xf32>
    %232 = vector.shape_cast %231 : vector<16xf32> to vector<16x1xf32>
    %233 = vector.broadcast %232 : vector<16x1xf32> to vector<16x16xf32>
    %234 = arith.divf %230, %233 : vector<16x16xf32>
    %235 = arith.truncf %234 : vector<16x16xf32> to vector<16x16xbf16>
    %236 = arith.truncf %217 : vector<16x8xf32> to vector<16x8xbf16>
    %cst_91 = arith.constant dense<0.000000e+00> : vector<16x8xf32>
    %237 = tpu.matmul %235, %236, %cst_91 {dimension_numbers = #tpu.dot_dimension_numbers<[1], [0], [0], [1], [0, 0, 1, 1], [], []>} : vector<16x16xbf16>, vector<16x8xbf16>, vector<16x8xf32> -> vector<16x8xf32>
    %238 = vector.extract_strided_slice %182 {offsets = [0, 16], sizes = [16, 8], strides = [1, 1]} : vector<16x32xf32> to vector<16x8xf32>
    %239 = vector.extract_strided_slice %190 {offsets = [0, 16], sizes = [16, 8], strides = [1, 1]} : vector<16x32xf32> to vector<16x8xf32>
    %240 = vector.extract_strided_slice %191 {offsets = [0, 16], sizes = [16, 8], strides = [1, 1]} : vector<16x32xf32> to vector<16x8xf32>
    %241 = arith.truncf %238 : vector<16x8xf32> to vector<16x8xbf16>
    %242 = arith.truncf %239 : vector<16x8xf32> to vector<16x8xbf16>
    %cst_92 = arith.constant dense<0.000000e+00> : vector<16x16xf32>
    %243 = tpu.matmul %241, %242, %cst_92 {dimension_numbers = #tpu.dot_dimension_numbers<[1], [1], [0], [0], [0, 0, 1, 0], [], []>} : vector<16x8xbf16>, vector<16x8xbf16>, vector<16x16xf32> -> vector<16x16xf32>
    %cst_93 = arith.constant 0.353553385 : f32
    %244 = vector.broadcast %cst_93 : f32 to vector<16x16xf32>
    %245 = arith.mulf %243, %244 : vector<16x16xf32>
    %246 = arith.addf %245, %18 : vector<16x16xf32>
    %cst_94 = arith.constant dense<0xFF800000> : vector<16xf32>
    %247 = vector.multi_reduction <maximumf>, %246, %cst_94 [1] : vector<16x16xf32> to vector<16xf32>
    %cst_95 = arith.constant 0xFF800000 : f32
    %248 = vector.broadcast %cst_95 : f32 to vector<16xf32>
    %249 = arith.maximumf %248, %247 : vector<16xf32>
    %250 = vector.shape_cast %249 : vector<16xf32> to vector<16x1xf32>
    %251 = vector.broadcast %250 : vector<16x1xf32> to vector<16x16xf32>
    %252 = arith.subf %246, %251 : vector<16x16xf32>
    %253 = math.exp %252 : vector<16x16xf32>
    %cst_96 = arith.constant dense<0.000000e+00> : vector<16xf32>
    %254 = vector.multi_reduction <add>, %253, %cst_96 [1] : vector<16x16xf32> to vector<16xf32>
    %255 = vector.shape_cast %254 : vector<16xf32> to vector<16x1xf32>
    %256 = vector.broadcast %255 : vector<16x1xf32> to vector<16x16xf32>
    %257 = arith.divf %253, %256 : vector<16x16xf32>
    %258 = arith.truncf %257 : vector<16x16xf32> to vector<16x16xbf16>
    %259 = arith.truncf %240 : vector<16x8xf32> to vector<16x8xbf16>
    %cst_97 = arith.constant dense<0.000000e+00> : vector<16x8xf32>
    %260 = tpu.matmul %258, %259, %cst_97 {dimension_numbers = #tpu.dot_dimension_numbers<[1], [0], [0], [1], [0, 0, 1, 1], [], []>} : vector<16x16xbf16>, vector<16x8xbf16>, vector<16x8xf32> -> vector<16x8xf32>
    %261 = vector.extract_strided_slice %182 {offsets = [0, 24], sizes = [16, 8], strides = [1, 1]} : vector<16x32xf32> to vector<16x8xf32>
    %262 = vector.extract_strided_slice %190 {offsets = [0, 24], sizes = [16, 8], strides = [1, 1]} : vector<16x32xf32> to vector<16x8xf32>
    %263 = vector.extract_strided_slice %191 {offsets = [0, 24], sizes = [16, 8], strides = [1, 1]} : vector<16x32xf32> to vector<16x8xf32>
    %264 = arith.truncf %261 : vector<16x8xf32> to vector<16x8xbf16>
    %265 = arith.truncf %262 : vector<16x8xf32> to vector<16x8xbf16>
    %cst_98 = arith.constant dense<0.000000e+00> : vector<16x16xf32>
    %266 = tpu.matmul %264, %265, %cst_98 {dimension_numbers = #tpu.dot_dimension_numbers<[1], [1], [0], [0], [0, 0, 1, 0], [], []>} : vector<16x8xbf16>, vector<16x8xbf16>, vector<16x16xf32> -> vector<16x16xf32>
    %cst_99 = arith.constant 0.353553385 : f32
    %267 = vector.broadcast %cst_99 : f32 to vector<16x16xf32>
    %268 = arith.mulf %266, %267 : vector<16x16xf32>
    %269 = arith.addf %268, %18 : vector<16x16xf32>
    %cst_100 = arith.constant dense<0xFF800000> : vector<16xf32>
    %270 = vector.multi_reduction <maximumf>, %269, %cst_100 [1] : vector<16x16xf32> to vector<16xf32>
    %cst_101 = arith.constant 0xFF800000 : f32
    %271 = vector.broadcast %cst_101 : f32 to vector<16xf32>
    %272 = arith.maximumf %271, %270 : vector<16xf32>
    %273 = vector.shape_cast %272 : vector<16xf32> to vector<16x1xf32>
    %274 = vector.broadcast %273 : vector<16x1xf32> to vector<16x16xf32>
    %275 = arith.subf %269, %274 : vector<16x16xf32>
    %276 = math.exp %275 : vector<16x16xf32>
    %cst_102 = arith.constant dense<0.000000e+00> : vector<16xf32>
    %277 = vector.multi_reduction <add>, %276, %cst_102 [1] : vector<16x16xf32> to vector<16xf32>
    %278 = vector.shape_cast %277 : vector<16xf32> to vector<16x1xf32>
    %279 = vector.broadcast %278 : vector<16x1xf32> to vector<16x16xf32>
    %280 = arith.divf %276, %279 : vector<16x16xf32>
    %281 = arith.truncf %280 : vector<16x16xf32> to vector<16x16xbf16>
    %282 = arith.truncf %263 : vector<16x8xf32> to vector<16x8xbf16>
    %cst_103 = arith.constant dense<0.000000e+00> : vector<16x8xf32>
    %283 = tpu.matmul %281, %282, %cst_103 {dimension_numbers = #tpu.dot_dimension_numbers<[1], [0], [0], [1], [0, 0, 1, 1], [], []>} : vector<16x16xbf16>, vector<16x8xbf16>, vector<16x8xf32> -> vector<16x8xf32>
    %284 = tpu.concatenate %214, %237, %260, %283 in 1 : vector<16x8xf32>, vector<16x8xf32>, vector<16x8xf32>, vector<16x8xf32> -> vector<16x32xf32>
    %285 = arith.truncf %284 : vector<16x32xf32> to vector<16x32xbf16>
    %286 = arith.truncf %35 : vector<32x32xf32> to vector<32x32xbf16>
    %cst_104 = arith.constant dense<0.000000e+00> : vector<16x32xf32>
    %287 = tpu.matmul %285, %286, %cst_104 {dimension_numbers = #tpu.dot_dimension_numbers<[1], [0], [0], [1], [0, 0, 1, 1], [], []>} : vector<16x32xbf16>, vector<32x32xbf16>, vector<16x32xf32> -> vector<16x32xf32>
    %288 = vector.broadcast %36 : vector<1x32xf32> to vector<16x32xf32>
    %289 = arith.addf %287, %288 : vector<16x32xf32>
    %290 = arith.addf %175, %289 : vector<16x32xf32>
    %cst_105 = arith.constant dense<0.000000e+00> : vector<16xf32>
    %291 = vector.multi_reduction <add>, %290, %cst_105 [1] : vector<16x32xf32> to vector<16xf32>
    %292 = vector.shape_cast %291 : vector<16xf32> to vector<16x1xf32>
    %cst_106 = arith.constant 3.200000e+01 : f32
    %293 = vector.broadcast %cst_106 : f32 to vector<16x1xf32>
    %294 = arith.divf %292, %293 : vector<16x1xf32>
    %295 = vector.broadcast %294 : vector<16x1xf32> to vector<16x32xf32>
    %296 = arith.subf %290, %295 : vector<16x32xf32>
    %297 = arith.mulf %296, %296 : vector<16x32xf32>
    %cst_107 = arith.constant dense<0.000000e+00> : vector<16xf32>
    %298 = vector.multi_reduction <add>, %297, %cst_107 [1] : vector<16x32xf32> to vector<16xf32>
    %299 = vector.shape_cast %298 : vector<16xf32> to vector<16x1xf32>
    %cst_108 = arith.constant 3.200000e+01 : f32
    %300 = vector.broadcast %cst_108 : f32 to vector<16x1xf32>
    %301 = arith.divf %299, %300 : vector<16x1xf32>
    %302 = vector.broadcast %294 : vector<16x1xf32> to vector<16x32xf32>
    %303 = arith.subf %290, %302 : vector<16x32xf32>
    %cst_109 = arith.constant 9.99999974E-6 : f32
    %304 = vector.broadcast %cst_109 : f32 to vector<16x1xf32>
    %305 = arith.addf %301, %304 : vector<16x1xf32>
    %306 = math.rsqrt %305 : vector<16x1xf32>
    %307 = vector.broadcast %306 : vector<16x1xf32> to vector<16x32xf32>
    %308 = arith.mulf %303, %307 : vector<16x32xf32>
    %309 = vector.broadcast %43 : vector<1x32xf32> to vector<16x32xf32>
    %310 = arith.mulf %308, %309 : vector<16x32xf32>
    %311 = vector.broadcast %44 : vector<1x32xf32> to vector<16x32xf32>
    %312 = arith.addf %310, %311 : vector<16x32xf32>
    %313 = arith.truncf %312 : vector<16x32xf32> to vector<16x32xbf16>
    %314 = arith.truncf %37 : vector<32x64xf32> to vector<32x64xbf16>
    %cst_110 = arith.constant dense<0.000000e+00> : vector<16x64xf32>
    %315 = tpu.matmul %313, %314, %cst_110 {dimension_numbers = #tpu.dot_dimension_numbers<[1], [0], [0], [1], [0, 0, 1, 1], [], []>} : vector<16x32xbf16>, vector<32x64xbf16>, vector<16x64xf32> -> vector<16x64xf32>
    %316 = vector.broadcast %38 : vector<1x64xf32> to vector<16x64xf32>
    %317 = arith.addf %315, %316 : vector<16x64xf32>
    %cst_111 = arith.constant 0.000000e+00 : f32
    %318 = vector.broadcast %cst_111 : f32 to vector<16x64xf32>
    %319 = arith.maximumf %317, %318 : vector<16x64xf32>
    %320 = arith.truncf %319 : vector<16x64xf32> to vector<16x64xbf16>
    %321 = arith.truncf %39 : vector<64x32xf32> to vector<64x32xbf16>
    %cst_112 = arith.constant dense<0.000000e+00> : vector<16x32xf32>
    %322 = tpu.matmul %320, %321, %cst_112 {dimension_numbers = #tpu.dot_dimension_numbers<[1], [0], [0], [1], [0, 0, 1, 1], [], []>} : vector<16x64xbf16>, vector<64x32xbf16>, vector<16x32xf32> -> vector<16x32xf32>
    %323 = vector.broadcast %40 : vector<1x32xf32> to vector<16x32xf32>
    %324 = arith.addf %322, %323 : vector<16x32xf32>
    %325 = arith.addf %312, %324 : vector<16x32xf32>
    %cst_113 = arith.constant dense<0.000000e+00> : vector<16xf32>
    %326 = vector.multi_reduction <add>, %325, %cst_113 [1] : vector<16x32xf32> to vector<16xf32>
    %327 = vector.shape_cast %326 : vector<16xf32> to vector<16x1xf32>
    %cst_114 = arith.constant 3.200000e+01 : f32
    %328 = vector.broadcast %cst_114 : f32 to vector<16x1xf32>
    %329 = arith.divf %327, %328 : vector<16x1xf32>
    %330 = vector.broadcast %329 : vector<16x1xf32> to vector<16x32xf32>
    %331 = arith.subf %325, %330 : vector<16x32xf32>
    %332 = arith.mulf %331, %331 : vector<16x32xf32>
    %cst_115 = arith.constant dense<0.000000e+00> : vector<16xf32>
    %333 = vector.multi_reduction <add>, %332, %cst_115 [1] : vector<16x32xf32> to vector<16xf32>
    %334 = vector.shape_cast %333 : vector<16xf32> to vector<16x1xf32>
    %cst_116 = arith.constant 3.200000e+01 : f32
    %335 = vector.broadcast %cst_116 : f32 to vector<16x1xf32>
    %336 = arith.divf %334, %335 : vector<16x1xf32>
    %337 = vector.broadcast %329 : vector<16x1xf32> to vector<16x32xf32>
    %338 = arith.subf %325, %337 : vector<16x32xf32>
    %cst_117 = arith.constant 9.99999974E-6 : f32
    %339 = vector.broadcast %cst_117 : f32 to vector<16x1xf32>
    %340 = arith.addf %336, %339 : vector<16x1xf32>
    %341 = math.rsqrt %340 : vector<16x1xf32>
    %342 = vector.broadcast %341 : vector<16x1xf32> to vector<16x32xf32>
    %343 = arith.mulf %338, %342 : vector<16x32xf32>
    %344 = vector.broadcast %45 : vector<1x32xf32> to vector<16x32xf32>
    %345 = arith.mulf %343, %344 : vector<16x32xf32>
    %346 = vector.broadcast %46 : vector<1x32xf32> to vector<16x32xf32>
    %347 = arith.addf %345, %346 : vector<16x32xf32>
    %c0_118 = arith.constant 0 : index
    %c0_119 = arith.constant 0 : index
    %348 = vector.load %arg23[%c0_118, %c0_119] : memref<32x96xf32, #tpu.memory_space<vmem>>, vector<32x96xf32>
    %c0_120 = arith.constant 0 : index
    %c0_121 = arith.constant 0 : index
    %349 = vector.load %arg24[%c0_120, %c0_121] : memref<1x96xf32, #tpu.memory_space<vmem>>, vector<1x96xf32>
    %c0_122 = arith.constant 0 : index
    %c0_123 = arith.constant 0 : index
    %350 = vector.load %arg25[%c0_122, %c0_123] : memref<32x32xf32, #tpu.memory_space<vmem>>, vector<32x32xf32>
    %c0_124 = arith.constant 0 : index
    %c0_125 = arith.constant 0 : index
    %351 = vector.load %arg26[%c0_124, %c0_125] : memref<1x32xf32, #tpu.memory_space<vmem>>, vector<1x32xf32>
    %c0_126 = arith.constant 0 : index
    %c0_127 = arith.constant 0 : index
    %352 = vector.load %arg27[%c0_126, %c0_127] : memref<32x96xf32, #tpu.memory_space<vmem>>, vector<32x96xf32>
    %c0_128 = arith.constant 0 : index
    %c0_129 = arith.constant 0 : index
    %353 = vector.load %arg28[%c0_128, %c0_129] : memref<1x96xf32, #tpu.memory_space<vmem>>, vector<1x96xf32>
    %c0_130 = arith.constant 0 : index
    %c0_131 = arith.constant 0 : index
    %354 = vector.load %arg29[%c0_130, %c0_131] : memref<32x32xf32, #tpu.memory_space<vmem>>, vector<32x32xf32>
    %c0_132 = arith.constant 0 : index
    %c0_133 = arith.constant 0 : index
    %355 = vector.load %arg30[%c0_132, %c0_133] : memref<1x32xf32, #tpu.memory_space<vmem>>, vector<1x32xf32>
    %c0_134 = arith.constant 0 : index
    %c0_135 = arith.constant 0 : index
    %356 = vector.load %arg31[%c0_134, %c0_135] : memref<32x64xf32, #tpu.memory_space<vmem>>, vector<32x64xf32>
    %c0_136 = arith.constant 0 : index
    %c0_137 = arith.constant 0 : index
    %357 = vector.load %arg32[%c0_136, %c0_137] : memref<1x64xf32, #tpu.memory_space<vmem>>, vector<1x64xf32>
    %c0_138 = arith.constant 0 : index
    %c0_139 = arith.constant 0 : index
    %358 = vector.load %arg33[%c0_138, %c0_139] : memref<64x32xf32, #tpu.memory_space<vmem>>, vector<64x32xf32>
    %c0_140 = arith.constant 0 : index
    %c0_141 = arith.constant 0 : index
    %359 = vector.load %arg34[%c0_140, %c0_141] : memref<1x32xf32, #tpu.memory_space<vmem>>, vector<1x32xf32>
    %c0_142 = arith.constant 0 : index
    %c0_143 = arith.constant 0 : index
    %360 = vector.load %arg35[%c0_142, %c0_143] : memref<1x32xf32, #tpu.memory_space<vmem>>, vector<1x32xf32>
    %c0_144 = arith.constant 0 : index
    %c0_145 = arith.constant 0 : index
    %361 = vector.load %arg36[%c0_144, %c0_145] : memref<1x32xf32, #tpu.memory_space<vmem>>, vector<1x32xf32>
    %c0_146 = arith.constant 0 : index
    %c0_147 = arith.constant 0 : index
    %362 = vector.load %arg37[%c0_146, %c0_147] : memref<1x32xf32, #tpu.memory_space<vmem>>, vector<1x32xf32>
    %c0_148 = arith.constant 0 : index
    %c0_149 = arith.constant 0 : index
    %363 = vector.load %arg38[%c0_148, %c0_149] : memref<1x32xf32, #tpu.memory_space<vmem>>, vector<1x32xf32>
    %c0_150 = arith.constant 0 : index
    %c0_151 = arith.constant 0 : index
    %364 = vector.load %arg39[%c0_150, %c0_151] : memref<1x32xf32, #tpu.memory_space<vmem>>, vector<1x32xf32>
    %c0_152 = arith.constant 0 : index
    %c0_153 = arith.constant 0 : index
    %365 = vector.load %arg40[%c0_152, %c0_153] : memref<1x32xf32, #tpu.memory_space<vmem>>, vector<1x32xf32>
    %366 = arith.truncf %347 : vector<16x32xf32> to vector<16x32xbf16>
    %367 = arith.truncf %348 : vector<32x96xf32> to vector<32x96xbf16>
    %cst_154 = arith.constant dense<0.000000e+00> : vector<16x96xf32>
    %368 = tpu.matmul %366, %367, %cst_154 {dimension_numbers = #tpu.dot_dimension_numbers<[1], [0], [0], [1], [0, 0, 1, 1], [], []>} : vector<16x32xbf16>, vector<32x96xbf16>, vector<16x96xf32> -> vector<16x96xf32>
    %369 = vector.broadcast %349 : vector<1x96xf32> to vector<16x96xf32>
    %370 = arith.addf %368, %369 : vector<16x96xf32>
    %371 = vector.extract_strided_slice %370 {offsets = [0, 0], sizes = [16, 32], strides = [1, 1]} : vector<16x96xf32> to vector<16x32xf32>
    %372 = vector.extract_strided_slice %370 {offsets = [0, 32], sizes = [16, 32], strides = [1, 1]} : vector<16x96xf32> to vector<16x32xf32>
    %373 = vector.extract_strided_slice %370 {offsets = [0, 64], sizes = [16, 32], strides = [1, 1]} : vector<16x96xf32> to vector<16x32xf32>
    %374 = vector.extract_strided_slice %371 {offsets = [0, 0], sizes = [16, 8], strides = [1, 1]} : vector<16x32xf32> to vector<16x8xf32>
    %375 = vector.extract_strided_slice %372 {offsets = [0, 0], sizes = [16, 8], strides = [1, 1]} : vector<16x32xf32> to vector<16x8xf32>
    %376 = vector.extract_strided_slice %373 {offsets = [0, 0], sizes = [16, 8], strides = [1, 1]} : vector<16x32xf32> to vector<16x8xf32>
    %377 = arith.truncf %374 : vector<16x8xf32> to vector<16x8xbf16>
    %378 = arith.truncf %375 : vector<16x8xf32> to vector<16x8xbf16>
    %cst_155 = arith.constant dense<0.000000e+00> : vector<16x16xf32>
    %379 = tpu.matmul %377, %378, %cst_155 {dimension_numbers = #tpu.dot_dimension_numbers<[1], [1], [0], [0], [0, 0, 1, 0], [], []>} : vector<16x8xbf16>, vector<16x8xbf16>, vector<16x16xf32> -> vector<16x16xf32>
    %cst_156 = arith.constant 0.353553385 : f32
    %380 = vector.broadcast %cst_156 : f32 to vector<16x16xf32>
    %381 = arith.mulf %379, %380 : vector<16x16xf32>
    %382 = arith.addf %381, %15 : vector<16x16xf32>
    %cst_157 = arith.constant dense<0xFF800000> : vector<16xf32>
    %383 = vector.multi_reduction <maximumf>, %382, %cst_157 [1] : vector<16x16xf32> to vector<16xf32>
    %cst_158 = arith.constant 0xFF800000 : f32
    %384 = vector.broadcast %cst_158 : f32 to vector<16xf32>
    %385 = arith.maximumf %384, %383 : vector<16xf32>
    %386 = vector.shape_cast %385 : vector<16xf32> to vector<16x1xf32>
    %387 = vector.broadcast %386 : vector<16x1xf32> to vector<16x16xf32>
    %388 = arith.subf %382, %387 : vector<16x16xf32>
    %389 = math.exp %388 : vector<16x16xf32>
    %cst_159 = arith.constant dense<0.000000e+00> : vector<16xf32>
    %390 = vector.multi_reduction <add>, %389, %cst_159 [1] : vector<16x16xf32> to vector<16xf32>
    %391 = vector.shape_cast %390 : vector<16xf32> to vector<16x1xf32>
    %392 = vector.broadcast %391 : vector<16x1xf32> to vector<16x16xf32>
    %393 = arith.divf %389, %392 : vector<16x16xf32>
    %394 = arith.truncf %393 : vector<16x16xf32> to vector<16x16xbf16>
    %395 = arith.truncf %376 : vector<16x8xf32> to vector<16x8xbf16>
    %cst_160 = arith.constant dense<0.000000e+00> : vector<16x8xf32>
    %396 = tpu.matmul %394, %395, %cst_160 {dimension_numbers = #tpu.dot_dimension_numbers<[1], [0], [0], [1], [0, 0, 1, 1], [], []>} : vector<16x16xbf16>, vector<16x8xbf16>, vector<16x8xf32> -> vector<16x8xf32>
    %397 = vector.extract_strided_slice %371 {offsets = [0, 8], sizes = [16, 8], strides = [1, 1]} : vector<16x32xf32> to vector<16x8xf32>
    %398 = vector.extract_strided_slice %372 {offsets = [0, 8], sizes = [16, 8], strides = [1, 1]} : vector<16x32xf32> to vector<16x8xf32>
    %399 = vector.extract_strided_slice %373 {offsets = [0, 8], sizes = [16, 8], strides = [1, 1]} : vector<16x32xf32> to vector<16x8xf32>
    %400 = arith.truncf %397 : vector<16x8xf32> to vector<16x8xbf16>
    %401 = arith.truncf %398 : vector<16x8xf32> to vector<16x8xbf16>
    %cst_161 = arith.constant dense<0.000000e+00> : vector<16x16xf32>
    %402 = tpu.matmul %400, %401, %cst_161 {dimension_numbers = #tpu.dot_dimension_numbers<[1], [1], [0], [0], [0, 0, 1, 0], [], []>} : vector<16x8xbf16>, vector<16x8xbf16>, vector<16x16xf32> -> vector<16x16xf32>
    %cst_162 = arith.constant 0.353553385 : f32
    %403 = vector.broadcast %cst_162 : f32 to vector<16x16xf32>
    %404 = arith.mulf %402, %403 : vector<16x16xf32>
    %405 = arith.addf %404, %15 : vector<16x16xf32>
    %cst_163 = arith.constant dense<0xFF800000> : vector<16xf32>
    %406 = vector.multi_reduction <maximumf>, %405, %cst_163 [1] : vector<16x16xf32> to vector<16xf32>
    %cst_164 = arith.constant 0xFF800000 : f32
    %407 = vector.broadcast %cst_164 : f32 to vector<16xf32>
    %408 = arith.maximumf %407, %406 : vector<16xf32>
    %409 = vector.shape_cast %408 : vector<16xf32> to vector<16x1xf32>
    %410 = vector.broadcast %409 : vector<16x1xf32> to vector<16x16xf32>
    %411 = arith.subf %405, %410 : vector<16x16xf32>
    %412 = math.exp %411 : vector<16x16xf32>
    %cst_165 = arith.constant dense<0.000000e+00> : vector<16xf32>
    %413 = vector.multi_reduction <add>, %412, %cst_165 [1] : vector<16x16xf32> to vector<16xf32>
    %414 = vector.shape_cast %413 : vector<16xf32> to vector<16x1xf32>
    %415 = vector.broadcast %414 : vector<16x1xf32> to vector<16x16xf32>
    %416 = arith.divf %412, %415 : vector<16x16xf32>
    %417 = arith.truncf %416 : vector<16x16xf32> to vector<16x16xbf16>
    %418 = arith.truncf %399 : vector<16x8xf32> to vector<16x8xbf16>
    %cst_166 = arith.constant dense<0.000000e+00> : vector<16x8xf32>
    %419 = tpu.matmul %417, %418, %cst_166 {dimension_numbers = #tpu.dot_dimension_numbers<[1], [0], [0], [1], [0, 0, 1, 1], [], []>} : vector<16x16xbf16>, vector<16x8xbf16>, vector<16x8xf32> -> vector<16x8xf32>
    %420 = vector.extract_strided_slice %371 {offsets = [0, 16], sizes = [16, 8], strides = [1, 1]} : vector<16x32xf32> to vector<16x8xf32>
    %421 = vector.extract_strided_slice %372 {offsets = [0, 16], sizes = [16, 8], strides = [1, 1]} : vector<16x32xf32> to vector<16x8xf32>
    %422 = vector.extract_strided_slice %373 {offsets = [0, 16], sizes = [16, 8], strides = [1, 1]} : vector<16x32xf32> to vector<16x8xf32>
    %423 = arith.truncf %420 : vector<16x8xf32> to vector<16x8xbf16>
    %424 = arith.truncf %421 : vector<16x8xf32> to vector<16x8xbf16>
    %cst_167 = arith.constant dense<0.000000e+00> : vector<16x16xf32>
    %425 = tpu.matmul %423, %424, %cst_167 {dimension_numbers = #tpu.dot_dimension_numbers<[1], [1], [0], [0], [0, 0, 1, 0], [], []>} : vector<16x8xbf16>, vector<16x8xbf16>, vector<16x16xf32> -> vector<16x16xf32>
    %cst_168 = arith.constant 0.353553385 : f32
    %426 = vector.broadcast %cst_168 : f32 to vector<16x16xf32>
    %427 = arith.mulf %425, %426 : vector<16x16xf32>
    %428 = arith.addf %427, %15 : vector<16x16xf32>
    %cst_169 = arith.constant dense<0xFF800000> : vector<16xf32>
    %429 = vector.multi_reduction <maximumf>, %428, %cst_169 [1] : vector<16x16xf32> to vector<16xf32>
    %cst_170 = arith.constant 0xFF800000 : f32
    %430 = vector.broadcast %cst_170 : f32 to vector<16xf32>
    %431 = arith.maximumf %430, %429 : vector<16xf32>
    %432 = vector.shape_cast %431 : vector<16xf32> to vector<16x1xf32>
    %433 = vector.broadcast %432 : vector<16x1xf32> to vector<16x16xf32>
    %434 = arith.subf %428, %433 : vector<16x16xf32>
    %435 = math.exp %434 : vector<16x16xf32>
    %cst_171 = arith.constant dense<0.000000e+00> : vector<16xf32>
    %436 = vector.multi_reduction <add>, %435, %cst_171 [1] : vector<16x16xf32> to vector<16xf32>
    %437 = vector.shape_cast %436 : vector<16xf32> to vector<16x1xf32>
    %438 = vector.broadcast %437 : vector<16x1xf32> to vector<16x16xf32>
    %439 = arith.divf %435, %438 : vector<16x16xf32>
    %440 = arith.truncf %439 : vector<16x16xf32> to vector<16x16xbf16>
    %441 = arith.truncf %422 : vector<16x8xf32> to vector<16x8xbf16>
    %cst_172 = arith.constant dense<0.000000e+00> : vector<16x8xf32>
    %442 = tpu.matmul %440, %441, %cst_172 {dimension_numbers = #tpu.dot_dimension_numbers<[1], [0], [0], [1], [0, 0, 1, 1], [], []>} : vector<16x16xbf16>, vector<16x8xbf16>, vector<16x8xf32> -> vector<16x8xf32>
    %443 = vector.extract_strided_slice %371 {offsets = [0, 24], sizes = [16, 8], strides = [1, 1]} : vector<16x32xf32> to vector<16x8xf32>
    %444 = vector.extract_strided_slice %372 {offsets = [0, 24], sizes = [16, 8], strides = [1, 1]} : vector<16x32xf32> to vector<16x8xf32>
    %445 = vector.extract_strided_slice %373 {offsets = [0, 24], sizes = [16, 8], strides = [1, 1]} : vector<16x32xf32> to vector<16x8xf32>
    %446 = arith.truncf %443 : vector<16x8xf32> to vector<16x8xbf16>
    %447 = arith.truncf %444 : vector<16x8xf32> to vector<16x8xbf16>
    %cst_173 = arith.constant dense<0.000000e+00> : vector<16x16xf32>
    %448 = tpu.matmul %446, %447, %cst_173 {dimension_numbers = #tpu.dot_dimension_numbers<[1], [1], [0], [0], [0, 0, 1, 0], [], []>} : vector<16x8xbf16>, vector<16x8xbf16>, vector<16x16xf32> -> vector<16x16xf32>
    %cst_174 = arith.constant 0.353553385 : f32
    %449 = vector.broadcast %cst_174 : f32 to vector<16x16xf32>
    %450 = arith.mulf %448, %449 : vector<16x16xf32>
    %451 = arith.addf %450, %15 : vector<16x16xf32>
    %cst_175 = arith.constant dense<0xFF800000> : vector<16xf32>
    %452 = vector.multi_reduction <maximumf>, %451, %cst_175 [1] : vector<16x16xf32> to vector<16xf32>
    %cst_176 = arith.constant 0xFF800000 : f32
    %453 = vector.broadcast %cst_176 : f32 to vector<16xf32>
    %454 = arith.maximumf %453, %452 : vector<16xf32>
    %455 = vector.shape_cast %454 : vector<16xf32> to vector<16x1xf32>
    %456 = vector.broadcast %455 : vector<16x1xf32> to vector<16x16xf32>
    %457 = arith.subf %451, %456 : vector<16x16xf32>
    %458 = math.exp %457 : vector<16x16xf32>
    %cst_177 = arith.constant dense<0.000000e+00> : vector<16xf32>
    %459 = vector.multi_reduction <add>, %458, %cst_177 [1] : vector<16x16xf32> to vector<16xf32>
    %460 = vector.shape_cast %459 : vector<16xf32> to vector<16x1xf32>
    %461 = vector.broadcast %460 : vector<16x1xf32> to vector<16x16xf32>
    %462 = arith.divf %458, %461 : vector<16x16xf32>
    %463 = arith.truncf %462 : vector<16x16xf32> to vector<16x16xbf16>
    %464 = arith.truncf %445 : vector<16x8xf32> to vector<16x8xbf16>
    %cst_178 = arith.constant dense<0.000000e+00> : vector<16x8xf32>
    %465 = tpu.matmul %463, %464, %cst_178 {dimension_numbers = #tpu.dot_dimension_numbers<[1], [0], [0], [1], [0, 0, 1, 1], [], []>} : vector<16x16xbf16>, vector<16x8xbf16>, vector<16x8xf32> -> vector<16x8xf32>
    %466 = tpu.concatenate %396, %419, %442, %465 in 1 : vector<16x8xf32>, vector<16x8xf32>, vector<16x8xf32>, vector<16x8xf32> -> vector<16x32xf32>
    %467 = arith.truncf %466 : vector<16x32xf32> to vector<16x32xbf16>
    %468 = arith.truncf %350 : vector<32x32xf32> to vector<32x32xbf16>
    %cst_179 = arith.constant dense<0.000000e+00> : vector<16x32xf32>
    %469 = tpu.matmul %467, %468, %cst_179 {dimension_numbers = #tpu.dot_dimension_numbers<[1], [0], [0], [1], [0, 0, 1, 1], [], []>} : vector<16x32xbf16>, vector<32x32xbf16>, vector<16x32xf32> -> vector<16x32xf32>
    %470 = vector.broadcast %351 : vector<1x32xf32> to vector<16x32xf32>
    %471 = arith.addf %469, %470 : vector<16x32xf32>
    %472 = arith.addf %347, %471 : vector<16x32xf32>
    %cst_180 = arith.constant dense<0.000000e+00> : vector<16xf32>
    %473 = vector.multi_reduction <add>, %472, %cst_180 [1] : vector<16x32xf32> to vector<16xf32>
    %474 = vector.shape_cast %473 : vector<16xf32> to vector<16x1xf32>
    %cst_181 = arith.constant 3.200000e+01 : f32
    %475 = vector.broadcast %cst_181 : f32 to vector<16x1xf32>
    %476 = arith.divf %474, %475 : vector<16x1xf32>
    %477 = vector.broadcast %476 : vector<16x1xf32> to vector<16x32xf32>
    %478 = arith.subf %472, %477 : vector<16x32xf32>
    %479 = arith.mulf %478, %478 : vector<16x32xf32>
    %cst_182 = arith.constant dense<0.000000e+00> : vector<16xf32>
    %480 = vector.multi_reduction <add>, %479, %cst_182 [1] : vector<16x32xf32> to vector<16xf32>
    %481 = vector.shape_cast %480 : vector<16xf32> to vector<16x1xf32>
    %cst_183 = arith.constant 3.200000e+01 : f32
    %482 = vector.broadcast %cst_183 : f32 to vector<16x1xf32>
    %483 = arith.divf %481, %482 : vector<16x1xf32>
    %484 = vector.broadcast %476 : vector<16x1xf32> to vector<16x32xf32>
    %485 = arith.subf %472, %484 : vector<16x32xf32>
    %cst_184 = arith.constant 9.99999974E-6 : f32
    %486 = vector.broadcast %cst_184 : f32 to vector<16x1xf32>
    %487 = arith.addf %483, %486 : vector<16x1xf32>
    %488 = math.rsqrt %487 : vector<16x1xf32>
    %489 = vector.broadcast %488 : vector<16x1xf32> to vector<16x32xf32>
    %490 = arith.mulf %485, %489 : vector<16x32xf32>
    %491 = vector.broadcast %360 : vector<1x32xf32> to vector<16x32xf32>
    %492 = arith.mulf %490, %491 : vector<16x32xf32>
    %493 = vector.broadcast %361 : vector<1x32xf32> to vector<16x32xf32>
    %494 = arith.addf %492, %493 : vector<16x32xf32>
    %495 = vector.extract_strided_slice %352 {offsets = [0, 0], sizes = [32, 32], strides = [1, 1]} : vector<32x96xf32> to vector<32x32xf32>
    %496 = arith.truncf %494 : vector<16x32xf32> to vector<16x32xbf16>
    %497 = arith.truncf %495 : vector<32x32xf32> to vector<32x32xbf16>
    %cst_185 = arith.constant dense<0.000000e+00> : vector<16x32xf32>
    %498 = tpu.matmul %496, %497, %cst_185 {dimension_numbers = #tpu.dot_dimension_numbers<[1], [0], [0], [1], [0, 0, 1, 1], [], []>} : vector<16x32xbf16>, vector<32x32xbf16>, vector<16x32xf32> -> vector<16x32xf32>
    %499 = vector.extract_strided_slice %353 {offsets = [0, 0], sizes = [1, 32], strides = [1, 1]} : vector<1x96xf32> to vector<1x32xf32>
    %500 = vector.broadcast %499 : vector<1x32xf32> to vector<16x32xf32>
    %501 = arith.addf %498, %500 : vector<16x32xf32>
    %502 = vector.extract_strided_slice %352 {offsets = [0, 32], sizes = [32, 64], strides = [1, 1]} : vector<32x96xf32> to vector<32x64xf32>
    %503 = arith.truncf %28 : vector<16x32xf32> to vector<16x32xbf16>
    %504 = arith.truncf %502 : vector<32x64xf32> to vector<32x64xbf16>
    %cst_186 = arith.constant dense<0.000000e+00> : vector<16x64xf32>
    %505 = tpu.matmul %503, %504, %cst_186 {dimension_numbers = #tpu.dot_dimension_numbers<[1], [0], [0], [1], [0, 0, 1, 1], [], []>} : vector<16x32xbf16>, vector<32x64xbf16>, vector<16x64xf32> -> vector<16x64xf32>
    %506 = vector.extract_strided_slice %353 {offsets = [0, 32], sizes = [1, 64], strides = [1, 1]} : vector<1x96xf32> to vector<1x64xf32>
    %507 = vector.broadcast %506 : vector<1x64xf32> to vector<16x64xf32>
    %508 = arith.addf %505, %507 : vector<16x64xf32>
    %509 = vector.extract_strided_slice %508 {offsets = [0, 0], sizes = [16, 32], strides = [1, 1]} : vector<16x64xf32> to vector<16x32xf32>
    %510 = vector.extract_strided_slice %508 {offsets = [0, 32], sizes = [16, 32], strides = [1, 1]} : vector<16x64xf32> to vector<16x32xf32>
    %511 = vector.extract_strided_slice %501 {offsets = [0, 0], sizes = [16, 8], strides = [1, 1]} : vector<16x32xf32> to vector<16x8xf32>
    %512 = vector.extract_strided_slice %509 {offsets = [0, 0], sizes = [16, 8], strides = [1, 1]} : vector<16x32xf32> to vector<16x8xf32>
    %513 = vector.extract_strided_slice %510 {offsets = [0, 0], sizes = [16, 8], strides = [1, 1]} : vector<16x32xf32> to vector<16x8xf32>
    %514 = arith.truncf %511 : vector<16x8xf32> to vector<16x8xbf16>
    %515 = arith.truncf %512 : vector<16x8xf32> to vector<16x8xbf16>
    %cst_187 = arith.constant dense<0.000000e+00> : vector<16x16xf32>
    %516 = tpu.matmul %514, %515, %cst_187 {dimension_numbers = #tpu.dot_dimension_numbers<[1], [1], [0], [0], [0, 0, 1, 0], [], []>} : vector<16x8xbf16>, vector<16x8xbf16>, vector<16x16xf32> -> vector<16x16xf32>
    %cst_188 = arith.constant 0.353553385 : f32
    %517 = vector.broadcast %cst_188 : f32 to vector<16x16xf32>
    %518 = arith.mulf %516, %517 : vector<16x16xf32>
    %519 = arith.addf %518, %18 : vector<16x16xf32>
    %cst_189 = arith.constant dense<0xFF800000> : vector<16xf32>
    %520 = vector.multi_reduction <maximumf>, %519, %cst_189 [1] : vector<16x16xf32> to vector<16xf32>
    %cst_190 = arith.constant 0xFF800000 : f32
    %521 = vector.broadcast %cst_190 : f32 to vector<16xf32>
    %522 = arith.maximumf %521, %520 : vector<16xf32>
    %523 = vector.shape_cast %522 : vector<16xf32> to vector<16x1xf32>
    %524 = vector.broadcast %523 : vector<16x1xf32> to vector<16x16xf32>
    %525 = arith.subf %519, %524 : vector<16x16xf32>
    %526 = math.exp %525 : vector<16x16xf32>
    %cst_191 = arith.constant dense<0.000000e+00> : vector<16xf32>
    %527 = vector.multi_reduction <add>, %526, %cst_191 [1] : vector<16x16xf32> to vector<16xf32>
    %528 = vector.shape_cast %527 : vector<16xf32> to vector<16x1xf32>
    %529 = vector.broadcast %528 : vector<16x1xf32> to vector<16x16xf32>
    %530 = arith.divf %526, %529 : vector<16x16xf32>
    %531 = arith.truncf %530 : vector<16x16xf32> to vector<16x16xbf16>
    %532 = arith.truncf %513 : vector<16x8xf32> to vector<16x8xbf16>
    %cst_192 = arith.constant dense<0.000000e+00> : vector<16x8xf32>
    %533 = tpu.matmul %531, %532, %cst_192 {dimension_numbers = #tpu.dot_dimension_numbers<[1], [0], [0], [1], [0, 0, 1, 1], [], []>} : vector<16x16xbf16>, vector<16x8xbf16>, vector<16x8xf32> -> vector<16x8xf32>
    %534 = vector.extract_strided_slice %501 {offsets = [0, 8], sizes = [16, 8], strides = [1, 1]} : vector<16x32xf32> to vector<16x8xf32>
    %535 = vector.extract_strided_slice %509 {offsets = [0, 8], sizes = [16, 8], strides = [1, 1]} : vector<16x32xf32> to vector<16x8xf32>
    %536 = vector.extract_strided_slice %510 {offsets = [0, 8], sizes = [16, 8], strides = [1, 1]} : vector<16x32xf32> to vector<16x8xf32>
    %537 = arith.truncf %534 : vector<16x8xf32> to vector<16x8xbf16>
    %538 = arith.truncf %535 : vector<16x8xf32> to vector<16x8xbf16>
    %cst_193 = arith.constant dense<0.000000e+00> : vector<16x16xf32>
    %539 = tpu.matmul %537, %538, %cst_193 {dimension_numbers = #tpu.dot_dimension_numbers<[1], [1], [0], [0], [0, 0, 1, 0], [], []>} : vector<16x8xbf16>, vector<16x8xbf16>, vector<16x16xf32> -> vector<16x16xf32>
    %cst_194 = arith.constant 0.353553385 : f32
    %540 = vector.broadcast %cst_194 : f32 to vector<16x16xf32>
    %541 = arith.mulf %539, %540 : vector<16x16xf32>
    %542 = arith.addf %541, %18 : vector<16x16xf32>
    %cst_195 = arith.constant dense<0xFF800000> : vector<16xf32>
    %543 = vector.multi_reduction <maximumf>, %542, %cst_195 [1] : vector<16x16xf32> to vector<16xf32>
    %cst_196 = arith.constant 0xFF800000 : f32
    %544 = vector.broadcast %cst_196 : f32 to vector<16xf32>
    %545 = arith.maximumf %544, %543 : vector<16xf32>
    %546 = vector.shape_cast %545 : vector<16xf32> to vector<16x1xf32>
    %547 = vector.broadcast %546 : vector<16x1xf32> to vector<16x16xf32>
    %548 = arith.subf %542, %547 : vector<16x16xf32>
    %549 = math.exp %548 : vector<16x16xf32>
    %cst_197 = arith.constant dense<0.000000e+00> : vector<16xf32>
    %550 = vector.multi_reduction <add>, %549, %cst_197 [1] : vector<16x16xf32> to vector<16xf32>
    %551 = vector.shape_cast %550 : vector<16xf32> to vector<16x1xf32>
    %552 = vector.broadcast %551 : vector<16x1xf32> to vector<16x16xf32>
    %553 = arith.divf %549, %552 : vector<16x16xf32>
    %554 = arith.truncf %553 : vector<16x16xf32> to vector<16x16xbf16>
    %555 = arith.truncf %536 : vector<16x8xf32> to vector<16x8xbf16>
    %cst_198 = arith.constant dense<0.000000e+00> : vector<16x8xf32>
    %556 = tpu.matmul %554, %555, %cst_198 {dimension_numbers = #tpu.dot_dimension_numbers<[1], [0], [0], [1], [0, 0, 1, 1], [], []>} : vector<16x16xbf16>, vector<16x8xbf16>, vector<16x8xf32> -> vector<16x8xf32>
    %557 = vector.extract_strided_slice %501 {offsets = [0, 16], sizes = [16, 8], strides = [1, 1]} : vector<16x32xf32> to vector<16x8xf32>
    %558 = vector.extract_strided_slice %509 {offsets = [0, 16], sizes = [16, 8], strides = [1, 1]} : vector<16x32xf32> to vector<16x8xf32>
    %559 = vector.extract_strided_slice %510 {offsets = [0, 16], sizes = [16, 8], strides = [1, 1]} : vector<16x32xf32> to vector<16x8xf32>
    %560 = arith.truncf %557 : vector<16x8xf32> to vector<16x8xbf16>
    %561 = arith.truncf %558 : vector<16x8xf32> to vector<16x8xbf16>
    %cst_199 = arith.constant dense<0.000000e+00> : vector<16x16xf32>
    %562 = tpu.matmul %560, %561, %cst_199 {dimension_numbers = #tpu.dot_dimension_numbers<[1], [1], [0], [0], [0, 0, 1, 0], [], []>} : vector<16x8xbf16>, vector<16x8xbf16>, vector<16x16xf32> -> vector<16x16xf32>
    %cst_200 = arith.constant 0.353553385 : f32
    %563 = vector.broadcast %cst_200 : f32 to vector<16x16xf32>
    %564 = arith.mulf %562, %563 : vector<16x16xf32>
    %565 = arith.addf %564, %18 : vector<16x16xf32>
    %cst_201 = arith.constant dense<0xFF800000> : vector<16xf32>
    %566 = vector.multi_reduction <maximumf>, %565, %cst_201 [1] : vector<16x16xf32> to vector<16xf32>
    %cst_202 = arith.constant 0xFF800000 : f32
    %567 = vector.broadcast %cst_202 : f32 to vector<16xf32>
    %568 = arith.maximumf %567, %566 : vector<16xf32>
    %569 = vector.shape_cast %568 : vector<16xf32> to vector<16x1xf32>
    %570 = vector.broadcast %569 : vector<16x1xf32> to vector<16x16xf32>
    %571 = arith.subf %565, %570 : vector<16x16xf32>
    %572 = math.exp %571 : vector<16x16xf32>
    %cst_203 = arith.constant dense<0.000000e+00> : vector<16xf32>
    %573 = vector.multi_reduction <add>, %572, %cst_203 [1] : vector<16x16xf32> to vector<16xf32>
    %574 = vector.shape_cast %573 : vector<16xf32> to vector<16x1xf32>
    %575 = vector.broadcast %574 : vector<16x1xf32> to vector<16x16xf32>
    %576 = arith.divf %572, %575 : vector<16x16xf32>
    %577 = arith.truncf %576 : vector<16x16xf32> to vector<16x16xbf16>
    %578 = arith.truncf %559 : vector<16x8xf32> to vector<16x8xbf16>
    %cst_204 = arith.constant dense<0.000000e+00> : vector<16x8xf32>
    %579 = tpu.matmul %577, %578, %cst_204 {dimension_numbers = #tpu.dot_dimension_numbers<[1], [0], [0], [1], [0, 0, 1, 1], [], []>} : vector<16x16xbf16>, vector<16x8xbf16>, vector<16x8xf32> -> vector<16x8xf32>
    %580 = vector.extract_strided_slice %501 {offsets = [0, 24], sizes = [16, 8], strides = [1, 1]} : vector<16x32xf32> to vector<16x8xf32>
    %581 = vector.extract_strided_slice %509 {offsets = [0, 24], sizes = [16, 8], strides = [1, 1]} : vector<16x32xf32> to vector<16x8xf32>
    %582 = vector.extract_strided_slice %510 {offsets = [0, 24], sizes = [16, 8], strides = [1, 1]} : vector<16x32xf32> to vector<16x8xf32>
    %583 = arith.truncf %580 : vector<16x8xf32> to vector<16x8xbf16>
    %584 = arith.truncf %581 : vector<16x8xf32> to vector<16x8xbf16>
    %cst_205 = arith.constant dense<0.000000e+00> : vector<16x16xf32>
    %585 = tpu.matmul %583, %584, %cst_205 {dimension_numbers = #tpu.dot_dimension_numbers<[1], [1], [0], [0], [0, 0, 1, 0], [], []>} : vector<16x8xbf16>, vector<16x8xbf16>, vector<16x16xf32> -> vector<16x16xf32>
    %cst_206 = arith.constant 0.353553385 : f32
    %586 = vector.broadcast %cst_206 : f32 to vector<16x16xf32>
    %587 = arith.mulf %585, %586 : vector<16x16xf32>
    %588 = arith.addf %587, %18 : vector<16x16xf32>
    %cst_207 = arith.constant dense<0xFF800000> : vector<16xf32>
    %589 = vector.multi_reduction <maximumf>, %588, %cst_207 [1] : vector<16x16xf32> to vector<16xf32>
    %cst_208 = arith.constant 0xFF800000 : f32
    %590 = vector.broadcast %cst_208 : f32 to vector<16xf32>
    %591 = arith.maximumf %590, %589 : vector<16xf32>
    %592 = vector.shape_cast %591 : vector<16xf32> to vector<16x1xf32>
    %593 = vector.broadcast %592 : vector<16x1xf32> to vector<16x16xf32>
    %594 = arith.subf %588, %593 : vector<16x16xf32>
    %595 = math.exp %594 : vector<16x16xf32>
    %cst_209 = arith.constant dense<0.000000e+00> : vector<16xf32>
    %596 = vector.multi_reduction <add>, %595, %cst_209 [1] : vector<16x16xf32> to vector<16xf32>
    %597 = vector.shape_cast %596 : vector<16xf32> to vector<16x1xf32>
    %598 = vector.broadcast %597 : vector<16x1xf32> to vector<16x16xf32>
    %599 = arith.divf %595, %598 : vector<16x16xf32>
    %600 = arith.truncf %599 : vector<16x16xf32> to vector<16x16xbf16>
    %601 = arith.truncf %582 : vector<16x8xf32> to vector<16x8xbf16>
    %cst_210 = arith.constant dense<0.000000e+00> : vector<16x8xf32>
    %602 = tpu.matmul %600, %601, %cst_210 {dimension_numbers = #tpu.dot_dimension_numbers<[1], [0], [0], [1], [0, 0, 1, 1], [], []>} : vector<16x16xbf16>, vector<16x8xbf16>, vector<16x8xf32> -> vector<16x8xf32>
    %603 = tpu.concatenate %533, %556, %579, %602 in 1 : vector<16x8xf32>, vector<16x8xf32>, vector<16x8xf32>, vector<16x8xf32> -> vector<16x32xf32>
    %604 = arith.truncf %603 : vector<16x32xf32> to vector<16x32xbf16>
    %605 = arith.truncf %354 : vector<32x32xf32> to vector<32x32xbf16>
    %cst_211 = arith.constant dense<0.000000e+00> : vector<16x32xf32>
    %606 = tpu.matmul %604, %605, %cst_211 {dimension_numbers = #tpu.dot_dimension_numbers<[1], [0], [0], [1], [0, 0, 1, 1], [], []>} : vector<16x32xbf16>, vector<32x32xbf16>, vector<16x32xf32> -> vector<16x32xf32>
    %607 = vector.broadcast %355 : vector<1x32xf32> to vector<16x32xf32>
    %608 = arith.addf %606, %607 : vector<16x32xf32>
    %609 = arith.addf %494, %608 : vector<16x32xf32>
    %cst_212 = arith.constant dense<0.000000e+00> : vector<16xf32>
    %610 = vector.multi_reduction <add>, %609, %cst_212 [1] : vector<16x32xf32> to vector<16xf32>
    %611 = vector.shape_cast %610 : vector<16xf32> to vector<16x1xf32>
    %cst_213 = arith.constant 3.200000e+01 : f32
    %612 = vector.broadcast %cst_213 : f32 to vector<16x1xf32>
    %613 = arith.divf %611, %612 : vector<16x1xf32>
    %614 = vector.broadcast %613 : vector<16x1xf32> to vector<16x32xf32>
    %615 = arith.subf %609, %614 : vector<16x32xf32>
    %616 = arith.mulf %615, %615 : vector<16x32xf32>
    %cst_214 = arith.constant dense<0.000000e+00> : vector<16xf32>
    %617 = vector.multi_reduction <add>, %616, %cst_214 [1] : vector<16x32xf32> to vector<16xf32>
    %618 = vector.shape_cast %617 : vector<16xf32> to vector<16x1xf32>
    %cst_215 = arith.constant 3.200000e+01 : f32
    %619 = vector.broadcast %cst_215 : f32 to vector<16x1xf32>
    %620 = arith.divf %618, %619 : vector<16x1xf32>
    %621 = vector.broadcast %613 : vector<16x1xf32> to vector<16x32xf32>
    %622 = arith.subf %609, %621 : vector<16x32xf32>
    %cst_216 = arith.constant 9.99999974E-6 : f32
    %623 = vector.broadcast %cst_216 : f32 to vector<16x1xf32>
    %624 = arith.addf %620, %623 : vector<16x1xf32>
    %625 = math.rsqrt %624 : vector<16x1xf32>
    %626 = vector.broadcast %625 : vector<16x1xf32> to vector<16x32xf32>
    %627 = arith.mulf %622, %626 : vector<16x32xf32>
    %628 = vector.broadcast %362 : vector<1x32xf32> to vector<16x32xf32>
    %629 = arith.mulf %627, %628 : vector<16x32xf32>
    %630 = vector.broadcast %363 : vector<1x32xf32> to vector<16x32xf32>
    %631 = arith.addf %629, %630 : vector<16x32xf32>
    %632 = arith.truncf %631 : vector<16x32xf32> to vector<16x32xbf16>
    %633 = arith.truncf %356 : vector<32x64xf32> to vector<32x64xbf16>
    %cst_217 = arith.constant dense<0.000000e+00> : vector<16x64xf32>
    %634 = tpu.matmul %632, %633, %cst_217 {dimension_numbers = #tpu.dot_dimension_numbers<[1], [0], [0], [1], [0, 0, 1, 1], [], []>} : vector<16x32xbf16>, vector<32x64xbf16>, vector<16x64xf32> -> vector<16x64xf32>
    %635 = vector.broadcast %357 : vector<1x64xf32> to vector<16x64xf32>
    %636 = arith.addf %634, %635 : vector<16x64xf32>
    %cst_218 = arith.constant 0.000000e+00 : f32
    %637 = vector.broadcast %cst_218 : f32 to vector<16x64xf32>
    %638 = arith.maximumf %636, %637 : vector<16x64xf32>
    %639 = arith.truncf %638 : vector<16x64xf32> to vector<16x64xbf16>
    %640 = arith.truncf %358 : vector<64x32xf32> to vector<64x32xbf16>
    %cst_219 = arith.constant dense<0.000000e+00> : vector<16x32xf32>
    %641 = tpu.matmul %639, %640, %cst_219 {dimension_numbers = #tpu.dot_dimension_numbers<[1], [0], [0], [1], [0, 0, 1, 1], [], []>} : vector<16x64xbf16>, vector<64x32xbf16>, vector<16x32xf32> -> vector<16x32xf32>
    %642 = vector.broadcast %359 : vector<1x32xf32> to vector<16x32xf32>
    %643 = arith.addf %641, %642 : vector<16x32xf32>
    %644 = arith.addf %631, %643 : vector<16x32xf32>
    %cst_220 = arith.constant dense<0.000000e+00> : vector<16xf32>
    %645 = vector.multi_reduction <add>, %644, %cst_220 [1] : vector<16x32xf32> to vector<16xf32>
    %646 = vector.shape_cast %645 : vector<16xf32> to vector<16x1xf32>
    %cst_221 = arith.constant 3.200000e+01 : f32
    %647 = vector.broadcast %cst_221 : f32 to vector<16x1xf32>
    %648 = arith.divf %646, %647 : vector<16x1xf32>
    %649 = vector.broadcast %648 : vector<16x1xf32> to vector<16x32xf32>
    %650 = arith.subf %644, %649 : vector<16x32xf32>
    %651 = arith.mulf %650, %650 : vector<16x32xf32>
    %cst_222 = arith.constant dense<0.000000e+00> : vector<16xf32>
    %652 = vector.multi_reduction <add>, %651, %cst_222 [1] : vector<16x32xf32> to vector<16xf32>
    %653 = vector.shape_cast %652 : vector<16xf32> to vector<16x1xf32>
    %cst_223 = arith.constant 3.200000e+01 : f32
    %654 = vector.broadcast %cst_223 : f32 to vector<16x1xf32>
    %655 = arith.divf %653, %654 : vector<16x1xf32>
    %656 = vector.broadcast %648 : vector<16x1xf32> to vector<16x32xf32>
    %657 = arith.subf %644, %656 : vector<16x32xf32>
    %cst_224 = arith.constant 9.99999974E-6 : f32
    %658 = vector.broadcast %cst_224 : f32 to vector<16x1xf32>
    %659 = arith.addf %655, %658 : vector<16x1xf32>
    %660 = math.rsqrt %659 : vector<16x1xf32>
    %661 = vector.broadcast %660 : vector<16x1xf32> to vector<16x32xf32>
    %662 = arith.mulf %657, %661 : vector<16x32xf32>
    %663 = vector.broadcast %364 : vector<1x32xf32> to vector<16x32xf32>
    %664 = arith.mulf %662, %663 : vector<16x32xf32>
    %665 = vector.broadcast %365 : vector<1x32xf32> to vector<16x32xf32>
    %666 = arith.addf %664, %665 : vector<16x32xf32>
    %c0_225 = arith.constant 0 : index
    %c0_226 = arith.constant 0 : index
    %667 = vector.load %arg3[%c0_225, %c0_226] : memref<32x128xf32, #tpu.memory_space<vmem>>, vector<32x128xf32>
    %668 = arith.truncf %666 : vector<16x32xf32> to vector<16x32xbf16>
    %669 = arith.truncf %667 : vector<32x128xf32> to vector<32x128xbf16>
    %cst_227 = arith.constant dense<0.000000e+00> : vector<16x128xf32>
    %670 = tpu.matmul %668, %669, %cst_227 {dimension_numbers = #tpu.dot_dimension_numbers<[1], [0], [0], [1], [0, 0, 1, 1], [], []>} : vector<16x32xbf16>, vector<32x128xbf16>, vector<16x128xf32> -> vector<16x128xf32>
    %c0_228 = arith.constant 0 : index
    %c0_229 = arith.constant 0 : index
    %671 = vector.load %arg4[%c0_228, %c0_229] : memref<1x128xf32, #tpu.memory_space<vmem>>, vector<1x128xf32>
    %672 = vector.broadcast %671 : vector<1x128xf32> to vector<16x128xf32>
    %673 = arith.addf %670, %672 : vector<16x128xf32>
    %c0_230 = arith.constant 0 : index
    %c0_231 = arith.constant 0 : index
    %674 = vector.load %arg41[%c0_230, %c0_231] : memref<16x128xf32, #tpu.memory_space<vmem>>, vector<16x128xf32>
    tpu.vector_store %arg41[%c0_230, %c0_231], %673 {strides = array<i32>} : memref<16x128xf32, #tpu.memory_space<vmem>>, vector<16x128xf32>,
    return
  }
}

</mosaic_0001>

<llo_original>
// kernel: tpu_custom_call.1
$region0: #{tpu_custom_call.1}
  #allocation0 [shape = 'u32[]', space=smem, size = 0x4, offset = 0x4, fixed_abs, tag = 'smem constant byte address 0x4 - core index']
  #allocation1 [shape = 'u32[144,128]{1,0:T(1,128)}', space=vmem, size = 0x12000, scoped, tag = 'internal scratch']
  %s0 = inlined_call_operand.smem [shape: u32[42], index: -1, kind: input, shape index: {}]
  %s1 = sld [smem:[%s0]]
  %s2 = scalar_lea.smem %s0, 1
  %s3 = sld [smem:[%s2]]
  %s4 = scalar_lea.smem %s0, 2
  %s5 = sld [smem:[%s4]]
  %s6 = scalar_lea.smem %s0, 3
  %s7 = sld [smem:[%s6]]
  %s8 = scalar_lea.smem %s0, 4
  %s9 = sld [smem:[%s8]]
  %s10 = scalar_lea.smem %s0, 5
  %s11 = sld [smem:[%s10]]
  %s12 = scalar_lea.smem %s0, 6
  %s13 = sld [smem:[%s12]]
  %s14 = scalar_lea.smem %s0, 7
  %s15 = sld [smem:[%s14]]
  %s16 = scalar_lea.smem %s0, 8
  %s17 = sld [smem:[%s16]]
  %s18 = scalar_lea.smem %s0, 9
  %s19 = sld [smem:[%s18]]
  %s20 = scalar_lea.smem %s0, 10
  %s21 = sld [smem:[%s20]]
  %s22 = scalar_lea.smem %s0, 11
  %s23 = sld [smem:[%s22]]
  %s24 = scalar_lea.smem %s0, 12
  %s25 = sld [smem:[%s24]]
  %s26 = scalar_lea.smem %s0, 13
  %s27 = sld [smem:[%s26]]
  %s28 = scalar_lea.smem %s0, 14
  %s29 = sld [smem:[%s28]]
  %s30 = scalar_lea.smem %s0, 15
  %s31 = sld [smem:[%s30]]
  %s32 = scalar_lea.smem %s0, 16
  %s33 = sld [smem:[%s32]]
  %s34 = scalar_lea.smem %s0, 17
  %s35 = sld [smem:[%s34]]
  %s36 = scalar_lea.smem %s0, 18
  %s37 = sld [smem:[%s36]]
  %s38 = scalar_lea.smem %s0, 19
  %s39 = sld [smem:[%s38]]
  %s40 = scalar_lea.smem %s0, 20
  %s41 = sld [smem:[%s40]]
  %s42 = scalar_lea.smem %s0, 21
  %s43 = sld [smem:[%s42]]
  %s44 = scalar_lea.smem %s0, 22
  %s45 = sld [smem:[%s44]]
  %s46 = scalar_lea.smem %s0, 23
  %s47 = sld [smem:[%s46]]
  %s48 = scalar_lea.smem %s0, 24
  %s49 = sld [smem:[%s48]]
  %s50 = scalar_lea.smem %s0, 25
  %s51 = sld [smem:[%s50]]
  %s52 = scalar_lea.smem %s0, 26
  %s53 = sld [smem:[%s52]]
  %s54 = scalar_lea.smem %s0, 27
  %s55 = sld [smem:[%s54]]
  %s56 = scalar_lea.smem %s0, 28
  %s57 = sld [smem:[%s56]]
  %s58 = scalar_lea.smem %s0, 29
  %s59 = sld [smem:[%s58]]
  %s60 = scalar_lea.smem %s0, 30
  %s61 = sld [smem:[%s60]]
  %s62 = scalar_lea.smem %s0, 31
  %s63 = sld [smem:[%s62]]
  %s64 = scalar_lea.smem %s0, 32
  %s65 = sld [smem:[%s64]]
  %s66 = scalar_lea.smem %s0, 33
  %s67 = sld [smem:[%s66]]
  %s68 = scalar_lea.smem %s0, 34
  %s69 = sld [smem:[%s68]]
  %s70 = scalar_lea.smem %s0, 35
  %s71 = sld [smem:[%s70]]
  %s72 = scalar_lea.smem %s0, 36
  %s73 = sld [smem:[%s72]]
  %s74 = scalar_lea.smem %s0, 37
  %s75 = sld [smem:[%s74]]
  %s76 = scalar_lea.smem %s0, 38
  %s77 = sld [smem:[%s76]]
  %s78 = scalar_lea.smem %s0, 39
  %s79 = sld [smem:[%s78]]
  %s80 = scalar_lea.smem %s0, 40
  %s81 = sld [smem:[%s80]]
  %s82 = scalar_lea.smem %s0, 41
  %s83 = sld [smem:[%s82]]
  %s84 = sld [smem:[#allocation0]]
  $region254: #{tpu_custom_call.1} parent=0
    _
  %s86 = ssub.s32 1, %s84
  %s87 = scalar_select 0, %s86, %s84
  $region1: #{tpu_custom_call.1} parent=0
    #allocation2 [shape = 'u8[12288]{0}', space=vmem, size = 0x3000, scoped, tag = 'input window, operand 1, single buffered']
    #allocation3 [shape = 's32[1]{0}', space=sflag, size = 0x4, scoped, tag = 'scoped memory for tpu_custom_call.1']
    #allocation4 [shape = 's32[1]{0}', space=sflag, size = 0x4, scoped, tag = 'scoped memory for tpu_custom_call.1']
    #allocation5 [shape = 'u8[8192]{0}', space=vmem, size = 0x2000, scoped, tag = 'input window, operand 2, single buffered']
    #allocation6 [shape = 's32[1]{0}', space=sflag, size = 0x4, scoped, tag = 'scoped memory for tpu_custom_call.1']
    #allocation7 [shape = 'u8[512]{0}', space=vmem, size = 0x400, scoped, tag = 'input window, operand 4, single buffered']
    #allocation8 [shape = 'u8[512]{0}', space=vmem, size = 0x400, scoped, tag = 'input window, operand 6, single buffered']
    #allocation9 [shape = 's32[1]{0}', space=sflag, size = 0x4, scoped, tag = 'scoped memory for tpu_custom_call.1']
    #allocation10 [shape = 'u8[512]{0}', space=vmem, size = 0x400, scoped, tag = 'input window, operand 8, single buffered']
    #allocation11 [shape = 'u8[512]{0}', space=vmem, size = 0x400, scoped, tag = 'input window, operand 10, single buffered']
    #allocation12 [shape = 's32[1]{0}', space=sflag, size = 0x4, scoped, tag = 'scoped memory for tpu_custom_call.1']
    #allocation13 [shape = 'u8[512]{0}', space=vmem, size = 0x400, scoped, tag = 'input window, operand 12, single buffered']
    #allocation14 [shape = 'u8[512]{0}', space=vmem, size = 0x400, scoped, tag = 'input window, operand 14, single buffered']
    #allocation15 [shape = 's32[1]{0}', space=sflag, size = 0x4, scoped, tag = 'scoped memory for tpu_custom_call.1']
    #allocation16 [shape = 'u8[512]{0}', space=vmem, size = 0x400, scoped, tag = 'input window, operand 16, single buffered']
    #allocation17 [shape = 'u8[512]{0}', space=vmem, size = 0x400, scoped, tag = 'input window, operand 17, single buffered']
    #allocation18 [shape = 's32[1]{0}', space=sflag, size = 0x4, scoped, tag = 'scoped memory for tpu_custom_call.1']
    #allocation19 [shape = 'u8[512]{0}', space=vmem, size = 0x400, scoped, tag = 'input window, operand 18, single buffered']
    #allocation20 [shape = 'u8[512]{0}', space=vmem, size = 0x400, scoped, tag = 'input window, operand 19, single buffered']
    #allocation21 [shape = 's32[1]{0}', space=sflag, size = 0x4, scoped, tag = 'scoped memory for tpu_custom_call.1']
    #allocation22 [shape = 'u8[512]{0}', space=vmem, size = 0x400, scoped, tag = 'input window, operand 20, single buffered']
    #allocation23 [shape = 'u8[512]{0}', space=vmem, size = 0x400, scoped, tag = 'input window, operand 21, single buffered']
    #allocation24 [shape = 's32[1]{0}', space=sflag, size = 0x4, scoped, tag = 'scoped memory for tpu_custom_call.1']
    #allocation25 [shape = 'u8[16384]{0}', space=vmem, size = 0x4000, scoped, tag = 'input window, operand 25, single buffered']
    #allocation26 [shape = 'u8[512]{0}', space=vmem, size = 0x400, scoped, tag = 'input window, operand 26, single buffered']
    #allocation27 [shape = 's32[1]{0}', space=sflag, size = 0x4, scoped, tag = 'scoped memory for tpu_custom_call.1']
    #allocation28 [shape = 'u8[16384]{0}', space=vmem, size = 0x4000, scoped, tag = 'input window, operand 27, single buffered']
    #allocation29 [shape = 'u8[512]{0}', space=vmem, size = 0x400, scoped, tag = 'input window, operand 28, single buffered']
    #allocation30 [shape = 's32[1]{0}', space=sflag, size = 0x4, scoped, tag = 'scoped memory for tpu_custom_call.1']
    #allocation31 [shape = 'u8[16384]{0}', space=vmem, size = 0x4000, scoped, tag = 'input window, operand 29, single buffered']
    #allocation32 [shape = 'u8[512]{0}', space=vmem, size = 0x400, scoped, tag = 'input window, operand 30, single buffered']
    #allocation33 [shape = 's32[1]{0}', space=sflag, size = 0x4, scoped, tag = 'scoped memory for tpu_custom_call.1']
    #allocation34 [shape = 'u8[8192]{0}', space=vmem, size = 0x2000, scoped, tag = 'output window, operand 0, single buffered']
    %88 = vsyncpa [#allocation3], 0
    %89 = vsyncpa [#allocation6], 0
    %90 = vsyncpa [#allocation9], 0
    %91 = vsyncpa [#allocation12], 0
    %92 = vsyncpa [#allocation15], 0
    %93 = vsyncpa [#allocation18], 0
    %94 = vsyncpa [#allocation21], 0
    %95 = vsyncpa [#allocation24], 0
    %96 = vsyncpa [#allocation27], 0
    %97 = vsyncpa [#allocation30], 0
    %98 = vsyncpa [#allocation33], 0
    %99 = vsyncpa [#allocation4], 0
    // Predicated region
    $region2: #{tpu_custom_call.1} parent=1 // pred_check
      _
    $region3: #{tpu_custom_call.1} parent=1 // pred_check_branch
      %101 = sbr.rel (0) target = $region5
    $region4: #{tpu_custom_call.1} parent=1 // pred_region
      _
    $region5: #{tpu_custom_call.1} parent=1 // pred_fallthru
      _
    // Predicated region
    $region6: #{tpu_custom_call.1} parent=1 // pred_check
      _
    $region7: #{tpu_custom_call.1} parent=1 // pred_check_branch
      %103 = sbr.rel (0) target = $region9
    $region8: #{tpu_custom_call.1} parent=1 // pred_region
      %s105 = ssub.s32 384, 384
      %106 = vsyncadd [#allocation3], %s105
      %s107 = sshll.u32 [#allocation2], 4
      %s108 = int_to_ptr.vmem [resolvable:$true] %s107
      %113 = dma.hbm_to_vmem [thread:$0]  %s3, 384, %s108, [#allocation3], 128, 128, 8
    $region9: #{tpu_custom_call.1} parent=1 // pred_fallthru
      _
    // Predicated region
    $region10: #{tpu_custom_call.1} parent=1 // pred_check
      _
    $region11: #{tpu_custom_call.1} parent=1 // pred_check_branch
      %115 = sbr.rel (0) target = $region13
    $region12: #{tpu_custom_call.1} parent=1 // pred_region
      %s117 = ssub.s32 256, 256
      %118 = vsyncadd [#allocation6], %s117
      %s119 = sshll.u32 [#allocation5], 4
      %s120 = int_to_ptr.vmem [resolvable:$true] %s119
      %125 = dma.hbm_to_vmem [thread:$0]  %s5, 256, %s120, [#allocation6], 128, 128, 8
    $region13: #{tpu_custom_call.1} parent=1 // pred_fallthru
      _
    // Predicated region
    $region14: #{tpu_custom_call.1} parent=1 // pred_check
      _
    $region15: #{tpu_custom_call.1} parent=1 // pred_check_branch
      %127 = sbr.rel (0) target = $region17
    $region16: #{tpu_custom_call.1} parent=1 // pred_region
      _
    $region17: #{tpu_custom_call.1} parent=1 // pred_fallthru
      _
    // Predicated region
    $region18: #{tpu_custom_call.1} parent=1 // pred_check
      _
    $region19: #{tpu_custom_call.1} parent=1 // pred_check_branch
      %129 = sbr.rel (0) target = $region21
    $region20: #{tpu_custom_call.1} parent=1 // pred_region
      %s131 = ssub.s32 16, 16
      %132 = vsyncadd [#allocation6], %s131
      %s134 = sshll.u32 [#allocation7], 4
      %s135 = int_to_ptr.vmem [resolvable:$true] %s134
      %137 = dma.hbm_to_vmem [thread:$0]  %s9, 16, %s135, [#allocation6]
    $region21: #{tpu_custom_call.1} parent=1 // pred_fallthru
      _
    // Predicated region
    $region22: #{tpu_custom_call.1} parent=1 // pred_check
      _
    $region23: #{tpu_custom_call.1} parent=1 // pred_check_branch
      %139 = sbr.rel (0) target = $region25
    $region24: #{tpu_custom_call.1} parent=1 // pred_region
      _
    $region25: #{tpu_custom_call.1} parent=1 // pred_fallthru
      _
    // Predicated region
    $region26: #{tpu_custom_call.1} parent=1 // pred_check
      _
    $region27: #{tpu_custom_call.1} parent=1 // pred_check_branch
      %141 = sbr.rel (0) target = $region29
    $region28: #{tpu_custom_call.1} parent=1 // pred_region
      %s143 = ssub.s32 16, 16
      %144 = vsyncadd [#allocation9], %s143
      %s146 = sshll.u32 [#allocation8], 4
      %s147 = int_to_ptr.vmem [resolvable:$true] %s146
      %149 = dma.hbm_to_vmem [thread:$0]  %s13, 16, %s147, [#allocation9]
    $region29: #{tpu_custom_call.1} parent=1 // pred_fallthru
      _
    // Predicated region
    $region30: #{tpu_custom_call.1} parent=1 // pred_check
      _
    $region31: #{tpu_custom_call.1} parent=1 // pred_check_branch
      %151 = sbr.rel (0) target = $region33
    $region32: #{tpu_custom_call.1} parent=1 // pred_region
      _
    $region33: #{tpu_custom_call.1} parent=1 // pred_fallthru
      _
    // Predicated region
    $region34: #{tpu_custom_call.1} parent=1 // pred_check
      _
    $region35: #{tpu_custom_call.1} parent=1 // pred_check_branch
      %153 = sbr.rel (0) target = $region37
    $region36: #{tpu_custom_call.1} parent=1 // pred_region
      %s155 = ssub.s32 16, 16
      %156 = vsyncadd [#allocation9], %s155
      %s158 = sshll.u32 [#allocation10], 4
      %s159 = int_to_ptr.vmem [resolvable:$true] %s158
      %161 = dma.hbm_to_vmem [thread:$0]  %s17, 16, %s159, [#allocation9]
    $region37: #{tpu_custom_call.1} parent=1 // pred_fallthru
      _
    // Predicated region
    $region38: #{tpu_custom_call.1} parent=1 // pred_check
      _
    $region39: #{tpu_custom_call.1} parent=1 // pred_check_branch
      %163 = sbr.rel (0) target = $region41
    $region40: #{tpu_custom_call.1} parent=1 // pred_region
      _
    $region41: #{tpu_custom_call.1} parent=1 // pred_fallthru
      _
    // Predicated region
    $region42: #{tpu_custom_call.1} parent=1 // pred_check
      _
    $region43: #{tpu_custom_call.1} parent=1 // pred_check_branch
      %165 = sbr.rel (0) target = $region45
    $region44: #{tpu_custom_call.1} parent=1 // pred_region
      %s167 = ssub.s32 16, 16
      %168 = vsyncadd [#allocation12], %s167
      %s170 = sshll.u32 [#allocation11], 4
      %s171 = int_to_ptr.vmem [resolvable:$true] %s170
      %173 = dma.hbm_to_vmem [thread:$0]  %s21, 16, %s171, [#allocation12]
    $region45: #{tpu_custom_call.1} parent=1 // pred_fallthru
      _
    // Predicated region
    $region46: #{tpu_custom_call.1} parent=1 // pred_check
      _
    $region47: #{tpu_custom_call.1} parent=1 // pred_check_branch
      %175 = sbr.rel (0) target = $region49
    $region48: #{tpu_custom_call.1} parent=1 // pred_region
      _
    $region49: #{tpu_custom_call.1} parent=1 // pred_fallthru
      _
    // Predicated region
    $region50: #{tpu_custom_call.1} parent=1 // pred_check
      _
    $region51: #{tpu_custom_call.1} parent=1 // pred_check_branch
      %177 = sbr.rel (0) target = $region53
    $region52: #{tpu_custom_call.1} parent=1 // pred_region
      %s179 = ssub.s32 16, 16
      %180 = vsyncadd [#allocation12], %s179
      %s182 = sshll.u32 [#allocation13], 4
      %s183 = int_to_ptr.vmem [resolvable:$true] %s182
      %185 = dma.hbm_to_vmem [thread:$0]  %s25, 16, %s183, [#allocation12]
    $region53: #{tpu_custom_call.1} parent=1 // pred_fallthru
      _
    // Predicated region
    $region54: #{tpu_custom_call.1} parent=1 // pred_check
      _
    $region55: #{tpu_custom_call.1} parent=1 // pred_check_branch
      %187 = sbr.rel (0) target = $region57
    $region56: #{tpu_custom_call.1} parent=1 // pred_region
      _
    $region57: #{tpu_custom_call.1} parent=1 // pred_fallthru
      _
    // Predicated region
    $region58: #{tpu_custom_call.1} parent=1 // pred_check
      _
    $region59: #{tpu_custom_call.1} parent=1 // pred_check_branch
      %189 = sbr.rel (0) target = $region61
    $region60: #{tpu_custom_call.1} parent=1 // pred_region
      %s191 = ssub.s32 16, 16
      %192 = vsyncadd [#allocation15], %s191
      %s194 = sshll.u32 [#allocation14], 4
      %s195 = int_to_ptr.vmem [resolvable:$true] %s194
      %197 = dma.hbm_to_vmem [thread:$0]  %s29, 16, %s195, [#allocation15]
    $region61: #{tpu_custom_call.1} parent=1 // pred_fallthru
      _
    // Predicated region
    $region62: #{tpu_custom_call.1} parent=1 // pred_check
      _
    $region63: #{tpu_custom_call.1} parent=1 // pred_check_branch
      %199 = sbr.rel (0) target = $region65
    $region64: #{tpu_custom_call.1} parent=1 // pred_region
      _
    $region65: #{tpu_custom_call.1} parent=1 // pred_fallthru
      _
    // Predicated region
    $region66: #{tpu_custom_call.1} parent=1 // pred_check
      _
    $region67: #{tpu_custom_call.1} parent=1 // pred_check_branch
      %201 = sbr.rel (0) target = $region69
    $region68: #{tpu_custom_call.1} parent=1 // pred_region
      %s203 = ssub.s32 16, 16
      %204 = vsyncadd [#allocation15], %s203
      %s206 = sshll.u32 [#allocation16], 4
      %s207 = int_to_ptr.vmem [resolvable:$true] %s206
      %209 = dma.hbm_to_vmem [thread:$0]  %s33, 16, %s207, [#allocation15]
    $region69: #{tpu_custom_call.1} parent=1 // pred_fallthru
      _
    // Predicated region
    $region70: #{tpu_custom_call.1} parent=1 // pred_check
      _
    $region71: #{tpu_custom_call.1} parent=1 // pred_check_branch
      %211 = sbr.rel (0) target = $region73
    $region72: #{tpu_custom_call.1} parent=1 // pred_region
      %s213 = ssub.s32 16, 16
      %214 = vsyncadd [#allocation18], %s213
      %s216 = sshll.u32 [#allocation17], 4
      %s217 = int_to_ptr.vmem [resolvable:$true] %s216
      %219 = dma.hbm_to_vmem [thread:$0]  %s35, 16, %s217, [#allocation18]
    $region73: #{tpu_custom_call.1} parent=1 // pred_fallthru
      _
    // Predicated region
    $region74: #{tpu_custom_call.1} parent=1 // pred_check
      _
    $region75: #{tpu_custom_call.1} parent=1 // pred_check_branch
      %221 = sbr.rel (0) target = $region77
    $region76: #{tpu_custom_call.1} parent=1 // pred_region
      %s223 = ssub.s32 16, 16
      %224 = vsyncadd [#allocation18], %s223
      %s226 = sshll.u32 [#allocation19], 4
      %s227 = int_to_ptr.vmem [resolvable:$true] %s226
      %229 = dma.hbm_to_vmem [thread:$0]  %s37, 16, %s227, [#allocation18]
    $region77: #{tpu_custom_call.1} parent=1 // pred_fallthru
      _
    // Predicated region
    $region78: #{tpu_custom_call.1} parent=1 // pred_check
      _
    $region79: #{tpu_custom_call.1} parent=1 // pred_check_branch
      %231 = sbr.rel (0) target = $region81
    $region80: #{tpu_custom_call.1} parent=1 // pred_region
      %s233 = ssub.s32 16, 16
      %234 = vsyncadd [#allocation21], %s233
      %s236 = sshll.u32 [#allocation20], 4
      %s237 = int_to_ptr.vmem [resolvable:$true] %s236
      %239 = dma.hbm_to_vmem [thread:$0]  %s39, 16, %s237, [#allocation21]
    $region81: #{tpu_custom_call.1} parent=1 // pred_fallthru
      _
    // Predicated region
    $region82: #{tpu_custom_call.1} parent=1 // pred_check
      _
    $region83: #{tpu_custom_call.1} parent=1 // pred_check_branch
      %241 = sbr.rel (0) target = $region85
    $region84: #{tpu_custom_call.1} parent=1 // pred_region
      %s243 = ssub.s32 16, 16
      %244 = vsyncadd [#allocation21], %s243
      %s246 = sshll.u32 [#allocation22], 4
      %s247 = int_to_ptr.vmem [resolvable:$true] %s246
      %249 = dma.hbm_to_vmem [thread:$0]  %s41, 16, %s247, [#allocation21]
    $region85: #{tpu_custom_call.1} parent=1 // pred_fallthru
      _
    // Predicated region
    $region86: #{tpu_custom_call.1} parent=1 // pred_check
      _
    $region87: #{tpu_custom_call.1} parent=1 // pred_check_branch
      %251 = sbr.rel (0) target = $region89
    $region88: #{tpu_custom_call.1} parent=1 // pred_region
      %s253 = ssub.s32 16, 16
      %254 = vsyncadd [#allocation24], %s253
      %s256 = sshll.u32 [#allocation23], 4
      %s257 = int_to_ptr.vmem [resolvable:$true] %s256
      %259 = dma.hbm_to_vmem [thread:$0]  %s43, 16, %s257, [#allocation24]
    $region89: #{tpu_custom_call.1} parent=1 // pred_fallthru
      _
    // Predicated region
    $region90: #{tpu_custom_call.1} parent=1 // pred_check
      _
    $region91: #{tpu_custom_call.1} parent=1 // pred_check_branch
      %261 = sbr.rel (0) target = $region93
    $region92: #{tpu_custom_call.1} parent=1 // pred_region
      _
    $region93: #{tpu_custom_call.1} parent=1 // pred_fallthru
      _
    // Predicated region
    $region94: #{tpu_custom_call.1} parent=1 // pred_check
      _
    $region95: #{tpu_custom_call.1} parent=1 // pred_check_branch
      %263 = sbr.rel (0) target = $region97
    $region96: #{tpu_custom_call.1} parent=1 // pred_region
      _
    $region97: #{tpu_custom_call.1} parent=1 // pred_fallthru
      _
    // Predicated region
    $region98: #{tpu_custom_call.1} parent=1 // pred_check
      _
    $region99: #{tpu_custom_call.1} parent=1 // pred_check_branch
      %265 = sbr.rel (0) target = $region101
    $region100: #{tpu_custom_call.1} parent=1 // pred_region
      _
    $region101: #{tpu_custom_call.1} parent=1 // pred_fallthru
      _
    // Predicated region
    $region102: #{tpu_custom_call.1} parent=1 // pred_check
      _
    $region103: #{tpu_custom_call.1} parent=1 // pred_check_branch
      %267 = sbr.rel (0) target = $region105
    $region104: #{tpu_custom_call.1} parent=1 // pred_region
      %s269 = ssub.s32 512, 512
      %270 = vsyncadd [#allocation24], %s269
      %s271 = sshll.u32 [#allocation25], 4
      %s272 = int_to_ptr.vmem [resolvable:$true] %s271
      %277 = dma.hbm_to_vmem [thread:$0]  %s51, 512, %s272, [#allocation24], 128, 128, 8
    $region105: #{tpu_custom_call.1} parent=1 // pred_fallthru
      _
    // Predicated region
    $region106: #{tpu_custom_call.1} parent=1 // pred_check
      _
    $region107: #{tpu_custom_call.1} parent=1 // pred_check_branch
      %279 = sbr.rel (0) target = $region109
    $region108: #{tpu_custom_call.1} parent=1 // pred_region
      %s281 = ssub.s32 16, 16
      %282 = vsyncadd [#allocation27], %s281
      %s284 = sshll.u32 [#allocation26], 4
      %s285 = int_to_ptr.vmem [resolvable:$true] %s284
      %287 = dma.hbm_to_vmem [thread:$0]  %s53, 16, %s285, [#allocation27]
    $region109: #{tpu_custom_call.1} parent=1 // pred_fallthru
      _
    // Predicated region
    $region110: #{tpu_custom_call.1} parent=1 // pred_check
      _
    $region111: #{tpu_custom_call.1} parent=1 // pred_check_branch
      %289 = sbr.rel (0) target = $region113
    $region112: #{tpu_custom_call.1} parent=1 // pred_region
      %s291 = ssub.s32 512, 512
      %292 = vsyncadd [#allocation27], %s291
      %s293 = sshll.u32 [#allocation28], 4
      %s294 = int_to_ptr.vmem [resolvable:$true] %s293
      %299 = dma.hbm_to_vmem [thread:$0]  %s55, 512, %s294, [#allocation27], 128, 128, 8
    $region113: #{tpu_custom_call.1} parent=1 // pred_fallthru
      _
    // Predicated region
    $region114: #{tpu_custom_call.1} parent=1 // pred_check
      _
    $region115: #{tpu_custom_call.1} parent=1 // pred_check_branch
      %301 = sbr.rel (0) target = $region117
    $region116: #{tpu_custom_call.1} parent=1 // pred_region
      %s303 = ssub.s32 16, 16
      %304 = vsyncadd [#allocation30], %s303
      %s306 = sshll.u32 [#allocation29], 4
      %s307 = int_to_ptr.vmem [resolvable:$true] %s306
      %309 = dma.hbm_to_vmem [thread:$0]  %s57, 16, %s307, [#allocation30]
    $region117: #{tpu_custom_call.1} parent=1 // pred_fallthru
      _
    // Predicated region
    $region118: #{tpu_custom_call.1} parent=1 // pred_check
      _
    $region119: #{tpu_custom_call.1} parent=1 // pred_check_branch
      %311 = sbr.rel (0) target = $region121
    $region120: #{tpu_custom_call.1} parent=1 // pred_region
      %s313 = ssub.s32 512, 512
      %314 = vsyncadd [#allocation30], %s313
      %s315 = sshll.u32 [#allocation31], 4
      %s316 = int_to_ptr.vmem [resolvable:$true] %s315
      %321 = dma.hbm_to_vmem [thread:$0]  %s59, 512, %s316, [#allocation30], 128, 128, 8
    $region121: #{tpu_custom_call.1} parent=1 // pred_fallthru
      _
    // Predicated region
    $region122: #{tpu_custom_call.1} parent=1 // pred_check
      _
    $region123: #{tpu_custom_call.1} parent=1 // pred_check_branch
      %323 = sbr.rel (0) target = $region125
    $region124: #{tpu_custom_call.1} parent=1 // pred_region
      %s325 = ssub.s32 16, 16
      %326 = vsyncadd [#allocation33], %s325
      %s328 = sshll.u32 [#allocation32], 4
      %s329 = int_to_ptr.vmem [resolvable:$true] %s328
      %331 = dma.hbm_to_vmem [thread:$0]  %s61, 16, %s329, [#allocation33]
    $region125: #{tpu_custom_call.1} parent=1 // pred_fallthru
      _
    // Predicated region
    $region126: #{tpu_custom_call.1} parent=1 // pred_check
      _
    $region127: #{tpu_custom_call.1} parent=1 // pred_check_branch
      %333 = sbr.rel (0) target = $region129
    $region128: #{tpu_custom_call.1} parent=1 // pred_region
      _
    $region129: #{tpu_custom_call.1} parent=1 // pred_fallthru
      _
    // Predicated region
    $region130: #{tpu_custom_call.1} parent=1 // pred_check
      _
    $region131: #{tpu_custom_call.1} parent=1 // pred_check_branch
      %335 = sbr.rel (0) target = $region133
    $region132: #{tpu_custom_call.1} parent=1 // pred_region
      _
    $region133: #{tpu_custom_call.1} parent=1 // pred_fallthru
      _
    // Predicated region
    $region134: #{tpu_custom_call.1} parent=1 // pred_check
      _
    $region135: #{tpu_custom_call.1} parent=1 // pred_check_branch
      %337 = sbr.rel (0) target = $region137
    $region136: #{tpu_custom_call.1} parent=1 // pred_region
      _
    $region137: #{tpu_custom_call.1} parent=1 // pred_fallthru
      _
    // Predicated region
    $region138: #{tpu_custom_call.1} parent=1 // pred_check
      _
    $region139: #{tpu_custom_call.1} parent=1 // pred_check_branch
      %339 = sbr.rel (0) target = $region141
    $region140: #{tpu_custom_call.1} parent=1 // pred_region
      _
    $region141: #{tpu_custom_call.1} parent=1 // pred_fallthru
      _
    // Predicated region
    $region142: #{tpu_custom_call.1} parent=1 // pred_check
      _
    $region143: #{tpu_custom_call.1} parent=1 // pred_check_branch
      %341 = sbr.rel (0) target = $region145
    $region144: #{tpu_custom_call.1} parent=1 // pred_region
      _
    $region145: #{tpu_custom_call.1} parent=1 // pred_fallthru
      _
    // Predicated region
    $region146: #{tpu_custom_call.1} parent=1 // pred_check
      _
    $region147: #{tpu_custom_call.1} parent=1 // pred_check_branch
      %343 = sbr.rel (0) target = $region149
    $region148: #{tpu_custom_call.1} parent=1 // pred_region
      _
    $region149: #{tpu_custom_call.1} parent=1 // pred_fallthru
      _
    // Predicated region
    $region150: #{tpu_custom_call.1} parent=1 // pred_check
      _
    $region151: #{tpu_custom_call.1} parent=1 // pred_check_branch
      %345 = sbr.rel (0) target = $region153
    $region152: #{tpu_custom_call.1} parent=1 // pred_region
      _
    $region153: #{tpu_custom_call.1} parent=1 // pred_fallthru
      _
    // Predicated region
    $region154: #{tpu_custom_call.1} parent=1 // pred_check
      _
    $region155: #{tpu_custom_call.1} parent=1 // pred_check_branch
      %347 = sbr.rel (0) target = $region157
    $region156: #{tpu_custom_call.1} parent=1 // pred_region
      _
    $region157: #{tpu_custom_call.1} parent=1 // pred_fallthru
      _
    // Predicated region
    $region158: #{tpu_custom_call.1} parent=1 // pred_check
      _
    $region159: #{tpu_custom_call.1} parent=1 // pred_check_branch
      %349 = sbr.rel (0) target = $region161
    $region160: #{tpu_custom_call.1} parent=1 // pred_region
      _
    $region161: #{tpu_custom_call.1} parent=1 // pred_fallthru
      _
    // Predicated region
    $region162: #{tpu_custom_call.1} parent=1 // pred_check
      _
    $region163: #{tpu_custom_call.1} parent=1 // pred_check_branch
      %351 = sbr.rel (0) target = $region165
    $region164: #{tpu_custom_call.1} parent=1 // pred_region
      _
    $region165: #{tpu_custom_call.1} parent=1 // pred_fallthru
      _
    // Predicated region
    $region166: #{tpu_custom_call.1} parent=1 // pred_check
      _
    $region167: #{tpu_custom_call.1} parent=1 // pred_check_branch
      %353 = sbr.rel (0) target = $region169
    $region168: #{tpu_custom_call.1} parent=1 // pred_region
      %354 = dma.done [#allocation3], 384
    $region169: #{tpu_custom_call.1} parent=1 // pred_fallthru
      _
    // Predicated region
    $region170: #{tpu_custom_call.1} parent=1 // pred_check
      _
    $region171: #{tpu_custom_call.1} parent=1 // pred_check_branch
      %356 = sbr.rel (0) target = $region173
    $region172: #{tpu_custom_call.1} parent=1 // pred_region
      %357 = dma.done [#allocation6], 256
    $region173: #{tpu_custom_call.1} parent=1 // pred_fallthru
      _
    // Predicated region
    $region174: #{tpu_custom_call.1} parent=1 // pred_check
      _
    $region175: #{tpu_custom_call.1} parent=1 // pred_check_branch
      %359 = sbr.rel (0) target = $region177
    $region176: #{tpu_custom_call.1} parent=1 // pred_region
      %360 = dma.done [#allocation6], 16
    $region177: #{tpu_custom_call.1} parent=1 // pred_fallthru
      _
    // Predicated region
    $region178: #{tpu_custom_call.1} parent=1 // pred_check
      _
    $region179: #{tpu_custom_call.1} parent=1 // pred_check_branch
      %362 = sbr.rel (0) target = $region181
    $region180: #{tpu_custom_call.1} parent=1 // pred_region
      %363 = dma.done [#allocation9], 16
    $region181: #{tpu_custom_call.1} parent=1 // pred_fallthru
      _
    // Predicated region
    $region182: #{tpu_custom_call.1} parent=1 // pred_check
      _
    $region183: #{tpu_custom_call.1} parent=1 // pred_check_branch
      %365 = sbr.rel (0) target = $region185
    $region184: #{tpu_custom_call.1} parent=1 // pred_region
      %366 = dma.done [#allocation9], 16
    $region185: #{tpu_custom_call.1} parent=1 // pred_fallthru
      _
    // Predicated region
    $region186: #{tpu_custom_call.1} parent=1 // pred_check
      _
    $region187: #{tpu_custom_call.1} parent=1 // pred_check_branch
      %368 = sbr.rel (0) target = $region189
    $region188: #{tpu_custom_call.1} parent=1 // pred_region
      %369 = dma.done [#allocation12], 16
    $region189: #{tpu_custom_call.1} parent=1 // pred_fallthru
      _
    // Predicated region
    $region190: #{tpu_custom_call.1} parent=1 // pred_check
      _
    $region191: #{tpu_custom_call.1} parent=1 // pred_check_branch
      %371 = sbr.rel (0) target = $region193
    $region192: #{tpu_custom_call.1} parent=1 // pred_region
      %372 = dma.done [#allocation12], 16
    $region193: #{tpu_custom_call.1} parent=1 // pred_fallthru
      _
    // Predicated region
    $region194: #{tpu_custom_call.1} parent=1 // pred_check
      _
    $region195: #{tpu_custom_call.1} parent=1 // pred_check_branch
      %374 = sbr.rel (0) target = $region197
    $region196: #{tpu_custom_call.1} parent=1 // pred_region
      %375 = dma.done [#allocation15], 16
    $region197: #{tpu_custom_call.1} parent=1 // pred_fallthru
      _
    // Predicated region
    $region198: #{tpu_custom_call.1} parent=1 // pred_check
      _
    $region199: #{tpu_custom_call.1} parent=1 // pred_check_branch
      %377 = sbr.rel (0) target = $region201
    $region200: #{tpu_custom_call.1} parent=1 // pred_region
      %378 = dma.done [#allocation15], 16
    $region201: #{tpu_custom_call.1} parent=1 // pred_fallthru
      _
    // Predicated region
    $region202: #{tpu_custom_call.1} parent=1 // pred_check
      _
    $region203: #{tpu_custom_call.1} parent=1 // pred_check_branch
      %380 = sbr.rel (0) target = $region205
    $region204: #{tpu_custom_call.1} parent=1 // pred_region
      %381 = dma.done [#allocation18], 16
    $region205: #{tpu_custom_call.1} parent=1 // pred_fallthru
      _
    // Predicated region
    $region206: #{tpu_custom_call.1} parent=1 // pred_check
      _
    $region207: #{tpu_custom_call.1} parent=1 // pred_check_branch
      %383 = sbr.rel (0) target = $region209
    $region208: #{tpu_custom_call.1} parent=1 // pred_region
      %384 = dma.done [#allocation18], 16
    $region209: #{tpu_custom_call.1} parent=1 // pred_fallthru
      _
    // Predicated region
    $region210: #{tpu_custom_call.1} parent=1 // pred_check
      _
    $region211: #{tpu_custom_call.1} parent=1 // pred_check_branch
      %386 = sbr.rel (0) target = $region213
    $region212: #{tpu_custom_call.1} parent=1 // pred_region
      %387 = dma.done [#allocation21], 16
    $region213: #{tpu_custom_call.1} parent=1 // pred_fallthru
      _
    // Predicated region
    $region214: #{tpu_custom_call.1} parent=1 // pred_check
      _
    $region215: #{tpu_custom_call.1} parent=1 // pred_check_branch
      %389 = sbr.rel (0) target = $region217
    $region216: #{tpu_custom_call.1} parent=1 // pred_region
      %390 = dma.done [#allocation21], 16
    $region217: #{tpu_custom_call.1} parent=1 // pred_fallthru
      _
    // Predicated region
    $region218: #{tpu_custom_call.1} parent=1 // pred_check
      _
    $region219: #{tpu_custom_call.1} parent=1 // pred_check_branch
      %392 = sbr.rel (0) target = $region221
    $region220: #{tpu_custom_call.1} parent=1 // pred_region
      %393 = dma.done [#allocation24], 16
    $region221: #{tpu_custom_call.1} parent=1 // pred_fallthru
      _
    // Predicated region
    $region222: #{tpu_custom_call.1} parent=1 // pred_check
      _
    $region223: #{tpu_custom_call.1} parent=1 // pred_check_branch
      %395 = sbr.rel (0) target = $region225
    $region224: #{tpu_custom_call.1} parent=1 // pred_region
      %396 = dma.done [#allocation24], 512
    $region225: #{tpu_custom_call.1} parent=1 // pred_fallthru
      _
    // Predicated region
    $region226: #{tpu_custom_call.1} parent=1 // pred_check
      _
    $region227: #{tpu_custom_call.1} parent=1 // pred_check_branch
      %398 = sbr.rel (0) target = $region229
    $region228: #{tpu_custom_call.1} parent=1 // pred_region
      %399 = dma.done [#allocation27], 16
    $region229: #{tpu_custom_call.1} parent=1 // pred_fallthru
      _
    // Predicated region
    $region230: #{tpu_custom_call.1} parent=1 // pred_check
      _
    $region231: #{tpu_custom_call.1} parent=1 // pred_check_branch
      %401 = sbr.rel (0) target = $region233
    $region232: #{tpu_custom_call.1} parent=1 // pred_region
      %402 = dma.done [#allocation27], 512
    $region233: #{tpu_custom_call.1} parent=1 // pred_fallthru
      _
    // Predicated region
    $region234: #{tpu_custom_call.1} parent=1 // pred_check
      _
    $region235: #{tpu_custom_call.1} parent=1 // pred_check_branch
      %404 = sbr.rel (0) target = $region237
    $region236: #{tpu_custom_call.1} parent=1 // pred_region
      %405 = dma.done [#allocation30], 16
    $region237: #{tpu_custom_call.1} parent=1 // pred_fallthru
      _
    // Predicated region
    $region238: #{tpu_custom_call.1} parent=1 // pred_check
      _
    $region239: #{tpu_custom_call.1} parent=1 // pred_check_branch
      %407 = sbr.rel (0) target = $region241
    $region240: #{tpu_custom_call.1} parent=1 // pred_region
      %408 = dma.done [#allocation30], 512
    $region241: #{tpu_custom_call.1} parent=1 // pred_fallthru
      _
    // Predicated region
    $region242: #{tpu_custom_call.1} parent=1 // pred_check
      _
    $region243: #{tpu_custom_call.1} parent=1 // pred_check_branch
      %410 = sbr.rel (0) target = $region245
    $region244: #{tpu_custom_call.1} parent=1 // pred_region
      %411 = dma.done [#allocation33], 16
    $region245: #{tpu_custom_call.1} parent=1 // pred_fallthru
      _
    %v413 = vlaneseq
    %v414 = vshrl.u32 %v413, 7
    %v415 = vadd.s32 %v414, 8
    %v416 = vlaneseq
    %v417 = vand.u32 %v416, 127
    %v418 = vshra.s32 %v414, 3
    %v419 = vshra.s32 %v415, 3
    %v420 = vshra.s32 %v417, 3
    %vm421 = vcmp.eq.s32.totalorder %v418, %v420
    %vm422 = vcmp.eq.s32.totalorder %v419, %v420
    %v423 = vand.u32 %v417, 7
    %v424 = vand.u32 %v414, 7
    %v425 = vand.u32 %v415, 7
    %vm426 = vcmp.le.s32.totalorder %v423, %v424
    %vm427 = vcmp.le.s32.totalorder %v423, %v425
    %vm428 = vmand %vm421, %vm426
    %vm429 = vmand %vm422, %vm427
    %v430 = vsel %vm428, 0.0, -1e+30
    %v431 = vsel %vm429, 0.0, -1e+30
    %v432 = vsel %vm421, 0.0, -1e+30
    %v433 = vsel %vm422, 0.0, -1e+30
    %v434 = vld [vmem:[%s1] sm:$0xff]
    %v435 = vld [vmem:[%s1 + $0x8] sm:$0xff]
    %436 = vset.pattern.permute.xlu0 0
    %437 = vperm.xlu0 %436, %v434
    %v438 = vpop.permute.xlu0 %437
    %439 = vset.pattern.permute.xlu0 0
    %440 = vperm.xlu0 %439, %v435
    %v441 = vpop.permute.xlu0 %440
    %vm442 = vcmp.eq.s32.totalorder %v438, %v417
    %vm443 = vcmp.eq.s32.totalorder %v441, %v417
    %v444 = vsel %vm442, 1, 0
    %v445 = vsel %vm443, 1, 0
    %v446 = vcvt.s32.f32 %v444
    %v447 = vcvt.s32.f32 %v445
    %v448 = vld [vmem:[#allocation2] sm:$0xff]
    %v449 = vld [vmem:[#allocation2 + $0x8] sm:$0xff]
    %v450 = vld [vmem:[#allocation2 + $0x10] sm:$0xf]
    %v451 = vld [vmem:[#allocation5] sm:$0xff]
    %v452 = vld [vmem:[#allocation5 + $0x8] sm:$0xff]
    %vm453 = vcmask 162816
    %v455 = vsel %vm453, %v446, 0
    %v458 = vsel %vm453, %v447, 0
    %vm460 = vcmask 1043456
    %v462 = vsel %vm460, %v450, 0
    %464 = vmatprep.subr.mxu0 0.0
    %465 = vmatpush1.msra.mxu0 %v448
    %466 = vmatprep.subr.mxu0 0.0
    %467 = vmatpush1.msra.mxu0 %v449
    %468 = vmatprep.subr.mxu0 0.0
    %469 = vmatpush1.msra.mxu0 %v462
    %470 = vmatprep.subr.mxu0 0.0
    %471 = vmatpush1.msra.mxu0 0.0
    %472 = vmatprep.subr.mxu0 0.0
    %473 = vmatpush1.msra.mxu0 0.0
    %474 = vmatprep.subr.mxu0 0.0
    %475 = vmatpush1.msra.mxu0 0.0
    %476 = vmatprep.subr.mxu0 0.0
    %477 = vmatpush1.msra.mxu0 0.0
    %478 = vmatprep.subr.mxu0 0.0
    %479 = vmatpush1.msra.mxu0 0.0
    %480 = vmatprep.subr.mxu0 0.0
    %481 = vmatpush1.msra.mxu0 0.0
    %482 = vmatprep.subr.mxu0 0.0
    %483 = vmatpush1.msra.mxu0 0.0
    %484 = vmatprep.subr.mxu0 0.0
    %485 = vmatpush1.msra.mxu0 0.0
    %486 = vmatprep.subr.mxu0 0.0
    %487 = vmatpush1.msra.mxu0 0.0
    %488 = vmatprep.subr.mxu0 0.0
    %489 = vmatpush1.msra.mxu0 0.0
    %490 = vmatprep.subr.mxu0 0.0
    %491 = vmatpush1.msra.mxu0 0.0
    %492 = vmatprep.subr.mxu0 0.0
    %493 = vmatpush1.msra.mxu0 0.0
    %494 = vmatprep.subr.mxu0 0.0
    %495 = vmatpush1.msra.mxu0 0.0
    %496 = vmatprep.subr.mxu0 0.0
    %497 = vmatpush1.msra.mxu0 0.0
    %498 = vmatprep.subr.mxu0 0.0
    %499 = vmatpush1.msra.mxu0 0.0
    %500 = vmatprep.subr.mxu0 0.0
    %501 = vmatpush1.msra.mxu0 0.0
    %502 = vmatprep.subr.mxu0 0.0
    %503 = vmatpush1.msra.mxu0 0.0
    %504 = vmatprep.subr.mxu0 0.0
    %505 = vmatpush1.msra.mxu0 0.0
    %506 = vmatprep.subr.mxu0 0.0
    %507 = vmatpush1.msra.mxu0 0.0
    %508 = vmatprep.subr.mxu0 0.0
    %509 = vmatpush1.msra.mxu0 0.0
    %510 = vmatprep.subr.mxu0 0.0
    %511 = vmatpush1.msra.mxu0 0.0
    %512 = vmatprep.subr.mxu0 0.0
    %513 = vmatpush1.msra.mxu0 0.0
    %514 = vmatprep.subr.mxu0 0.0
    %515 = vmatpush1.msra.mxu0 0.0
    %516 = vmatprep.subr.mxu0 0.0
    %517 = vmatpush1.msra.mxu0 0.0
    %518 = vmatprep.subr.mxu0 0.0
    %519 = vmatpush1.msra.mxu0 0.0
    %520 = vmatprep.subr.mxu0 0.0
    %521 = vmatpush1.msra.mxu0 0.0
    %522 = vmatprep.subr.mxu0 0.0
    %523 = vmatpush1.msra.mxu0 0.0
    %524 = vmatprep.subr.mxu0 0.0
    %525 = vmatpush1.msra.mxu0 0.0
    %526 = vmatprep.subr.mxu0 0.0
    %527 = vmatpush1.msra.mxu0 0.0
    %528 = vmatprep.mubr.f32.mxu0 0.0
    %529 = vmatmul.mubr.f32.gmra.mrb[0].mxu0 %v455
    %v530 = vpop.f32.mrb[0].mxu0
    %v531 = vadd.f32 %v451, %v530
    %v532 = vpop.f32.mrb[0].mxu0
    %533 = vmatprep.mubr.f32.mxu0 0.0
    %534 = vmatmul.mubr.f32.gmra.mrb[0].mxu0 %v458
    %v535 = vpop.f32.mrb[0].mxu0
    %v536 = vadd.f32 %v452, %v535
    %v537 = vpop.f32.mrb[0].mxu0
    %538 = vdwg.mxu0
    %v539 = vld [vmem:[%s11] sm:$0xff]
    %v540 = vld [vmem:[%s11 + $0x8] sm:$0xff]
    %v541 = vld [vmem:[%s11 + $0x10] sm:$0xff]
    %v542 = vld [vmem:[%s11 + $0x18] sm:$0xff]
    %v543 = vld [vmem:[#allocation8] sm:$0x1]
    %v544 = vld [vmem:[%s15] sm:$0xff]
    %v545 = vld [vmem:[%s15 + $0x8] sm:$0xff]
    %v546 = vld [vmem:[%s15 + $0x10] sm:$0xff]
    %v547 = vld [vmem:[%s15 + $0x18] sm:$0xff]
    %v548 = vld [vmem:[#allocation10] sm:$0x1]
    %v549 = vld [vmem:[%s19] sm:$0xff]
    %v550 = vld [vmem:[%s19 + $0x8] sm:$0xff]
    %v551 = vld [vmem:[%s19 + $0x10] sm:$0xff]
    %v552 = vld [vmem:[%s19 + $0x18] sm:$0xff]
    %v553 = vld [vmem:[#allocation11] sm:$0x1]
    %v554 = vld [vmem:[%s23] sm:$0xff]
    %v555 = vld [vmem:[%s23 + $0x8] sm:$0xff]
    %v556 = vld [vmem:[%s23 + $0x10] sm:$0xff]
    %v557 = vld [vmem:[%s23 + $0x18] sm:$0xff]
    %v558 = vld [vmem:[#allocation13] sm:$0x1]
    %v559 = vld [vmem:[%s27] sm:$0xff]
    %v560 = vld [vmem:[%s27 + $0x8] sm:$0xff]
    %v561 = vld [vmem:[%s27 + $0x10] sm:$0xff]
    %v562 = vld [vmem:[%s27 + $0x18] sm:$0xff]
    %v563 = vld [vmem:[#allocation14] sm:$0x1]
    %v564 = vld [vmem:[%s31] sm:$0xff]
    %v565 = vld [vmem:[%s31 + $0x8] sm:$0xff]
    %v566 = vld [vmem:[%s31 + $0x10] sm:$0xff]
    %v567 = vld [vmem:[%s31 + $0x18] sm:$0xff]
    %v568 = vld [vmem:[%s31 + $0x20] sm:$0xff]
    %v569 = vld [vmem:[%s31 + $0x28] sm:$0xff]
    %v570 = vld [vmem:[%s31 + $0x30] sm:$0xff]
    %v571 = vld [vmem:[%s31 + $0x38] sm:$0xff]
    %v572 = vld [vmem:[#allocation16] sm:$0x1]
    %v573 = vld [vmem:[#allocation17] sm:$0x1]
    %v574 = vld [vmem:[#allocation19] sm:$0x1]
    %v575 = vld [vmem:[#allocation20] sm:$0x1]
    %v576 = vld [vmem:[#allocation22] sm:$0x1]
    %v577 = vld [vmem:[#allocation23] sm:$0x1]
    %v578 = vld [vmem:[%s45] sm:$0x1]
    %v579 = vpack.c.bf16 %v536, %v531
    %v580 = vpack.c.bf16 %v540, %v539
    %v581 = vpack.c.bf16 %v542, %v541
    %v583 = vlaneseq
    %v584 = vshrl.u32 %v583, 7
    %v585 = vsub.s32 0, %v584
    %v586 = vrot.slane %v543, %v585
    %vm588 = vcmask 261120
    %v590 = vsel %vm588, %v579, 0
    %592 = vmatprep.subr.bf16.mxu0 0
    %593 = vmatpush1.bf16.msra.mxu0 %v580
    %594 = vmatprep.subr.bf16.mxu0 0
    %595 = vmatpush1.bf16.msra.mxu0 %v581
    %596 = vmatprep.subr.bf16.mxu0 0
    %597 = vmatpush1.bf16.msra.mxu0 0
    %598 = vmatprep.subr.bf16.mxu0 0
    %599 = vmatpush1.bf16.msra.mxu0 0
    %600 = vmatprep.subr.bf16.mxu0 0
    %601 = vmatpush1.bf16.msra.mxu0 0
    %602 = vmatprep.subr.bf16.mxu0 0
    %603 = vmatpush1.bf16.msra.mxu0 0
    %604 = vmatprep.subr.bf16.mxu0 0
    %605 = vmatpush1.bf16.msra.mxu0 0
    %606 = vmatprep.subr.bf16.mxu0 0
    %607 = vmatpush1.bf16.msra.mxu0 0
    %608 = vmatprep.subr.bf16.mxu0 0
    %609 = vmatpush1.bf16.msra.mxu0 0
    %610 = vmatprep.subr.bf16.mxu0 0
    %611 = vmatpush1.bf16.msra.mxu0 0
    %612 = vmatprep.subr.bf16.mxu0 0
    %613 = vmatpush1.bf16.msra.mxu0 0
    %614 = vmatprep.subr.bf16.mxu0 0
    %615 = vmatpush1.bf16.msra.mxu0 0
    %616 = vmatprep.subr.bf16.mxu0 0
    %617 = vmatpush1.bf16.msra.mxu0 0
    %618 = vmatprep.subr.bf16.mxu0 0
    %619 = vmatpush1.bf16.msra.mxu0 0
    %620 = vmatprep.subr.bf16.mxu0 0
    %621 = vmatpush1.bf16.msra.mxu0 0
    %622 = vmatprep.subr.bf16.mxu0 0
    %623 = vmatpush1.bf16.msra.mxu0 0
    %624 = vmatprep.mubr.bf16.mxu0 0
    %625 = vmatmul.mubr.bf16.gmra.mrb[0].mxu0 %v590
    %v626 = vpop.f32.mrb[0].mxu0
    %v627 = vadd.f32 %v586, %v626
    %v628 = vpop.f32.mrb[0].mxu0
    %v629 = vpop.f32.mrb[0].mxu0
    %v630 = vadd.f32 %v586, %v629
    %v631 = vpop.f32.mrb[0].mxu0
    %632 = vdwg.mxu0
    %v633 = vpack.c.bf16 %v630, %v627
    %635 = vrot.lane.b32.xlu0 %v633, 96
    %v636 = vpop.permute.xlu0 %635
    %vm637 = vcmask 64512
    %v639 = vsel %vm637, %v633, 0
    %v642 = vsel %vm637, %v636, 0
    %644 = vmatprep.subr.bf16.mxu0 0
    %645 = vmatpush1.bf16.xpose.msra.mxu0 %v642
    %646 = vmatprep.subr.bf16.mxu0 0
    %647 = vmatpush1.bf16.xpose.msra.mxu0 0
    %648 = vmatprep.subr.bf16.mxu0 0
    %649 = vmatpush1.bf16.xpose.msra.mxu0 0
    %650 = vmatprep.subr.bf16.mxu0 0
    %651 = vmatpush1.bf16.xpose.msra.mxu0 0
    %652 = vmatprep.subr.bf16.mxu0 0
    %653 = vmatpush1.bf16.xpose.msra.mxu0 0
    %654 = vmatprep.subr.bf16.mxu0 0
    %655 = vmatpush1.bf16.xpose.msra.mxu0 0
    %656 = vmatprep.subr.bf16.mxu0 0
    %657 = vmatpush1.bf16.xpose.msra.mxu0 0
    %658 = vmatprep.subr.bf16.mxu0 0
    %659 = vmatpush1.bf16.xpose.msra.mxu0 0
    %660 = vmatprep.subr.bf16.mxu0 0
    %661 = vmatpush1.bf16.xpose.msra.mxu0 0
    %662 = vmatprep.subr.bf16.mxu0 0
    %663 = vmatpush1.bf16.xpose.msra.mxu0 0
    %664 = vmatprep.subr.bf16.mxu0 0
    %665 = vmatpush1.bf16.xpose.msra.mxu0 0
    %666 = vmatprep.subr.bf16.mxu0 0
    %667 = vmatpush1.bf16.xpose.msra.mxu0 0
    %668 = vmatprep.subr.bf16.mxu0 0
    %669 = vmatpush1.bf16.xpose.msra.mxu0 0
    %670 = vmatprep.subr.bf16.mxu0 0
    %671 = vmatpush1.bf16.xpose.msra.mxu0 0
    %672 = vmatprep.subr.bf16.mxu0 0
    %673 = vmatpush1.bf16.xpose.msra.mxu0 0
    %674 = vmatprep.subr.bf16.mxu0 0
    %675 = vmatpush1.bf16.xpose.msra.mxu0 0
    %676 = vmatprep.mubr.bf16.mxu0 0
    %677 = vmatmul.mubr.bf16.gmra.mrb[0].mxu0 %v639
    %v678 = vpop.f32.mrb[0].mxu0
    %v679 = vadd.f32 0.0, %v678
    %v680 = vpop.f32.mrb[0].mxu0
    %v681 = vpop.f32.mrb[0].mxu0
    %v682 = vadd.f32 0.0, %v681
    %v683 = vpop.f32.mrb[0].mxu0
    %684 = vdwg.mxu0
    %v685 = vmul.f32 %v679, 0.35355338
    %v686 = vmul.f32 %v682, 0.35355338
    %v687 = vadd.f32 %v685, %v430
    %v688 = vadd.f32 %v686, %v431
    %vm689 = vcmask 130048
    %v690 = vsel %vm689, %v687, -inf
    %691 = vmax.xlane.f32.xlu0 %v690
    %v692 = vpop.xlane.xlu0 %691
    %v693 = vsel %vm689, %v688, -inf
    %694 = vmax.xlane.f32.xlu0 %v693
    %v695 = vpop.xlane.xlu0 %694
    %v696 = vsub.f32 %v687, %v692
    %v697 = vsub.f32 %v688, %v695
    %v698 = vmul.f32 %v696, 1.442695
    %v699 = vpow.pop %v698
    %v700 = vmul.f32 %v697, 1.442695
    %v701 = vpow.pop %v700
    %v702 = vsel %vm689, %v699, 0.0
    %703 = vadd.xlane.f32.xlu0 %v702
    %v704 = vpop.xlane.xlu0 %703
    %v705 = vsel %vm689, %v701, 0.0
    %706 = vadd.xlane.f32.xlu0 %v705
    %v707 = vpop.xlane.xlu0 %706
    %v708 = vrcp.pop %v704
    %v709 = vmul.f32 %v699, %v708
    %v710 = vrcp.pop %v707
    %v711 = vmul.f32 %v701, %v710
    %v712 = vpack.c.bf16 %v711, %v709
    %713 = vrot.lane.b32.xlu0 %v633, 64
    %v714 = vpop.permute.xlu0 %713
    %v717 = vsel %vm689, %v712, 0
    %719 = vmatprep.subr.bf16.mxu0 0
    %720 = vmatpush1.bf16.msra.mxu0 %v714
    %721 = vmatprep.subr.bf16.mxu0 0
    %722 = vmatpush1.bf16.msra.mxu0 0
    %723 = vmatprep.subr.bf16.mxu0 0
    %724 = vmatpush1.bf16.msra.mxu0 0
    %725 = vmatprep.subr.bf16.mxu0 0
    %726 = vmatpush1.bf16.msra.mxu0 0
    %727 = vmatprep.subr.bf16.mxu0 0
    %728 = vmatpush1.bf16.msra.mxu0 0
    %729 = vmatprep.subr.bf16.mxu0 0
    %730 = vmatpush1.bf16.msra.mxu0 0
    %731 = vmatprep.subr.bf16.mxu0 0
    %732 = vmatpush1.bf16.msra.mxu0 0
    %733 = vmatprep.subr.bf16.mxu0 0
    %734 = vmatpush1.bf16.msra.mxu0 0
    %735 = vmatprep.subr.bf16.mxu0 0
    %736 = vmatpush1.bf16.msra.mxu0 0
    %737 = vmatprep.subr.bf16.mxu0 0
    %738 = vmatpush1.bf16.msra.mxu0 0
    %739 = vmatprep.subr.bf16.mxu0 0
    %740 = vmatpush1.bf16.msra.mxu0 0
    %741 = vmatprep.subr.bf16.mxu0 0
    %742 = vmatpush1.bf16.msra.mxu0 0
    %743 = vmatprep.subr.bf16.mxu0 0
    %744 = vmatpush1.bf16.msra.mxu0 0
    %745 = vmatprep.subr.bf16.mxu0 0
    %746 = vmatpush1.bf16.msra.mxu0 0
    %747 = vmatprep.subr.bf16.mxu0 0
    %748 = vmatpush1.bf16.msra.mxu0 0
    %749 = vmatprep.subr.bf16.mxu0 0
    %750 = vmatpush1.bf16.msra.mxu0 0
    %751 = vmatprep.mubr.bf16.mxu0 0
    %752 = vmatmul.mubr.bf16.gmra.mrb[0].mxu0 %v717
    %v753 = vpop.f32.mrb[0].mxu0
    %v754 = vadd.f32 0.0, %v753
    %v755 = vpop.f32.mrb[0].mxu0
    %v756 = vpop.f32.mrb[0].mxu0
    %v757 = vadd.f32 0.0, %v756
    %v758 = vpop.f32.mrb[0].mxu0
    %759 = vdwg.mxu0
    %760 = vrot.lane.b32.xlu0 %v633, 120
    %v761 = vpop.permute.xlu0 %760
    %762 = vrot.lane.b32.xlu0 %v633, 88
    %v763 = vpop.permute.xlu0 %762
    %v765 = vsel %vm637, %v761, 0
    %v768 = vsel %vm637, %v763, 0
    %770 = vmatprep.subr.bf16.mxu0 0
    %771 = vmatpush1.bf16.xpose.msra.mxu0 %v768
    %772 = vmatprep.subr.bf16.mxu0 0
    %773 = vmatpush1.bf16.xpose.msra.mxu0 0
    %774 = vmatprep.subr.bf16.mxu0 0
    %775 = vmatpush1.bf16.xpose.msra.mxu0 0
    %776 = vmatprep.subr.bf16.mxu0 0
    %777 = vmatpush1.bf16.xpose.msra.mxu0 0
    %778 = vmatprep.subr.bf16.mxu0 0
    %779 = vmatpush1.bf16.xpose.msra.mxu0 0
    %780 = vmatprep.subr.bf16.mxu0 0
    %781 = vmatpush1.bf16.xpose.msra.mxu0 0
    %782 = vmatprep.subr.bf16.mxu0 0
    %783 = vmatpush1.bf16.xpose.msra.mxu0 0
    %784 = vmatprep.subr.bf16.mxu0 0
    %785 = vmatpush1.bf16.xpose.msra.mxu0 0
    %786 = vmatprep.subr.bf16.mxu0 0
    %787 = vmatpush1.bf16.xpose.msra.mxu0 0
    %788 = vmatprep.subr.bf16.mxu0 0
    %789 = vmatpush1.bf16.xpose.msra.mxu0 0
    %790 = vmatprep.subr.bf16.mxu0 0
    %791 = vmatpush1.bf16.xpose.msra.mxu0 0
    %792 = vmatprep.subr.bf16.mxu0 0
    %793 = vmatpush1.bf16.xpose.msra.mxu0 0
    %794 = vmatprep.subr.bf16.mxu0 0
    %795 = vmatpush1.bf16.xpose.msra.mxu0 0
    %796 = vmatprep.subr.bf16.mxu0 0
    %797 = vmatpush1.bf16.xpose.msra.mxu0 0
    %798 = vmatprep.subr.bf16.mxu0 0
    %799 = vmatpush1.bf16.xpose.msra.mxu0 0
    %800 = vmatprep.subr.bf16.mxu0 0
    %801 = vmatpush1.bf16.xpose.msra.mxu0 0
    %802 = vmatprep.mubr.bf16.mxu0 0
    %803 = vmatmul.mubr.bf16.gmra.mrb[0].mxu0 %v765
    %v804 = vpop.f32.mrb[0].mxu0
    %v805 = vadd.f32 0.0, %v804
    %v806 = vpop.f32.mrb[0].mxu0
    %v807 = vpop.f32.mrb[0].mxu0
    %v808 = vadd.f32 0.0, %v807
    %v809 = vpop.f32.mrb[0].mxu0
    %810 = vdwg.mxu0
    %v811 = vmul.f32 %v805, 0.35355338
    %v812 = vmul.f32 %v808, 0.35355338
    %v813 = vadd.f32 %v811, %v430
    %v814 = vadd.f32 %v812, %v431
    %v815 = vsel %vm689, %v813, -inf
    %816 = vmax.xlane.f32.xlu0 %v815
    %v817 = vpop.xlane.xlu0 %816
    %v818 = vsel %vm689, %v814, -inf
    %819 = vmax.xlane.f32.xlu0 %v818
    %v820 = vpop.xlane.xlu0 %819
    %v821 = vsub.f32 %v813, %v817
    %v822 = vsub.f32 %v814, %v820
    %v823 = vmul.f32 %v821, 1.442695
    %v824 = vpow.pop %v823
    %v825 = vmul.f32 %v822, 1.442695
    %v826 = vpow.pop %v825
    %v827 = vsel %vm689, %v824, 0.0
    %828 = vadd.xlane.f32.xlu0 %v827
    %v829 = vpop.xlane.xlu0 %828
    %v830 = vsel %vm689, %v826, 0.0
    %831 = vadd.xlane.f32.xlu0 %v830
    %v832 = vpop.xlane.xlu0 %831
    %v833 = vrcp.pop %v829
    %v834 = vmul.f32 %v824, %v833
    %v835 = vrcp.pop %v832
    %v836 = vmul.f32 %v826, %v835
    %v837 = vpack.c.bf16 %v836, %v834
    %838 = vrot.lane.b32.xlu0 %v633, 56
    %v839 = vpop.permute.xlu0 %838
    %v842 = vsel %vm689, %v837, 0
    %844 = vmatprep.subr.bf16.mxu0 0
    %845 = vmatpush1.bf16.msra.mxu0 %v839
    %846 = vmatprep.subr.bf16.mxu0 0
    %847 = vmatpush1.bf16.msra.mxu0 0
    %848 = vmatprep.subr.bf16.mxu0 0
    %849 = vmatpush1.bf16.msra.mxu0 0
    %850 = vmatprep.subr.bf16.mxu0 0
    %851 = vmatpush1.bf16.msra.mxu0 0
    %852 = vmatprep.subr.bf16.mxu0 0
    %853 = vmatpush1.bf16.msra.mxu0 0
    %854 = vmatprep.subr.bf16.mxu0 0
    %855 = vmatpush1.bf16.msra.mxu0 0
    %856 = vmatprep.subr.bf16.mxu0 0
    %857 = vmatpush1.bf16.msra.mxu0 0
    %858 = vmatprep.subr.bf16.mxu0 0
    %859 = vmatpush1.bf16.msra.mxu0 0
    %860 = vmatprep.subr.bf16.mxu0 0
    %861 = vmatpush1.bf16.msra.mxu0 0
    %862 = vmatprep.subr.bf16.mxu0 0
    %863 = vmatpush1.bf16.msra.mxu0 0
    %864 = vmatprep.subr.bf16.mxu0 0
    %865 = vmatpush1.bf16.msra.mxu0 0
    %866 = vmatprep.subr.bf16.mxu0 0
    %867 = vmatpush1.bf16.msra.mxu0 0
    %868 = vmatprep.subr.bf16.mxu0 0
    %869 = vmatpush1.bf16.msra.mxu0 0
    %870 = vmatprep.subr.bf16.mxu0 0
    %871 = vmatpush1.bf16.msra.mxu0 0
    %872 = vmatprep.subr.bf16.mxu0 0
    %873 = vmatpush1.bf16.msra.mxu0 0
    %874 = vmatprep.subr.bf16.mxu0 0
    %875 = vmatpush1.bf16.msra.mxu0 0
    %876 = vmatprep.mubr.bf16.mxu0 0
    %877 = vmatmul.mubr.bf16.gmra.mrb[0].mxu0 %v842
    %v878 = vpop.f32.mrb[0].mxu0
    %v879 = vadd.f32 0.0, %v878
    %v880 = vpop.f32.mrb[0].mxu0
    %v881 = vpop.f32.mrb[0].mxu0
    %v882 = vadd.f32 0.0, %v881
    %v883 = vpop.f32.mrb[0].mxu0
    %884 = vdwg.mxu0
    %885 = vrot.lane.b32.xlu0 %v633, 112
    %v886 = vpop.permute.xlu0 %885
    %887 = vrot.lane.b32.xlu0 %v633, 80
    %v888 = vpop.permute.xlu0 %887
    %v890 = vsel %vm637, %v886, 0
    %v893 = vsel %vm637, %v888, 0
    %895 = vmatprep.subr.bf16.mxu0 0
    %896 = vmatpush1.bf16.xpose.msra.mxu0 %v893
    %897 = vmatprep.subr.bf16.mxu0 0
    %898 = vmatpush1.bf16.xpose.msra.mxu0 0
    %899 = vmatprep.subr.bf16.mxu0 0
    %900 = vmatpush1.bf16.xpose.msra.mxu0 0
    %901 = vmatprep.subr.bf16.mxu0 0
    %902 = vmatpush1.bf16.xpose.msra.mxu0 0
    %903 = vmatprep.subr.bf16.mxu0 0
    %904 = vmatpush1.bf16.xpose.msra.mxu0 0
    %905 = vmatprep.subr.bf16.mxu0 0
    %906 = vmatpush1.bf16.xpose.msra.mxu0 0
    %907 = vmatprep.subr.bf16.mxu0 0
    %908 = vmatpush1.bf16.xpose.msra.mxu0 0
    %909 = vmatprep.subr.bf16.mxu0 0
    %910 = vmatpush1.bf16.xpose.msra.mxu0 0
    %911 = vmatprep.subr.bf16.mxu0 0
    %912 = vmatpush1.bf16.xpose.msra.mxu0 0
    %913 = vmatprep.subr.bf16.mxu0 0
    %914 = vmatpush1.bf16.xpose.msra.mxu0 0
    %915 = vmatprep.subr.bf16.mxu0 0
    %916 = vmatpush1.bf16.xpose.msra.mxu0 0
    %917 = vmatprep.subr.bf16.mxu0 0
    %918 = vmatpush1.bf16.xpose.msra.mxu0 0
    %919 = vmatprep.subr.bf16.mxu0 0
    %920 = vmatpush1.bf16.xpose.msra.mxu0 0
    %921 = vmatprep.subr.bf16.mxu0 0
    %922 = vmatpush1.bf16.xpose.msra.mxu0 0
    %923 = vmatprep.subr.bf16.mxu0 0
    %924 = vmatpush1.bf16.xpose.msra.mxu0 0
    %925 = vmatprep.subr.bf16.mxu0 0
    %926 = vmatpush1.bf16.xpose.msra.mxu0 0
    %927 = vmatprep.mubr.bf16.mxu0 0
    %928 = vmatmul.mubr.bf16.gmra.mrb[0].mxu0 %v890
    %v929 = vpop.f32.mrb[0].mxu0
    %v930 = vadd.f32 0.0, %v929
    %v931 = vpop.f32.mrb[0].mxu0
    %v932 = vpop.f32.mrb[0].mxu0
    %v933 = vadd.f32 0.0, %v932
    %v934 = vpop.f32.mrb[0].mxu0
    %935 = vdwg.mxu0
    %v936 = vmul.f32 %v930, 0.35355338
    %v937 = vmul.f32 %v933, 0.35355338
    %v938 = vadd.f32 %v936, %v430
    %v939 = vadd.f32 %v937, %v431
    %v940 = vsel %vm689, %v938, -inf
    %941 = vmax.xlane.f32.xlu0 %v940
    %v942 = vpop.xlane.xlu0 %941
    %v943 = vsel %vm689, %v939, -inf
    %944 = vmax.xlane.f32.xlu0 %v943
    %v945 = vpop.xlane.xlu0 %944
    %v946 = vsub.f32 %v938, %v942
    %v947 = vsub.f32 %v939, %v945
    %v948 = vmul.f32 %v946, 1.442695
    %v949 = vpow.pop %v948
    %v950 = vmul.f32 %v947, 1.442695
    %v951 = vpow.pop %v950
    %v952 = vsel %vm689, %v949, 0.0
    %953 = vadd.xlane.f32.xlu0 %v952
    %v954 = vpop.xlane.xlu0 %953
    %v955 = vsel %vm689, %v951, 0.0
    %956 = vadd.xlane.f32.xlu0 %v955
    %v957 = vpop.xlane.xlu0 %956
    %v958 = vrcp.pop %v954
    %v959 = vmul.f32 %v949, %v958
    %v960 = vrcp.pop %v957
    %v961 = vmul.f32 %v951, %v960
    %v962 = vpack.c.bf16 %v961, %v959
    %963 = vrot.lane.b32.xlu0 %v633, 48
    %v964 = vpop.permute.xlu0 %963
    %v967 = vsel %vm689, %v962, 0
    %969 = vmatprep.subr.bf16.mxu0 0
    %970 = vmatpush1.bf16.msra.mxu0 %v964
    %971 = vmatprep.subr.bf16.mxu0 0
    %972 = vmatpush1.bf16.msra.mxu0 0
    %973 = vmatprep.subr.bf16.mxu0 0
    %974 = vmatpush1.bf16.msra.mxu0 0
    %975 = vmatprep.subr.bf16.mxu0 0
    %976 = vmatpush1.bf16.msra.mxu0 0
    %977 = vmatprep.subr.bf16.mxu0 0
    %978 = vmatpush1.bf16.msra.mxu0 0
    %979 = vmatprep.subr.bf16.mxu0 0
    %980 = vmatpush1.bf16.msra.mxu0 0
    %981 = vmatprep.subr.bf16.mxu0 0
    %982 = vmatpush1.bf16.msra.mxu0 0
    %983 = vmatprep.subr.bf16.mxu0 0
    %984 = vmatpush1.bf16.msra.mxu0 0
    %985 = vmatprep.subr.bf16.mxu0 0
    %986 = vmatpush1.bf16.msra.mxu0 0
    %987 = vmatprep.subr.bf16.mxu0 0
    %988 = vmatpush1.bf16.msra.mxu0 0
    %989 = vmatprep.subr.bf16.mxu0 0
    %990 = vmatpush1.bf16.msra.mxu0 0
    %991 = vmatprep.subr.bf16.mxu0 0
    %992 = vmatpush1.bf16.msra.mxu0 0
    %993 = vmatprep.subr.bf16.mxu0 0
    %994 = vmatpush1.bf16.msra.mxu0 0
    %995 = vmatprep.subr.bf16.mxu0 0
    %996 = vmatpush1.bf16.msra.mxu0 0
    %997 = vmatprep.subr.bf16.mxu0 0
    %998 = vmatpush1.bf16.msra.mxu0 0
    %999 = vmatprep.subr.bf16.mxu0 0
    %1000 = vmatpush1.bf16.msra.mxu0 0
    %1001 = vmatprep.mubr.bf16.mxu0 0
    %1002 = vmatmul.mubr.bf16.gmra.mrb[0].mxu0 %v967
    %v1003 = vpop.f32.mrb[0].mxu0
    %v1004 = vadd.f32 0.0, %v1003
    %v1005 = vpop.f32.mrb[0].mxu0
    %v1006 = vpop.f32.mrb[0].mxu0
    %v1007 = vadd.f32 0.0, %v1006
    %v1008 = vpop.f32.mrb[0].mxu0
    %1009 = vdwg.mxu0
    %1010 = vrot.lane.b32.xlu0 %v633, 104
    %v1011 = vpop.permute.xlu0 %1010
    %1012 = vrot.lane.b32.xlu0 %v633, 72
    %v1013 = vpop.permute.xlu0 %1012
    %v1015 = vsel %vm637, %v1011, 0
    %v1018 = vsel %vm637, %v1013, 0
    %1020 = vmatprep.subr.bf16.mxu0 0
    %1021 = vmatpush1.bf16.xpose.msra.mxu0 %v1018
    %1022 = vmatprep.subr.bf16.mxu0 0
    %1023 = vmatpush1.bf16.xpose.msra.mxu0 0
    %1024 = vmatprep.subr.bf16.mxu0 0
    %1025 = vmatpush1.bf16.xpose.msra.mxu0 0
    %1026 = vmatprep.subr.bf16.mxu0 0
    %1027 = vmatpush1.bf16.xpose.msra.mxu0 0
    %1028 = vmatprep.subr.bf16.mxu0 0
    %1029 = vmatpush1.bf16.xpose.msra.mxu0 0
    %1030 = vmatprep.subr.bf16.mxu0 0
    %1031 = vmatpush1.bf16.xpose.msra.mxu0 0
    %1032 = vmatprep.subr.bf16.mxu0 0
    %1033 = vmatpush1.bf16.xpose.msra.mxu0 0
    %1034 = vmatprep.subr.bf16.mxu0 0
    %1035 = vmatpush1.bf16.xpose.msra.mxu0 0
    %1036 = vmatprep.subr.bf16.mxu0 0
    %1037 = vmatpush1.bf16.xpose.msra.mxu0 0
    %1038 = vmatprep.subr.bf16.mxu0 0
    %1039 = vmatpush1.bf16.xpose.msra.mxu0 0
    %1040 = vmatprep.subr.bf16.mxu0 0
    %1041 = vmatpush1.bf16.xpose.msra.mxu0 0
    %1042 = vmatprep.subr.bf16.mxu0 0
    %1043 = vmatpush1.bf16.xpose.msra.mxu0 0
    %1044 = vmatprep.subr.bf16.mxu0 0
    %1045 = vmatpush1.bf16.xpose.msra.mxu0 0
    %1046 = vmatprep.subr.bf16.mxu0 0
    %1047 = vmatpush1.bf16.xpose.msra.mxu0 0
    %1048 = vmatprep.subr.bf16.mxu0 0
    %1049 = vmatpush1.bf16.xpose.msra.mxu0 0
    %1050 = vmatprep.subr.bf16.mxu0 0
    %1051 = vmatpush1.bf16.xpose.msra.mxu0 0
    %1052 = vmatprep.mubr.bf16.mxu0 0
    %1053 = vmatmul.mubr.bf16.gmra.mrb[0].mxu0 %v1015
    %v1054 = vpop.f32.mrb[0].mxu0
    %v1055 = vadd.f32 0.0, %v1054
    %v1056 = vpop.f32.mrb[0].mxu0
    %v1057 = vpop.f32.mrb[0].mxu0
    %v1058 = vadd.f32 0.0, %v1057
    %v1059 = vpop.f32.mrb[0].mxu0
    %1060 = vdwg.mxu0
    %v1061 = vmul.f32 %v1055, 0.35355338
    %v1062 = vmul.f32 %v1058, 0.35355338
    %v1063 = vadd.f32 %v1061, %v430
    %v1064 = vadd.f32 %v1062, %v431
    %v1065 = vsel %vm689, %v1063, -inf
    %1066 = vmax.xlane.f32.xlu0 %v1065
    %v1067 = vpop.xlane.xlu0 %1066
    %v1068 = vsel %vm689, %v1064, -inf
    %1069 = vmax.xlane.f32.xlu0 %v1068
    %v1070 = vpop.xlane.xlu0 %1069
    %v1071 = vsub.f32 %v1063, %v1067
    %v1072 = vsub.f32 %v1064, %v1070
    %v1073 = vmul.f32 %v1071, 1.442695
    %v1074 = vpow.pop %v1073
    %v1075 = vmul.f32 %v1072, 1.442695
    %v1076 = vpow.pop %v1075
    %v1077 = vsel %vm689, %v1074, 0.0
    %1078 = vadd.xlane.f32.xlu0 %v1077
    %v1079 = vpop.xlane.xlu0 %1078
    %v1080 = vsel %vm689, %v1076, 0.0
    %1081 = vadd.xlane.f32.xlu0 %v1080
    %v1082 = vpop.xlane.xlu0 %1081
    %v1083 = vrcp.pop %v1079
    %v1084 = vmul.f32 %v1074, %v1083
    %v1085 = vrcp.pop %v1082
    %v1086 = vmul.f32 %v1076, %v1085
    %v1087 = vpack.c.bf16 %v1086, %v1084
    %1088 = vrot.lane.b32.xlu0 %v633, 40
    %v1089 = vpop.permute.xlu0 %1088
    %v1092 = vsel %vm689, %v1087, 0
    %1094 = vmatprep.subr.bf16.mxu0 0
    %1095 = vmatpush1.bf16.msra.mxu0 %v1089
    %1096 = vmatprep.subr.bf16.mxu0 0
    %1097 = vmatpush1.bf16.msra.mxu0 0
    %1098 = vmatprep.subr.bf16.mxu0 0
    %1099 = vmatpush1.bf16.msra.mxu0 0
    %1100 = vmatprep.subr.bf16.mxu0 0
    %1101 = vmatpush1.bf16.msra.mxu0 0
    %1102 = vmatprep.subr.bf16.mxu0 0
    %1103 = vmatpush1.bf16.msra.mxu0 0
    %1104 = vmatprep.subr.bf16.mxu0 0
    %1105 = vmatpush1.bf16.msra.mxu0 0
    %1106 = vmatprep.subr.bf16.mxu0 0
    %1107 = vmatpush1.bf16.msra.mxu0 0
    %1108 = vmatprep.subr.bf16.mxu0 0
    %1109 = vmatpush1.bf16.msra.mxu0 0
    %1110 = vmatprep.subr.bf16.mxu0 0
    %1111 = vmatpush1.bf16.msra.mxu0 0
    %1112 = vmatprep.subr.bf16.mxu0 0
    %1113 = vmatpush1.bf16.msra.mxu0 0
    %1114 = vmatprep.subr.bf16.mxu0 0
    %1115 = vmatpush1.bf16.msra.mxu0 0
    %1116 = vmatprep.subr.bf16.mxu0 0
    %1117 = vmatpush1.bf16.msra.mxu0 0
    %1118 = vmatprep.subr.bf16.mxu0 0
    %1119 = vmatpush1.bf16.msra.mxu0 0
    %1120 = vmatprep.subr.bf16.mxu0 0
    %1121 = vmatpush1.bf16.msra.mxu0 0
    %1122 = vmatprep.subr.bf16.mxu0 0
    %1123 = vmatpush1.bf16.msra.mxu0 0
    %1124 = vmatprep.subr.bf16.mxu0 0
    %1125 = vmatpush1.bf16.msra.mxu0 0
    %1126 = vmatprep.mubr.bf16.mxu0 0
    %1127 = vmatmul.mubr.bf16.gmra.mrb[0].mxu0 %v1092
    %v1128 = vpop.f32.mrb[0].mxu0
    %v1129 = vadd.f32 0.0, %v1128
    %v1130 = vpop.f32.mrb[0].mxu0
    %v1131 = vpop.f32.mrb[0].mxu0
    %v1132 = vadd.f32 0.0, %v1131
    %v1133 = vpop.f32.mrb[0].mxu0
    %1134 = vdwg.mxu0
    %1137 = vrot.lane.b32.xlu0 %v879, 8
    %v1138 = vpop.permute.xlu0 %1137
    %1139 = vrot.lane.b32.xlu0 %v882, 8
    %v1140 = vpop.permute.xlu0 %1139
    %1145 = vrot.lane.b32.xlu0 %v1004, 16
    %v1146 = vpop.permute.xlu0 %1145
    %1147 = vrot.lane.b32.xlu0 %v1007, 16
    %v1148 = vpop.permute.xlu0 %1147
    %1153 = vrot.lane.b32.xlu0 %v1129, 24
    %v1154 = vpop.permute.xlu0 %1153
    %1155 = vrot.lane.b32.xlu0 %v1132, 24
    %v1156 = vpop.permute.xlu0 %1155
    %v1159 = vsel %vm637, %v754, %v1138
    %v1160 = vsel %vm637, %v757, %v1140
    %v1161 = vsel %vm689, %v1159, %v1146
    %v1162 = vsel %vm689, %v1160, %v1148
    %vm1163 = vcmask 195584
    %v1164 = vsel %vm1163, %v1161, %v1154
    %v1165 = vsel %vm1163, %v1162, %v1156
    %v1166 = vpack.c.bf16 %v1165, %v1164
    %v1167 = vpack.c.bf16 %v545, %v544
    %v1168 = vpack.c.bf16 %v547, %v546
    %v1170 = vlaneseq
    %v1171 = vshrl.u32 %v1170, 7
    %v1172 = vsub.s32 0, %v1171
    %v1173 = vrot.slane %v548, %v1172
    %v1176 = vsel %vm588, %v1166, 0
    %1178 = vmatprep.subr.bf16.mxu0 0
    %1179 = vmatpush1.bf16.msra.mxu0 %v1167
    %1180 = vmatprep.subr.bf16.mxu0 0
    %1181 = vmatpush1.bf16.msra.mxu0 %v1168
    %1182 = vmatprep.subr.bf16.mxu0 0
    %1183 = vmatpush1.bf16.msra.mxu0 0
    %1184 = vmatprep.subr.bf16.mxu0 0
    %1185 = vmatpush1.bf16.msra.mxu0 0
    %1186 = vmatprep.subr.bf16.mxu0 0
    %1187 = vmatpush1.bf16.msra.mxu0 0
    %1188 = vmatprep.subr.bf16.mxu0 0
    %1189 = vmatpush1.bf16.msra.mxu0 0
    %1190 = vmatprep.subr.bf16.mxu0 0
    %1191 = vmatpush1.bf16.msra.mxu0 0
    %1192 = vmatprep.subr.bf16.mxu0 0
    %1193 = vmatpush1.bf16.msra.mxu0 0
    %1194 = vmatprep.subr.bf16.mxu0 0
    %1195 = vmatpush1.bf16.msra.mxu0 0
    %1196 = vmatprep.subr.bf16.mxu0 0
    %1197 = vmatpush1.bf16.msra.mxu0 0
    %1198 = vmatprep.subr.bf16.mxu0 0
    %1199 = vmatpush1.bf16.msra.mxu0 0
    %1200 = vmatprep.subr.bf16.mxu0 0
    %1201 = vmatpush1.bf16.msra.mxu0 0
    %1202 = vmatprep.subr.bf16.mxu0 0
    %1203 = vmatpush1.bf16.msra.mxu0 0
    %1204 = vmatprep.subr.bf16.mxu0 0
    %1205 = vmatpush1.bf16.msra.mxu0 0
    %1206 = vmatprep.subr.bf16.mxu0 0
    %1207 = vmatpush1.bf16.msra.mxu0 0
    %1208 = vmatprep.subr.bf16.mxu0 0
    %1209 = vmatpush1.bf16.msra.mxu0 0
    %1210 = vmatprep.mubr.bf16.mxu0 0
    %1211 = vmatmul.mubr.bf16.gmra.mrb[0].mxu0 %v1176
    %v1212 = vpop.f32.mrb[0].mxu0
    %v1213 = vadd.f32 %v1173, %v1212
    %v1214 = vpop.f32.mrb[0].mxu0
    %v1215 = vpop.f32.mrb[0].mxu0
    %v1216 = vadd.f32 %v1173, %v1215
    %v1217 = vpop.f32.mrb[0].mxu0
    %1218 = vdwg.mxu0
    %v1219 = vadd.f32 %v531, %v1213
    %v1220 = vadd.f32 %v536, %v1216
    %v1221 = vsel %vm588, %v1219, 0.0
    %1222 = vadd.xlane.f32.xlu0 %v1221
    %v1223 = vpop.xlane.xlu0 %1222
    %v1224 = vsel %vm588, %v1220, 0.0
    %1225 = vadd.xlane.f32.xlu0 %v1224
    %v1226 = vpop.xlane.xlu0 %1225
    %v1227 = vrcp.pop 32.0
    %v1228 = vmul.f32 %v1223, %v1227
    %v1229 = vmul.f32 %v1226, %v1227
    %v1230 = vsub.f32 %v1219, %v1228
    %v1231 = vsub.f32 %v1220, %v1229
    %v1232 = vmul.f32 %v1230, %v1230
    %v1233 = vmul.f32 %v1231, %v1231
    %v1234 = vsel %vm588, %v1232, 0.0
    %1235 = vadd.xlane.f32.xlu0 %v1234
    %v1236 = vpop.xlane.xlu0 %1235
    %v1237 = vsel %vm588, %v1233, 0.0
    %1238 = vadd.xlane.f32.xlu0 %v1237
    %v1239 = vpop.xlane.xlu0 %1238
    %v1240 = vmul.f32 %v1236, %v1227
    %v1241 = vmul.f32 %v1239, %v1227
    %v1242 = vadd.f32 %v1240, 1e-05
    %v1243 = vadd.f32 %v1241, 1e-05
    %v1244 = vrsqrt.pop %v1242
    %v1245 = vrsqrt.pop %v1243
    %v1246 = vmul.f32 %v1230, %v1244
    %v1247 = vmul.f32 %v1231, %v1245
    %v1249 = vlaneseq
    %v1250 = vshrl.u32 %v1249, 7
    %v1251 = vsub.s32 0, %v1250
    %v1252 = vrot.slane %v573, %v1251
    %v1254 = vmul.f32 %v1246, %v1252
    %v1255 = vmul.f32 %v1247, %v1252
    %v1257 = vlaneseq
    %v1258 = vshrl.u32 %v1257, 7
    %v1259 = vsub.s32 0, %v1258
    %v1260 = vrot.slane %v574, %v1259
    %v1262 = vadd.f32 %v1254, %v1260
    %v1263 = vadd.f32 %v1255, %v1260
    %v1264 = vpack.c.bf16 %v1263, %v1262
    %v1265 = vpack.c.bf16 %v550, %v549
    %v1266 = vpack.c.bf16 %v552, %v551
    %v1268 = vlaneseq
    %v1269 = vshrl.u32 %v1268, 7
    %v1270 = vsub.s32 0, %v1269
    %v1271 = vrot.slane %v553, %v1270
    %v1274 = vsel %vm588, %v1264, 0
    %1276 = vmatprep.subr.bf16.mxu0 0
    %1277 = vmatpush1.bf16.msra.mxu0 %v1265
    %1278 = vmatprep.subr.bf16.mxu0 0
    %1279 = vmatpush1.bf16.msra.mxu0 %v1266
    %1280 = vmatprep.subr.bf16.mxu0 0
    %1281 = vmatpush1.bf16.msra.mxu0 0
    %1282 = vmatprep.subr.bf16.mxu0 0
    %1283 = vmatpush1.bf16.msra.mxu0 0
    %1284 = vmatprep.subr.bf16.mxu0 0
    %1285 = vmatpush1.bf16.msra.mxu0 0
    %1286 = vmatprep.subr.bf16.mxu0 0
    %1287 = vmatpush1.bf16.msra.mxu0 0
    %1288 = vmatprep.subr.bf16.mxu0 0
    %1289 = vmatpush1.bf16.msra.mxu0 0
    %1290 = vmatprep.subr.bf16.mxu0 0
    %1291 = vmatpush1.bf16.msra.mxu0 0
    %1292 = vmatprep.subr.bf16.mxu0 0
    %1293 = vmatpush1.bf16.msra.mxu0 0
    %1294 = vmatprep.subr.bf16.mxu0 0
    %1295 = vmatpush1.bf16.msra.mxu0 0
    %1296 = vmatprep.subr.bf16.mxu0 0
    %1297 = vmatpush1.bf16.msra.mxu0 0
    %1298 = vmatprep.subr.bf16.mxu0 0
    %1299 = vmatpush1.bf16.msra.mxu0 0
    %1300 = vmatprep.subr.bf16.mxu0 0
    %1301 = vmatpush1.bf16.msra.mxu0 0
    %1302 = vmatprep.subr.bf16.mxu0 0
    %1303 = vmatpush1.bf16.msra.mxu0 0
    %1304 = vmatprep.subr.bf16.mxu0 0
    %1305 = vmatpush1.bf16.msra.mxu0 0
    %1306 = vmatprep.subr.bf16.mxu0 0
    %1307 = vmatpush1.bf16.msra.mxu0 0
    %1308 = vmatprep.mubr.bf16.mxu0 0
    %1309 = vmatmul.mubr.bf16.gmra.mrb[0].mxu0 %v1274
    %v1310 = vpop.f32.mrb[0].mxu0
    %v1311 = vadd.f32 %v1271, %v1310
    %v1312 = vpop.f32.mrb[0].mxu0
    %v1313 = vpop.f32.mrb[0].mxu0
    %v1314 = vadd.f32 %v1271, %v1313
    %v1315 = vpop.f32.mrb[0].mxu0
    %1316 = vdwg.mxu0
    %1319 = vrot.lane.b32.xlu0 %v1265, 96
    %v1320 = vpop.permute.xlu0 %1319
    %1321 = vrot.lane.b32.xlu0 %v1266, 96
    %v1322 = vpop.permute.xlu0 %1321
    %1325 = vrot.lane.b32.xlu0 %v1271, 96
    %v1326 = vpop.permute.xlu0 %1325
    %1328 = vmatprep.subr.bf16.mxu0 0
    %1329 = vmatpush1.bf16.msra.mxu0 %v1320
    %1330 = vmatprep.subr.bf16.mxu0 0
    %1331 = vmatpush1.bf16.msra.mxu0 %v1322
    %1332 = vmatprep.subr.bf16.mxu0 0
    %1333 = vmatpush1.bf16.msra.mxu0 0
    %1334 = vmatprep.subr.bf16.mxu0 0
    %1335 = vmatpush1.bf16.msra.mxu0 0
    %1336 = vmatprep.subr.bf16.mxu0 0
    %1337 = vmatpush1.bf16.msra.mxu0 0
    %1338 = vmatprep.subr.bf16.mxu0 0
    %1339 = vmatpush1.bf16.msra.mxu0 0
    %1340 = vmatprep.subr.bf16.mxu0 0
    %1341 = vmatpush1.bf16.msra.mxu0 0
    %1342 = vmatprep.subr.bf16.mxu0 0
    %1343 = vmatpush1.bf16.msra.mxu0 0
    %1344 = vmatprep.subr.bf16.mxu0 0
    %1345 = vmatpush1.bf16.msra.mxu0 0
    %1346 = vmatprep.subr.bf16.mxu0 0
    %1347 = vmatpush1.bf16.msra.mxu0 0
    %1348 = vmatprep.subr.bf16.mxu0 0
    %1349 = vmatpush1.bf16.msra.mxu0 0
    %1350 = vmatprep.subr.bf16.mxu0 0
    %1351 = vmatpush1.bf16.msra.mxu0 0
    %1352 = vmatprep.subr.bf16.mxu0 0
    %1353 = vmatpush1.bf16.msra.mxu0 0
    %1354 = vmatprep.subr.bf16.mxu0 0
    %1355 = vmatpush1.bf16.msra.mxu0 0
    %1356 = vmatprep.subr.bf16.mxu0 0
    %1357 = vmatpush1.bf16.msra.mxu0 0
    %1358 = vmatprep.subr.bf16.mxu0 0
    %1359 = vmatpush1.bf16.msra.mxu0 0
    %1360 = vmatprep.mubr.bf16.mxu0 0
    %1361 = vmatmul.mubr.bf16.gmra.mrb[0].mxu0 %v590
    %v1362 = vpop.f32.mrb[0].mxu0
    %v1363 = vadd.f32 %v1326, %v1362
    %v1364 = vpop.f32.mrb[0].mxu0
    %v1365 = vpop.f32.mrb[0].mxu0
    %v1366 = vadd.f32 %v1326, %v1365
    %v1367 = vpop.f32.mrb[0].mxu0
    %1368 = vdwg.mxu0
    %v1369 = vpack.c.bf16 %v1314, %v1311
    %v1370 = vpack.c.bf16 %v1366, %v1363
    %v1372 = vsel %vm637, %v1369, 0
    %v1375 = vsel %vm637, %v1370, 0
    %1377 = vmatprep.subr.bf16.mxu0 0
    %1378 = vmatpush1.bf16.xpose.msra.mxu0 %v1375
    %1379 = vmatprep.subr.bf16.mxu0 0
    %1380 = vmatpush1.bf16.xpose.msra.mxu0 0
    %1381 = vmatprep.subr.bf16.mxu0 0
    %1382 = vmatpush1.bf16.xpose.msra.mxu0 0
    %1383 = vmatprep.subr.bf16.mxu0 0
    %1384 = vmatpush1.bf16.xpose.msra.mxu0 0
    %1385 = vmatprep.subr.bf16.mxu0 0
    %1386 = vmatpush1.bf16.xpose.msra.mxu0 0
    %1387 = vmatprep.subr.bf16.mxu0 0
    %1388 = vmatpush1.bf16.xpose.msra.mxu0 0
    %1389 = vmatprep.subr.bf16.mxu0 0
    %1390 = vmatpush1.bf16.xpose.msra.mxu0 0
    %1391 = vmatprep.subr.bf16.mxu0 0
    %1392 = vmatpush1.bf16.xpose.msra.mxu0 0
    %1393 = vmatprep.subr.bf16.mxu0 0
    %1394 = vmatpush1.bf16.xpose.msra.mxu0 0
    %1395 = vmatprep.subr.bf16.mxu0 0
    %1396 = vmatpush1.bf16.xpose.msra.mxu0 0
    %1397 = vmatprep.subr.bf16.mxu0 0
    %1398 = vmatpush1.bf16.xpose.msra.mxu0 0
    %1399 = vmatprep.subr.bf16.mxu0 0
    %1400 = vmatpush1.bf16.xpose.msra.mxu0 0
    %1401 = vmatprep.subr.bf16.mxu0 0
    %1402 = vmatpush1.bf16.xpose.msra.mxu0 0
    %1403 = vmatprep.subr.bf16.mxu0 0
    %1404 = vmatpush1.bf16.xpose.msra.mxu0 0
    %1405 = vmatprep.subr.bf16.mxu0 0
    %1406 = vmatpush1.bf16.xpose.msra.mxu0 0
    %1407 = vmatprep.subr.bf16.mxu0 0
    %1408 = vmatpush1.bf16.xpose.msra.mxu0 0
    %1409 = vmatprep.mubr.bf16.mxu0 0
    %1410 = vmatmul.mubr.bf16.gmra.mrb[0].mxu0 %v1372
    %v1411 = vpop.f32.mrb[0].mxu0
    %v1412 = vadd.f32 0.0, %v1411
    %v1413 = vpop.f32.mrb[0].mxu0
    %v1414 = vpop.f32.mrb[0].mxu0
    %v1415 = vadd.f32 0.0, %v1414
    %v1416 = vpop.f32.mrb[0].mxu0
    %1417 = vdwg.mxu0
    %v1418 = vmul.f32 %v1412, 0.35355338
    %v1419 = vmul.f32 %v1415, 0.35355338
    %v1420 = vadd.f32 %v1418, %v432
    %v1421 = vadd.f32 %v1419, %v433
    %v1422 = vsel %vm689, %v1420, -inf
    %1423 = vmax.xlane.f32.xlu0 %v1422
    %v1424 = vpop.xlane.xlu0 %1423
    %v1425 = vsel %vm689, %v1421, -inf
    %1426 = vmax.xlane.f32.xlu0 %v1425
    %v1427 = vpop.xlane.xlu0 %1426
    %v1428 = vsub.f32 %v1420, %v1424
    %v1429 = vsub.f32 %v1421, %v1427
    %v1430 = vmul.f32 %v1428, 1.442695
    %v1431 = vpow.pop %v1430
    %v1432 = vmul.f32 %v1429, 1.442695
    %v1433 = vpow.pop %v1432
    %v1434 = vsel %vm689, %v1431, 0.0
    %1435 = vadd.xlane.f32.xlu0 %v1434
    %v1436 = vpop.xlane.xlu0 %1435
    %v1437 = vsel %vm689, %v1433, 0.0
    %1438 = vadd.xlane.f32.xlu0 %v1437
    %v1439 = vpop.xlane.xlu0 %1438
    %v1440 = vrcp.pop %v1436
    %v1441 = vmul.f32 %v1431, %v1440
    %v1442 = vrcp.pop %v1439
    %v1443 = vmul.f32 %v1433, %v1442
    %v1444 = vpack.c.bf16 %v1443, %v1441
    %1446 = vrot.lane.b32.xlu0 %v1370, 96
    %v1447 = vpop.permute.xlu0 %1446
    %v1450 = vsel %vm689, %v1444, 0
    %1452 = vmatprep.subr.bf16.mxu0 0
    %1453 = vmatpush1.bf16.msra.mxu0 %v1447
    %1454 = vmatprep.subr.bf16.mxu0 0
    %1455 = vmatpush1.bf16.msra.mxu0 0
    %1456 = vmatprep.subr.bf16.mxu0 0
    %1457 = vmatpush1.bf16.msra.mxu0 0
    %1458 = vmatprep.subr.bf16.mxu0 0
    %1459 = vmatpush1.bf16.msra.mxu0 0
    %1460 = vmatprep.subr.bf16.mxu0 0
    %1461 = vmatpush1.bf16.msra.mxu0 0
    %1462 = vmatprep.subr.bf16.mxu0 0
    %1463 = vmatpush1.bf16.msra.mxu0 0
    %1464 = vmatprep.subr.bf16.mxu0 0
    %1465 = vmatpush1.bf16.msra.mxu0 0
    %1466 = vmatprep.subr.bf16.mxu0 0
    %1467 = vmatpush1.bf16.msra.mxu0 0
    %1468 = vmatprep.subr.bf16.mxu0 0
    %1469 = vmatpush1.bf16.msra.mxu0 0
    %1470 = vmatprep.subr.bf16.mxu0 0
    %1471 = vmatpush1.bf16.msra.mxu0 0
    %1472 = vmatprep.subr.bf16.mxu0 0
    %1473 = vmatpush1.bf16.msra.mxu0 0
    %1474 = vmatprep.subr.bf16.mxu0 0
    %1475 = vmatpush1.bf16.msra.mxu0 0
    %1476 = vmatprep.subr.bf16.mxu0 0
    %1477 = vmatpush1.bf16.msra.mxu0 0
    %1478 = vmatprep.subr.bf16.mxu0 0
    %1479 = vmatpush1.bf16.msra.mxu0 0
    %1480 = vmatprep.subr.bf16.mxu0 0
    %1481 = vmatpush1.bf16.msra.mxu0 0
    %1482 = vmatprep.subr.bf16.mxu0 0
    %1483 = vmatpush1.bf16.msra.mxu0 0
    %1484 = vmatprep.mubr.bf16.mxu0 0
    %1485 = vmatmul.mubr.bf16.gmra.mrb[0].mxu0 %v1450
    %v1486 = vpop.f32.mrb[0].mxu0
    %v1487 = vadd.f32 0.0, %v1486
    %v1488 = vpop.f32.mrb[0].mxu0
    %v1489 = vpop.f32.mrb[0].mxu0
    %v1490 = vadd.f32 0.0, %v1489
    %v1491 = vpop.f32.mrb[0].mxu0
    %1492 = vdwg.mxu0
    %1494 = vrot.lane.b32.xlu0 %v1369, 120
    %v1495 = vpop.permute.xlu0 %1494
    %1496 = vrot.lane.b32.xlu0 %v1370, 120
    %v1497 = vpop.permute.xlu0 %1496
    %v1499 = vsel %vm637, %v1495, 0
    %v1502 = vsel %vm637, %v1497, 0
    %1504 = vmatprep.subr.bf16.mxu0 0
    %1505 = vmatpush1.bf16.xpose.msra.mxu0 %v1502
    %1506 = vmatprep.subr.bf16.mxu0 0
    %1507 = vmatpush1.bf16.xpose.msra.mxu0 0
    %1508 = vmatprep.subr.bf16.mxu0 0
    %1509 = vmatpush1.bf16.xpose.msra.mxu0 0
    %1510 = vmatprep.subr.bf16.mxu0 0
    %1511 = vmatpush1.bf16.xpose.msra.mxu0 0
    %1512 = vmatprep.subr.bf16.mxu0 0
    %1513 = vmatpush1.bf16.xpose.msra.mxu0 0
    %1514 = vmatprep.subr.bf16.mxu0 0
    %1515 = vmatpush1.bf16.xpose.msra.mxu0 0
    %1516 = vmatprep.subr.bf16.mxu0 0
    %1517 = vmatpush1.bf16.xpose.msra.mxu0 0
    %1518 = vmatprep.subr.bf16.mxu0 0
    %1519 = vmatpush1.bf16.xpose.msra.mxu0 0
    %1520 = vmatprep.subr.bf16.mxu0 0
    %1521 = vmatpush1.bf16.xpose.msra.mxu0 0
    %1522 = vmatprep.subr.bf16.mxu0 0
    %1523 = vmatpush1.bf16.xpose.msra.mxu0 0
    %1524 = vmatprep.subr.bf16.mxu0 0
    %1525 = vmatpush1.bf16.xpose.msra.mxu0 0
    %1526 = vmatprep.subr.bf16.mxu0 0
    %1527 = vmatpush1.bf16.xpose.msra.mxu0 0
    %1528 = vmatprep.subr.bf16.mxu0 0
    %1529 = vmatpush1.bf16.xpose.msra.mxu0 0
    %1530 = vmatprep.subr.bf16.mxu0 0
    %1531 = vmatpush1.bf16.xpose.msra.mxu0 0
    %1532 = vmatprep.subr.bf16.mxu0 0
    %1533 = vmatpush1.bf16.xpose.msra.mxu0 0
    %1534 = vmatprep.subr.bf16.mxu0 0
    %1535 = vmatpush1.bf16.xpose.msra.mxu0 0
    %1536 = vmatprep.mubr.bf16.mxu0 0
    %1537 = vmatmul.mubr.bf16.gmra.mrb[0].mxu0 %v1499
    %v1538 = vpop.f32.mrb[0].mxu0
    %v1539 = vadd.f32 0.0, %v1538
    %v1540 = vpop.f32.mrb[0].mxu0
    %v1541 = vpop.f32.mrb[0].mxu0
    %v1542 = vadd.f32 0.0, %v1541
    %v1543 = vpop.f32.mrb[0].mxu0
    %1544 = vdwg.mxu0
    %v1545 = vmul.f32 %v1539, 0.35355338
    %v1546 = vmul.f32 %v1542, 0.35355338
    %v1547 = vadd.f32 %v1545, %v432
    %v1548 = vadd.f32 %v1546, %v433
    %v1549 = vsel %vm689, %v1547, -inf
    %1550 = vmax.xlane.f32.xlu0 %v1549
    %v1551 = vpop.xlane.xlu0 %1550
    %v1552 = vsel %vm689, %v1548, -inf
    %1553 = vmax.xlane.f32.xlu0 %v1552
    %v1554 = vpop.xlane.xlu0 %1553
    %v1555 = vsub.f32 %v1547, %v1551
    %v1556 = vsub.f32 %v1548, %v1554
    %v1557 = vmul.f32 %v1555, 1.442695
    %v1558 = vpow.pop %v1557
    %v1559 = vmul.f32 %v1556, 1.442695
    %v1560 = vpow.pop %v1559
    %v1561 = vsel %vm689, %v1558, 0.0
    %1562 = vadd.xlane.f32.xlu0 %v1561
    %v1563 = vpop.xlane.xlu0 %1562
    %v1564 = vsel %vm689, %v1560, 0.0
    %1565 = vadd.xlane.f32.xlu0 %v1564
    %v1566 = vpop.xlane.xlu0 %1565
    %v1567 = vrcp.pop %v1563
    %v1568 = vmul.f32 %v1558, %v1567
    %v1569 = vrcp.pop %v1566
    %v1570 = vmul.f32 %v1560, %v1569
    %v1571 = vpack.c.bf16 %v1570, %v1568
    %1572 = vrot.lane.b32.xlu0 %v1370, 88
    %v1573 = vpop.permute.xlu0 %1572
    %v1576 = vsel %vm689, %v1571, 0
    %1578 = vmatprep.subr.bf16.mxu0 0
    %1579 = vmatpush1.bf16.msra.mxu0 %v1573
    %1580 = vmatprep.subr.bf16.mxu0 0
    %1581 = vmatpush1.bf16.msra.mxu0 0
    %1582 = vmatprep.subr.bf16.mxu0 0
    %1583 = vmatpush1.bf16.msra.mxu0 0
    %1584 = vmatprep.subr.bf16.mxu0 0
    %1585 = vmatpush1.bf16.msra.mxu0 0
    %1586 = vmatprep.subr.bf16.mxu0 0
    %1587 = vmatpush1.bf16.msra.mxu0 0
    %1588 = vmatprep.subr.bf16.mxu0 0
    %1589 = vmatpush1.bf16.msra.mxu0 0
    %1590 = vmatprep.subr.bf16.mxu0 0
    %1591 = vmatpush1.bf16.msra.mxu0 0
    %1592 = vmatprep.subr.bf16.mxu0 0
    %1593 = vmatpush1.bf16.msra.mxu0 0
    %1594 = vmatprep.subr.bf16.mxu0 0
    %1595 = vmatpush1.bf16.msra.mxu0 0
    %1596 = vmatprep.subr.bf16.mxu0 0
    %1597 = vmatpush1.bf16.msra.mxu0 0
    %1598 = vmatprep.subr.bf16.mxu0 0
    %1599 = vmatpush1.bf16.msra.mxu0 0
    %1600 = vmatprep.subr.bf16.mxu0 0
    %1601 = vmatpush1.bf16.msra.mxu0 0
    %1602 = vmatprep.subr.bf16.mxu0 0
    %1603 = vmatpush1.bf16.msra.mxu0 0
    %1604 = vmatprep.subr.bf16.mxu0 0
    %1605 = vmatpush1.bf16.msra.mxu0 0
    %1606 = vmatprep.subr.bf16.mxu0 0
    %1607 = vmatpush1.bf16.msra.mxu0 0
    %1608 = vmatprep.subr.bf16.mxu0 0
    %1609 = vmatpush1.bf16.msra.mxu0 0
    %1610 = vmatprep.mubr.bf16.mxu0 0
    %1611 = vmatmul.mubr.bf16.gmra.mrb[0].mxu0 %v1576
    %v1612 = vpop.f32.mrb[0].mxu0
    %v1613 = vadd.f32 0.0, %v1612
    %v1614 = vpop.f32.mrb[0].mxu0
    %v1615 = vpop.f32.mrb[0].mxu0
    %v1616 = vadd.f32 0.0, %v1615
    %v1617 = vpop.f32.mrb[0].mxu0
    %1618 = vdwg.mxu0
    %1619 = vrot.lane.b32.xlu0 %v1369, 112
    %v1620 = vpop.permute.xlu0 %1619
    %1621 = vrot.lane.b32.xlu0 %v1370, 112
    %v1622 = vpop.permute.xlu0 %1621
    %v1624 = vsel %vm637, %v1620, 0
    %v1627 = vsel %vm637, %v1622, 0
    %1629 = vmatprep.subr.bf16.mxu0 0
    %1630 = vmatpush1.bf16.xpose.msra.mxu0 %v1627
    %1631 = vmatprep.subr.bf16.mxu0 0
    %1632 = vmatpush1.bf16.xpose.msra.mxu0 0
    %1633 = vmatprep.subr.bf16.mxu0 0
    %1634 = vmatpush1.bf16.xpose.msra.mxu0 0
    %1635 = vmatprep.subr.bf16.mxu0 0
    %1636 = vmatpush1.bf16.xpose.msra.mxu0 0
    %1637 = vmatprep.subr.bf16.mxu0 0
    %1638 = vmatpush1.bf16.xpose.msra.mxu0 0
    %1639 = vmatprep.subr.bf16.mxu0 0
    %1640 = vmatpush1.bf16.xpose.msra.mxu0 0
    %1641 = vmatprep.subr.bf16.mxu0 0
    %1642 = vmatpush1.bf16.xpose.msra.mxu0 0
    %1643 = vmatprep.subr.bf16.mxu0 0
    %1644 = vmatpush1.bf16.xpose.msra.mxu0 0
    %1645 = vmatprep.subr.bf16.mxu0 0
    %1646 = vmatpush1.bf16.xpose.msra.mxu0 0
    %1647 = vmatprep.subr.bf16.mxu0 0
    %1648 = vmatpush1.bf16.xpose.msra.mxu0 0
    %1649 = vmatprep.subr.bf16.mxu0 0
    %1650 = vmatpush1.bf16.xpose.msra.mxu0 0
    %1651 = vmatprep.subr.bf16.mxu0 0
    %1652 = vmatpush1.bf16.xpose.msra.mxu0 0
    %1653 = vmatprep.subr.bf16.mxu0 0
    %1654 = vmatpush1.bf16.xpose.msra.mxu0 0
    %1655 = vmatprep.subr.bf16.mxu0 0
    %1656 = vmatpush1.bf16.xpose.msra.mxu0 0
    %1657 = vmatprep.subr.bf16.mxu0 0
    %1658 = vmatpush1.bf16.xpose.msra.mxu0 0
    %1659 = vmatprep.subr.bf16.mxu0 0
    %1660 = vmatpush1.bf16.xpose.msra.mxu0 0
    %1661 = vmatprep.mubr.bf16.mxu0 0
    %1662 = vmatmul.mubr.bf16.gmra.mrb[0].mxu0 %v1624
    %v1663 = vpop.f32.mrb[0].mxu0
    %v1664 = vadd.f32 0.0, %v1663
    %v1665 = vpop.f32.mrb[0].mxu0
    %v1666 = vpop.f32.mrb[0].mxu0
    %v1667 = vadd.f32 0.0, %v1666
    %v1668 = vpop.f32.mrb[0].mxu0
    %1669 = vdwg.mxu0
    %v1670 = vmul.f32 %v1664, 0.35355338
    %v1671 = vmul.f32 %v1667, 0.35355338
    %v1672 = vadd.f32 %v1670, %v432
    %v1673 = vadd.f32 %v1671, %v433
    %v1674 = vsel %vm689, %v1672, -inf
    %1675 = vmax.xlane.f32.xlu0 %v1674
    %v1676 = vpop.xlane.xlu0 %1675
    %v1677 = vsel %vm689, %v1673, -inf
    %1678 = vmax.xlane.f32.xlu0 %v1677
    %v1679 = vpop.xlane.xlu0 %1678
    %v1680 = vsub.f32 %v1672, %v1676
    %v1681 = vsub.f32 %v1673, %v1679
    %v1682 = vmul.f32 %v1680, 1.442695
    %v1683 = vpow.pop %v1682
    %v1684 = vmul.f32 %v1681, 1.442695
    %v1685 = vpow.pop %v1684
    %v1686 = vsel %vm689, %v1683, 0.0
    %1687 = vadd.xlane.f32.xlu0 %v1686
    %v1688 = vpop.xlane.xlu0 %1687
    %v1689 = vsel %vm689, %v1685, 0.0
    %1690 = vadd.xlane.f32.xlu0 %v1689
    %v1691 = vpop.xlane.xlu0 %1690
    %v1692 = vrcp.pop %v1688
    %v1693 = vmul.f32 %v1683, %v1692
    %v1694 = vrcp.pop %v1691
    %v1695 = vmul.f32 %v1685, %v1694
    %v1696 = vpack.c.bf16 %v1695, %v1693
    %1697 = vrot.lane.b32.xlu0 %v1370, 80
    %v1698 = vpop.permute.xlu0 %1697
    %v1701 = vsel %vm689, %v1696, 0
    %1703 = vmatprep.subr.bf16.mxu0 0
    %1704 = vmatpush1.bf16.msra.mxu0 %v1698
    %1705 = vmatprep.subr.bf16.mxu0 0
    %1706 = vmatpush1.bf16.msra.mxu0 0
    %1707 = vmatprep.subr.bf16.mxu0 0
    %1708 = vmatpush1.bf16.msra.mxu0 0
    %1709 = vmatprep.subr.bf16.mxu0 0
    %1710 = vmatpush1.bf16.msra.mxu0 0
    %1711 = vmatprep.subr.bf16.mxu0 0
    %1712 = vmatpush1.bf16.msra.mxu0 0
    %1713 = vmatprep.subr.bf16.mxu0 0
    %1714 = vmatpush1.bf16.msra.mxu0 0
    %1715 = vmatprep.subr.bf16.mxu0 0
    %1716 = vmatpush1.bf16.msra.mxu0 0
    %1717 = vmatprep.subr.bf16.mxu0 0
    %1718 = vmatpush1.bf16.msra.mxu0 0
    %1719 = vmatprep.subr.bf16.mxu0 0
    %1720 = vmatpush1.bf16.msra.mxu0 0
    %1721 = vmatprep.subr.bf16.mxu0 0
    %1722 = vmatpush1.bf16.msra.mxu0 0
    %1723 = vmatprep.subr.bf16.mxu0 0
    %1724 = vmatpush1.bf16.msra.mxu0 0
    %1725 = vmatprep.subr.bf16.mxu0 0
    %1726 = vmatpush1.bf16.msra.mxu0 0
    %1727 = vmatprep.subr.bf16.mxu0 0
    %1728 = vmatpush1.bf16.msra.mxu0 0
    %1729 = vmatprep.subr.bf16.mxu0 0
    %1730 = vmatpush1.bf16.msra.mxu0 0
    %1731 = vmatprep.subr.bf16.mxu0 0
    %1732 = vmatpush1.bf16.msra.mxu0 0
    %1733 = vmatprep.subr.bf16.mxu0 0
    %1734 = vmatpush1.bf16.msra.mxu0 0
    %1735 = vmatprep.mubr.bf16.mxu0 0
    %1736 = vmatmul.mubr.bf16.gmra.mrb[0].mxu0 %v1701
    %v1737 = vpop.f32.mrb[0].mxu0
    %v1738 = vadd.f32 0.0, %v1737
    %v1739 = vpop.f32.mrb[0].mxu0
    %v1740 = vpop.f32.mrb[0].mxu0
    %v1741 = vadd.f32 0.0, %v1740
    %v1742 = vpop.f32.mrb[0].mxu0
    %1743 = vdwg.mxu0
    %1744 = vrot.lane.b32.xlu0 %v1369, 104
    %v1745 = vpop.permute.xlu0 %1744
    %1746 = vrot.lane.b32.xlu0 %v1370, 104
    %v1747 = vpop.permute.xlu0 %1746
    %v1749 = vsel %vm637, %v1745, 0
    %v1752 = vsel %vm637, %v1747, 0
    %1754 = vmatprep.subr.bf16.mxu0 0
    %1755 = vmatpush1.bf16.xpose.msra.mxu0 %v1752
    %1756 = vmatprep.subr.bf16.mxu0 0
    %1757 = vmatpush1.bf16.xpose.msra.mxu0 0
    %1758 = vmatprep.subr.bf16.mxu0 0
    %1759 = vmatpush1.bf16.xpose.msra.mxu0 0
    %1760 = vmatprep.subr.bf16.mxu0 0
    %1761 = vmatpush1.bf16.xpose.msra.mxu0 0
    %1762 = vmatprep.subr.bf16.mxu0 0
    %1763 = vmatpush1.bf16.xpose.msra.mxu0 0
    %1764 = vmatprep.subr.bf16.mxu0 0
    %1765 = vmatpush1.bf16.xpose.msra.mxu0 0
    %1766 = vmatprep.subr.bf16.mxu0 0
    %1767 = vmatpush1.bf16.xpose.msra.mxu0 0
    %1768 = vmatprep.subr.bf16.mxu0 0
    %1769 = vmatpush1.bf16.xpose.msra.mxu0 0
    %1770 = vmatprep.subr.bf16.mxu0 0
    %1771 = vmatpush1.bf16.xpose.msra.mxu0 0
    %1772 = vmatprep.subr.bf16.mxu0 0
    %1773 = vmatpush1.bf16.xpose.msra.mxu0 0
    %1774 = vmatprep.subr.bf16.mxu0 0
    %1775 = vmatpush1.bf16.xpose.msra.mxu0 0
    %1776 = vmatprep.subr.bf16.mxu0 0
    %1777 = vmatpush1.bf16.xpose.msra.mxu0 0
    %1778 = vmatprep.subr.bf16.mxu0 0
    %1779 = vmatpush1.bf16.xpose.msra.mxu0 0
    %1780 = vmatprep.subr.bf16.mxu0 0
    %1781 = vmatpush1.bf16.xpose.msra.mxu0 0
    %1782 = vmatprep.subr.bf16.mxu0 0
    %1783 = vmatpush1.bf16.xpose.msra.mxu0 0
    %1784 = vmatprep.subr.bf16.mxu0 0
    %1785 = vmatpush1.bf16.xpose.msra.mxu0 0
    %1786 = vmatprep.mubr.bf16.mxu0 0
    %1787 = vmatmul.mubr.bf16.gmra.mrb[0].mxu0 %v1749
    %v1788 = vpop.f32.mrb[0].mxu0
    %v1789 = vadd.f32 0.0, %v1788
    %v1790 = vpop.f32.mrb[0].mxu0
    %v1791 = vpop.f32.mrb[0].mxu0
    %v1792 = vadd.f32 0.0, %v1791
    %v1793 = vpop.f32.mrb[0].mxu0
    %1794 = vdwg.mxu0
    %v1795 = vmul.f32 %v1789, 0.35355338
    %v1796 = vmul.f32 %v1792, 0.35355338
    %v1797 = vadd.f32 %v1795, %v432
    %v1798 = vadd.f32 %v1796, %v433
    %v1799 = vsel %vm689, %v1797, -inf
    %1800 = vmax.xlane.f32.xlu0 %v1799
    %v1801 = vpop.xlane.xlu0 %1800
    %v1802 = vsel %vm689, %v1798, -inf
    %1803 = vmax.xlane.f32.xlu0 %v1802
    %v1804 = vpop.xlane.xlu0 %1803
    %v1805 = vsub.f32 %v1797, %v1801
    %v1806 = vsub.f32 %v1798, %v1804
    %v1807 = vmul.f32 %v1805, 1.442695
    %v1808 = vpow.pop %v1807
    %v1809 = vmul.f32 %v1806, 1.442695
    %v1810 = vpow.pop %v1809
    %v1811 = vsel %vm689, %v1808, 0.0
    %1812 = vadd.xlane.f32.xlu0 %v1811
    %v1813 = vpop.xlane.xlu0 %1812
    %v1814 = vsel %vm689, %v1810, 0.0
    %1815 = vadd.xlane.f32.xlu0 %v1814
    %v1816 = vpop.xlane.xlu0 %1815
    %v1817 = vrcp.pop %v1813
    %v1818 = vmul.f32 %v1808, %v1817
    %v1819 = vrcp.pop %v1816
    %v1820 = vmul.f32 %v1810, %v1819
    %v1821 = vpack.c.bf16 %v1820, %v1818
    %1822 = vrot.lane.b32.xlu0 %v1370, 72
    %v1823 = vpop.permute.xlu0 %1822
    %v1826 = vsel %vm689, %v1821, 0
    %1828 = vmatprep.subr.bf16.mxu0 0
    %1829 = vmatpush1.bf16.msra.mxu0 %v1823
    %1830 = vmatprep.subr.bf16.mxu0 0
    %1831 = vmatpush1.bf16.msra.mxu0 0
    %1832 = vmatprep.subr.bf16.mxu0 0
    %1833 = vmatpush1.bf16.msra.mxu0 0
    %1834 = vmatprep.subr.bf16.mxu0 0
    %1835 = vmatpush1.bf16.msra.mxu0 0
    %1836 = vmatprep.subr.bf16.mxu0 0
    %1837 = vmatpush1.bf16.msra.mxu0 0
    %1838 = vmatprep.subr.bf16.mxu0 0
    %1839 = vmatpush1.bf16.msra.mxu0 0
    %1840 = vmatprep.subr.bf16.mxu0 0
    %1841 = vmatpush1.bf16.msra.mxu0 0
    %1842 = vmatprep.subr.bf16.mxu0 0
    %1843 = vmatpush1.bf16.msra.mxu0 0
    %1844 = vmatprep.subr.bf16.mxu0 0
    %1845 = vmatpush1.bf16.msra.mxu0 0
    %1846 = vmatprep.subr.bf16.mxu0 0
    %1847 = vmatpush1.bf16.msra.mxu0 0
    %1848 = vmatprep.subr.bf16.mxu0 0
    %1849 = vmatpush1.bf16.msra.mxu0 0
    %1850 = vmatprep.subr.bf16.mxu0 0
    %1851 = vmatpush1.bf16.msra.mxu0 0
    %1852 = vmatprep.subr.bf16.mxu0 0
    %1853 = vmatpush1.bf16.msra.mxu0 0
    %1854 = vmatprep.subr.bf16.mxu0 0
    %1855 = vmatpush1.bf16.msra.mxu0 0
    %1856 = vmatprep.subr.bf16.mxu0 0
    %1857 = vmatpush1.bf16.msra.mxu0 0
    %1858 = vmatprep.subr.bf16.mxu0 0
    %1859 = vmatpush1.bf16.msra.mxu0 0
    %1860 = vmatprep.mubr.bf16.mxu0 0
    %1861 = vmatmul.mubr.bf16.gmra.mrb[0].mxu0 %v1826
    %v1862 = vpop.f32.mrb[0].mxu0
    %v1863 = vadd.f32 0.0, %v1862
    %v1864 = vpop.f32.mrb[0].mxu0
    %v1865 = vpop.f32.mrb[0].mxu0
    %v1866 = vadd.f32 0.0, %v1865
    %v1867 = vpop.f32.mrb[0].mxu0
    %1868 = vdwg.mxu0
    %1871 = vrot.lane.b32.xlu0 %v1613, 8
    %v1872 = vpop.permute.xlu0 %1871
    %1873 = vrot.lane.b32.xlu0 %v1616, 8
    %v1874 = vpop.permute.xlu0 %1873
    %1879 = vrot.lane.b32.xlu0 %v1738, 16
    %v1880 = vpop.permute.xlu0 %1879
    %1881 = vrot.lane.b32.xlu0 %v1741, 16
    %v1882 = vpop.permute.xlu0 %1881
    %1887 = vrot.lane.b32.xlu0 %v1863, 24
    %v1888 = vpop.permute.xlu0 %1887
    %1889 = vrot.lane.b32.xlu0 %v1866, 24
    %v1890 = vpop.permute.xlu0 %1889
    %v1893 = vsel %vm637, %v1487, %v1872
    %v1894 = vsel %vm637, %v1490, %v1874
    %v1895 = vsel %vm689, %v1893, %v1880
    %v1896 = vsel %vm689, %v1894, %v1882
    %v1897 = vsel %vm1163, %v1895, %v1888
    %v1898 = vsel %vm1163, %v1896, %v1890
    %v1899 = vpack.c.bf16 %v1898, %v1897
    %v1900 = vpack.c.bf16 %v555, %v554
    %v1901 = vpack.c.bf16 %v557, %v556
    %v1903 = vlaneseq
    %v1904 = vshrl.u32 %v1903, 7
    %v1905 = vsub.s32 0, %v1904
    %v1906 = vrot.slane %v558, %v1905
    %v1909 = vsel %vm588, %v1899, 0
    %1911 = vmatprep.subr.bf16.mxu0 0
    %1912 = vmatpush1.bf16.msra.mxu0 %v1900
    %1913 = vmatprep.subr.bf16.mxu0 0
    %1914 = vmatpush1.bf16.msra.mxu0 %v1901
    %1915 = vmatprep.subr.bf16.mxu0 0
    %1916 = vmatpush1.bf16.msra.mxu0 0
    %1917 = vmatprep.subr.bf16.mxu0 0
    %1918 = vmatpush1.bf16.msra.mxu0 0
    %1919 = vmatprep.subr.bf16.mxu0 0
    %1920 = vmatpush1.bf16.msra.mxu0 0
    %1921 = vmatprep.subr.bf16.mxu0 0
    %1922 = vmatpush1.bf16.msra.mxu0 0
    %1923 = vmatprep.subr.bf16.mxu0 0
    %1924 = vmatpush1.bf16.msra.mxu0 0
    %1925 = vmatprep.subr.bf16.mxu0 0
    %1926 = vmatpush1.bf16.msra.mxu0 0
    %1927 = vmatprep.subr.bf16.mxu0 0
    %1928 = vmatpush1.bf16.msra.mxu0 0
    %1929 = vmatprep.subr.bf16.mxu0 0
    %1930 = vmatpush1.bf16.msra.mxu0 0
    %1931 = vmatprep.subr.bf16.mxu0 0
    %1932 = vmatpush1.bf16.msra.mxu0 0
    %1933 = vmatprep.subr.bf16.mxu0 0
    %1934 = vmatpush1.bf16.msra.mxu0 0
    %1935 = vmatprep.subr.bf16.mxu0 0
    %1936 = vmatpush1.bf16.msra.mxu0 0
    %1937 = vmatprep.subr.bf16.mxu0 0
    %1938 = vmatpush1.bf16.msra.mxu0 0
    %1939 = vmatprep.subr.bf16.mxu0 0
    %1940 = vmatpush1.bf16.msra.mxu0 0
    %1941 = vmatprep.subr.bf16.mxu0 0
    %1942 = vmatpush1.bf16.msra.mxu0 0
    %1943 = vmatprep.mubr.bf16.mxu0 0
    %1944 = vmatmul.mubr.bf16.gmra.mrb[0].mxu0 %v1909
    %v1945 = vpop.f32.mrb[0].mxu0
    %v1946 = vadd.f32 %v1906, %v1945
    %v1947 = vpop.f32.mrb[0].mxu0
    %v1948 = vpop.f32.mrb[0].mxu0
    %v1949 = vadd.f32 %v1906, %v1948
    %v1950 = vpop.f32.mrb[0].mxu0
    %1951 = vdwg.mxu0
    %v1952 = vadd.f32 %v1262, %v1946
    %v1953 = vadd.f32 %v1263, %v1949
    %v1954 = vsel %vm588, %v1952, 0.0
    %1955 = vadd.xlane.f32.xlu0 %v1954
    %v1956 = vpop.xlane.xlu0 %1955
    %v1957 = vsel %vm588, %v1953, 0.0
    %1958 = vadd.xlane.f32.xlu0 %v1957
    %v1959 = vpop.xlane.xlu0 %1958
    %v1960 = vmul.f32 %v1956, %v1227
    %v1961 = vmul.f32 %v1959, %v1227
    %v1962 = vsub.f32 %v1952, %v1960
    %v1963 = vsub.f32 %v1953, %v1961
    %v1964 = vmul.f32 %v1962, %v1962
    %v1965 = vmul.f32 %v1963, %v1963
    %v1966 = vsel %vm588, %v1964, 0.0
    %1967 = vadd.xlane.f32.xlu0 %v1966
    %v1968 = vpop.xlane.xlu0 %1967
    %v1969 = vsel %vm588, %v1965, 0.0
    %1970 = vadd.xlane.f32.xlu0 %v1969
    %v1971 = vpop.xlane.xlu0 %1970
    %v1972 = vmul.f32 %v1968, %v1227
    %v1973 = vmul.f32 %v1971, %v1227
    %v1974 = vadd.f32 %v1972, 1e-05
    %v1975 = vadd.f32 %v1973, 1e-05
    %v1976 = vrsqrt.pop %v1974
    %v1977 = vrsqrt.pop %v1975
    %v1978 = vmul.f32 %v1962, %v1976
    %v1979 = vmul.f32 %v1963, %v1977
    %v1981 = vlaneseq
    %v1982 = vshrl.u32 %v1981, 7
    %v1983 = vsub.s32 0, %v1982
    %v1984 = vrot.slane %v575, %v1983
    %v1986 = vmul.f32 %v1978, %v1984
    %v1987 = vmul.f32 %v1979, %v1984
    %v1989 = vlaneseq
    %v1990 = vshrl.u32 %v1989, 7
    %v1991 = vsub.s32 0, %v1990
    %v1992 = vrot.slane %v576, %v1991
    %v1994 = vadd.f32 %v1986, %v1992
    %v1995 = vadd.f32 %v1987, %v1992
    %v1996 = vpack.c.bf16 %v1995, %v1994
    %v1997 = vpack.c.bf16 %v560, %v559
    %v1998 = vpack.c.bf16 %v562, %v561
    %v2000 = vlaneseq
    %v2001 = vshrl.u32 %v2000, 7
    %v2002 = vsub.s32 0, %v2001
    %v2003 = vrot.slane %v563, %v2002
    %v2006 = vsel %vm588, %v1996, 0
    %2008 = vmatprep.subr.bf16.mxu0 0
    %2009 = vmatpush1.bf16.msra.mxu0 %v1997
    %2010 = vmatprep.subr.bf16.mxu0 0
    %2011 = vmatpush1.bf16.msra.mxu0 %v1998
    %2012 = vmatprep.subr.bf16.mxu0 0
    %2013 = vmatpush1.bf16.msra.mxu0 0
    %2014 = vmatprep.subr.bf16.mxu0 0
    %2015 = vmatpush1.bf16.msra.mxu0 0
    %2016 = vmatprep.subr.bf16.mxu0 0
    %2017 = vmatpush1.bf16.msra.mxu0 0
    %2018 = vmatprep.subr.bf16.mxu0 0
    %2019 = vmatpush1.bf16.msra.mxu0 0
    %2020 = vmatprep.subr.bf16.mxu0 0
    %2021 = vmatpush1.bf16.msra.mxu0 0
    %2022 = vmatprep.subr.bf16.mxu0 0
    %2023 = vmatpush1.bf16.msra.mxu0 0
    %2024 = vmatprep.subr.bf16.mxu0 0
    %2025 = vmatpush1.bf16.msra.mxu0 0
    %2026 = vmatprep.subr.bf16.mxu0 0
    %2027 = vmatpush1.bf16.msra.mxu0 0
    %2028 = vmatprep.subr.bf16.mxu0 0
    %2029 = vmatpush1.bf16.msra.mxu0 0
    %2030 = vmatprep.subr.bf16.mxu0 0
    %2031 = vmatpush1.bf16.msra.mxu0 0
    %2032 = vmatprep.subr.bf16.mxu0 0
    %2033 = vmatpush1.bf16.msra.mxu0 0
    %2034 = vmatprep.subr.bf16.mxu0 0
    %2035 = vmatpush1.bf16.msra.mxu0 0
    %2036 = vmatprep.subr.bf16.mxu0 0
    %2037 = vmatpush1.bf16.msra.mxu0 0
    %2038 = vmatprep.subr.bf16.mxu0 0
    %2039 = vmatpush1.bf16.msra.mxu0 0
    %2040 = vmatprep.mubr.bf16.mxu0 0
    %2041 = vmatmul.mubr.bf16.gmra.mrb[0].mxu0 %v2006
    %v2042 = vpop.f32.mrb[0].mxu0
    %v2043 = vadd.f32 %v2003, %v2042
    %v2044 = vpop.f32.mrb[0].mxu0
    %v2045 = vpop.f32.mrb[0].mxu0
    %v2046 = vadd.f32 %v2003, %v2045
    %v2047 = vpop.f32.mrb[0].mxu0
    %2048 = vdwg.mxu0
    %v2049 = vmax.f32 %v2043, 0.0
    %v2050 = vmax.f32 %v2046, 0.0
    %v2051 = vpack.c.bf16 %v2050, %v2049
    %v2052 = vpack.c.bf16 %v565, %v564
    %v2053 = vpack.c.bf16 %v567, %v566
    %v2054 = vpack.c.bf16 %v569, %v568
    %v2055 = vpack.c.bf16 %v571, %v570
    %v2057 = vlaneseq
    %v2058 = vshrl.u32 %v2057, 7
    %v2059 = vsub.s32 0, %v2058
    %v2060 = vrot.slane %v572, %v2059
    %vm2062 = vcmask 523264
    %v2064 = vsel %vm2062, %v2051, 0
    %2066 = vmatprep.subr.bf16.mxu0 0
    %2067 = vmatpush1.bf16.msra.mxu0 %v2052
    %2068 = vmatprep.subr.bf16.mxu0 0
    %2069 = vmatpush1.bf16.msra.mxu0 %v2053
    %2070 = vmatprep.subr.bf16.mxu0 0
    %2071 = vmatpush1.bf16.msra.mxu0 %v2054
    %2072 = vmatprep.subr.bf16.mxu0 0
    %2073 = vmatpush1.bf16.msra.mxu0 %v2055
    %2074 = vmatprep.subr.bf16.mxu0 0
    %2075 = vmatpush1.bf16.msra.mxu0 0
    %2076 = vmatprep.subr.bf16.mxu0 0
    %2077 = vmatpush1.bf16.msra.mxu0 0
    %2078 = vmatprep.subr.bf16.mxu0 0
    %2079 = vmatpush1.bf16.msra.mxu0 0
    %2080 = vmatprep.subr.bf16.mxu0 0
    %2081 = vmatpush1.bf16.msra.mxu0 0
    %2082 = vmatprep.subr.bf16.mxu0 0
    %2083 = vmatpush1.bf16.msra.mxu0 0
    %2084 = vmatprep.subr.bf16.mxu0 0
    %2085 = vmatpush1.bf16.msra.mxu0 0
    %2086 = vmatprep.subr.bf16.mxu0 0
    %2087 = vmatpush1.bf16.msra.mxu0 0
    %2088 = vmatprep.subr.bf16.mxu0 0
    %2089 = vmatpush1.bf16.msra.mxu0 0
    %2090 = vmatprep.subr.bf16.mxu0 0
    %2091 = vmatpush1.bf16.msra.mxu0 0
    %2092 = vmatprep.subr.bf16.mxu0 0
    %2093 = vmatpush1.bf16.msra.mxu0 0
    %2094 = vmatprep.subr.bf16.mxu0 0
    %2095 = vmatpush1.bf16.msra.mxu0 0
    %2096 = vmatprep.subr.bf16.mxu0 0
    %2097 = vmatpush1.bf16.msra.mxu0 0
    %2098 = vmatprep.mubr.bf16.mxu0 0
    %2099 = vmatmul.mubr.bf16.gmra.mrb[0].mxu0 %v2064
    %v2100 = vpop.f32.mrb[0].mxu0
    %v2101 = vadd.f32 %v2060, %v2100
    %v2102 = vpop.f32.mrb[0].mxu0
    %v2103 = vpop.f32.mrb[0].mxu0
    %v2104 = vadd.f32 %v2060, %v2103
    %v2105 = vpop.f32.mrb[0].mxu0
    %2106 = vdwg.mxu0
    %v2107 = vadd.f32 %v1994, %v2101
    %v2108 = vadd.f32 %v1995, %v2104
    %v2109 = vsel %vm588, %v2107, 0.0
    %2110 = vadd.xlane.f32.xlu0 %v2109
    %v2111 = vpop.xlane.xlu0 %2110
    %v2112 = vsel %vm588, %v2108, 0.0
    %2113 = vadd.xlane.f32.xlu0 %v2112
    %v2114 = vpop.xlane.xlu0 %2113
    %v2115 = vmul.f32 %v2111, %v1227
    %v2116 = vmul.f32 %v2114, %v1227
    %v2117 = vsub.f32 %v2107, %v2115
    %v2118 = vsub.f32 %v2108, %v2116
    %v2119 = vmul.f32 %v2117, %v2117
    %v2120 = vmul.f32 %v2118, %v2118
    %v2121 = vsel %vm588, %v2119, 0.0
    %2122 = vadd.xlane.f32.xlu0 %v2121
    %v2123 = vpop.xlane.xlu0 %2122
    %v2124 = vsel %vm588, %v2120, 0.0
    %2125 = vadd.xlane.f32.xlu0 %v2124
    %v2126 = vpop.xlane.xlu0 %2125
    %v2127 = vmul.f32 %v2123, %v1227
    %v2128 = vmul.f32 %v2126, %v1227
    %v2129 = vadd.f32 %v2127, 1e-05
    %v2130 = vadd.f32 %v2128, 1e-05
    %v2131 = vrsqrt.pop %v2129
    %v2132 = vrsqrt.pop %v2130
    %v2133 = vmul.f32 %v2117, %v2131
    %v2134 = vmul.f32 %v2118, %v2132
    %v2136 = vlaneseq
    %v2137 = vshrl.u32 %v2136, 7
    %v2138 = vsub.s32 0, %v2137
    %v2139 = vrot.slane %v577, %v2138
    %v2141 = vmul.f32 %v2133, %v2139
    %v2142 = vmul.f32 %v2134, %v2139
    %v2144 = vlaneseq
    %v2145 = vshrl.u32 %v2144, 7
    %v2146 = vsub.s32 0, %v2145
    %v2147 = vrot.slane %v578, %v2146
    %v2149 = vadd.f32 %v2141, %v2147
    %v2150 = vadd.f32 %v2142, %v2147
    %v2151 = vld [vmem:[%s47] sm:$0xff]
    %v2152 = vld [vmem:[%s47 + $0x8] sm:$0xff]
    %v2153 = vld [vmem:[%s47 + $0x10] sm:$0xff]
    %v2154 = vld [vmem:[%s47 + $0x18] sm:$0xff]
    %v2155 = vld [vmem:[%s49] sm:$0x1]
    %v2156 = vld [vmem:[#allocation25] sm:$0xff]
    %v2157 = vld [vmem:[#allocation25 + $0x8] sm:$0xff]
    %v2158 = vld [vmem:[#allocation25 + $0x10] sm:$0xff]
    %v2159 = vld [vmem:[#allocation25 + $0x18] sm:$0xff]
    %v2160 = vld [vmem:[#allocation26] sm:$0x1]
    %v2161 = vld [vmem:[#allocation28] sm:$0xff]
    %v2162 = vld [vmem:[#allocation28 + $0x8] sm:$0xff]
    %v2163 = vld [vmem:[#allocation28 + $0x10] sm:$0xff]
    %v2164 = vld [vmem:[#allocation28 + $0x18] sm:$0xff]
    %v2165 = vld [vmem:[#allocation29] sm:$0x1]
    %v2166 = vld [vmem:[#allocation31] sm:$0xff]
    %v2167 = vld [vmem:[#allocation31 + $0x8] sm:$0xff]
    %v2168 = vld [vmem:[#allocation31 + $0x10] sm:$0xff]
    %v2169 = vld [vmem:[#allocation31 + $0x18] sm:$0xff]
    %v2170 = vld [vmem:[#allocation32] sm:$0x1]
    %v2171 = vld [vmem:[%s63] sm:$0xff]
    %v2172 = vld [vmem:[%s63 + $0x8] sm:$0xff]
    %v2173 = vld [vmem:[%s63 + $0x10] sm:$0xff]
    %v2174 = vld [vmem:[%s63 + $0x18] sm:$0xff]
    %v2175 = vld [vmem:[%s65] sm:$0x1]
    %v2176 = vld [vmem:[%s67] sm:$0xff]
    %v2177 = vld [vmem:[%s67 + $0x8] sm:$0xff]
    %v2178 = vld [vmem:[%s67 + $0x10] sm:$0xff]
    %v2179 = vld [vmem:[%s67 + $0x18] sm:$0xff]
    %v2180 = vld [vmem:[%s67 + $0x20] sm:$0xff]
    %v2181 = vld [vmem:[%s67 + $0x28] sm:$0xff]
    %v2182 = vld [vmem:[%s67 + $0x30] sm:$0xff]
    %v2183 = vld [vmem:[%s67 + $0x38] sm:$0xff]
    %v2184 = vld [vmem:[%s69] sm:$0x1]
    %v2185 = vld [vmem:[%s71] sm:$0x1]
    %v2186 = vld [vmem:[%s73] sm:$0x1]
    %v2187 = vld [vmem:[%s75] sm:$0x1]
    %v2188 = vld [vmem:[%s77] sm:$0x1]
    %v2189 = vld [vmem:[%s79] sm:$0x1]
    %v2190 = vld [vmem:[%s81] sm:$0x1]
    %v2191 = vpack.c.bf16 %v2150, %v2149
    %v2192 = vpack.c.bf16 %v2152, %v2151
    %v2193 = vpack.c.bf16 %v2154, %v2153
    %v2195 = vlaneseq
    %v2196 = vshrl.u32 %v2195, 7
    %v2197 = vsub.s32 0, %v2196
    %v2198 = vrot.slane %v2155, %v2197
    %v2201 = vsel %vm588, %v2191, 0
    %2203 = vmatprep.subr.bf16.mxu0 0
    %2204 = vmatpush1.bf16.msra.mxu0 %v2192
    %2205 = vmatprep.subr.bf16.mxu0 0
    %2206 = vmatpush1.bf16.msra.mxu0 %v2193
    %2207 = vmatprep.subr.bf16.mxu0 0
    %2208 = vmatpush1.bf16.msra.mxu0 0
    %2209 = vmatprep.subr.bf16.mxu0 0
    %2210 = vmatpush1.bf16.msra.mxu0 0
    %2211 = vmatprep.subr.bf16.mxu0 0
    %2212 = vmatpush1.bf16.msra.mxu0 0
    %2213 = vmatprep.subr.bf16.mxu0 0
    %2214 = vmatpush1.bf16.msra.mxu0 0
    %2215 = vmatprep.subr.bf16.mxu0 0
    %2216 = vmatpush1.bf16.msra.mxu0 0
    %2217 = vmatprep.subr.bf16.mxu0 0
    %2218 = vmatpush1.bf16.msra.mxu0 0
    %2219 = vmatprep.subr.bf16.mxu0 0
    %2220 = vmatpush1.bf16.msra.mxu0 0
    %2221 = vmatprep.subr.bf16.mxu0 0
    %2222 = vmatpush1.bf16.msra.mxu0 0
    %2223 = vmatprep.subr.bf16.mxu0 0
    %2224 = vmatpush1.bf16.msra.mxu0 0
    %2225 = vmatprep.subr.bf16.mxu0 0
    %2226 = vmatpush1.bf16.msra.mxu0 0
    %2227 = vmatprep.subr.bf16.mxu0 0
    %2228 = vmatpush1.bf16.msra.mxu0 0
    %2229 = vmatprep.subr.bf16.mxu0 0
    %2230 = vmatpush1.bf16.msra.mxu0 0
    %2231 = vmatprep.subr.bf16.mxu0 0
    %2232 = vmatpush1.bf16.msra.mxu0 0
    %2233 = vmatprep.subr.bf16.mxu0 0
    %2234 = vmatpush1.bf16.msra.mxu0 0
    %2235 = vmatprep.mubr.bf16.mxu0 0
    %2236 = vmatmul.mubr.bf16.gmra.mrb[0].mxu0 %v2201
    %v2237 = vpop.f32.mrb[0].mxu0
    %v2238 = vadd.f32 %v2198, %v2237
    %v2239 = vpop.f32.mrb[0].mxu0
    %v2240 = vpop.f32.mrb[0].mxu0
    %v2241 = vadd.f32 %v2198, %v2240
    %v2242 = vpop.f32.mrb[0].mxu0
    %2243 = vdwg.mxu0
    %v2244 = vpack.c.bf16 %v2241, %v2238
    %2246 = vrot.lane.b32.xlu0 %v2244, 96
    %v2247 = vpop.permute.xlu0 %2246
    %v2249 = vsel %vm637, %v2244, 0
    %v2252 = vsel %vm637, %v2247, 0
    %2254 = vmatprep.subr.bf16.mxu0 0
    %2255 = vmatpush1.bf16.xpose.msra.mxu0 %v2252
    %2256 = vmatprep.subr.bf16.mxu0 0
    %2257 = vmatpush1.bf16.xpose.msra.mxu0 0
    %2258 = vmatprep.subr.bf16.mxu0 0
    %2259 = vmatpush1.bf16.xpose.msra.mxu0 0
    %2260 = vmatprep.subr.bf16.mxu0 0
    %2261 = vmatpush1.bf16.xpose.msra.mxu0 0
    %2262 = vmatprep.subr.bf16.mxu0 0
    %2263 = vmatpush1.bf16.xpose.msra.mxu0 0
    %2264 = vmatprep.subr.bf16.mxu0 0
    %2265 = vmatpush1.bf16.xpose.msra.mxu0 0
    %2266 = vmatprep.subr.bf16.mxu0 0
    %2267 = vmatpush1.bf16.xpose.msra.mxu0 0
    %2268 = vmatprep.subr.bf16.mxu0 0
    %2269 = vmatpush1.bf16.xpose.msra.mxu0 0
    %2270 = vmatprep.subr.bf16.mxu0 0
    %2271 = vmatpush1.bf16.xpose.msra.mxu0 0
    %2272 = vmatprep.subr.bf16.mxu0 0
    %2273 = vmatpush1.bf16.xpose.msra.mxu0 0
    %2274 = vmatprep.subr.bf16.mxu0 0
    %2275 = vmatpush1.bf16.xpose.msra.mxu0 0
    %2276 = vmatprep.subr.bf16.mxu0 0
    %2277 = vmatpush1.bf16.xpose.msra.mxu0 0
    %2278 = vmatprep.subr.bf16.mxu0 0
    %2279 = vmatpush1.bf16.xpose.msra.mxu0 0
    %2280 = vmatprep.subr.bf16.mxu0 0
    %2281 = vmatpush1.bf16.xpose.msra.mxu0 0
    %2282 = vmatprep.subr.bf16.mxu0 0
    %2283 = vmatpush1.bf16.xpose.msra.mxu0 0
    %2284 = vmatprep.subr.bf16.mxu0 0
    %2285 = vmatpush1.bf16.xpose.msra.mxu0 0
    %2286 = vmatprep.mubr.bf16.mxu0 0
    %2287 = vmatmul.mubr.bf16.gmra.mrb[0].mxu0 %v2249
    %v2288 = vpop.f32.mrb[0].mxu0
    %v2289 = vadd.f32 0.0, %v2288
    %v2290 = vpop.f32.mrb[0].mxu0
    %v2291 = vpop.f32.mrb[0].mxu0
    %v2292 = vadd.f32 0.0, %v2291
    %v2293 = vpop.f32.mrb[0].mxu0
    %2294 = vdwg.mxu0
    %v2295 = vmul.f32 %v2289, 0.35355338
    %v2296 = vmul.f32 %v2292, 0.35355338
    %v2297 = vadd.f32 %v2295, %v430
    %v2298 = vadd.f32 %v2296, %v431
    %v2299 = vsel %vm689, %v2297, -inf
    %2300 = vmax.xlane.f32.xlu0 %v2299
    %v2301 = vpop.xlane.xlu0 %2300
    %v2302 = vsel %vm689, %v2298, -inf
    %2303 = vmax.xlane.f32.xlu0 %v2302
    %v2304 = vpop.xlane.xlu0 %2303
    %v2305 = vsub.f32 %v2297, %v2301
    %v2306 = vsub.f32 %v2298, %v2304
    %v2307 = vmul.f32 %v2305, 1.442695
    %v2308 = vpow.pop %v2307
    %v2309 = vmul.f32 %v2306, 1.442695
    %v2310 = vpow.pop %v2309
    %v2311 = vsel %vm689, %v2308, 0.0
    %2312 = vadd.xlane.f32.xlu0 %v2311
    %v2313 = vpop.xlane.xlu0 %2312
    %v2314 = vsel %vm689, %v2310, 0.0
    %2315 = vadd.xlane.f32.xlu0 %v2314
    %v2316 = vpop.xlane.xlu0 %2315
    %v2317 = vrcp.pop %v2313
    %v2318 = vmul.f32 %v2308, %v2317
    %v2319 = vrcp.pop %v2316
    %v2320 = vmul.f32 %v2310, %v2319
    %v2321 = vpack.c.bf16 %v2320, %v2318
    %2322 = vrot.lane.b32.xlu0 %v2244, 64
    %v2323 = vpop.permute.xlu0 %2322
    %v2326 = vsel %vm689, %v2321, 0
    %2328 = vmatprep.subr.bf16.mxu0 0
    %2329 = vmatpush1.bf16.msra.mxu0 %v2323
    %2330 = vmatprep.subr.bf16.mxu0 0
    %2331 = vmatpush1.bf16.msra.mxu0 0
    %2332 = vmatprep.subr.bf16.mxu0 0
    %2333 = vmatpush1.bf16.msra.mxu0 0
    %2334 = vmatprep.subr.bf16.mxu0 0
    %2335 = vmatpush1.bf16.msra.mxu0 0
    %2336 = vmatprep.subr.bf16.mxu0 0
    %2337 = vmatpush1.bf16.msra.mxu0 0
    %2338 = vmatprep.subr.bf16.mxu0 0
    %2339 = vmatpush1.bf16.msra.mxu0 0
    %2340 = vmatprep.subr.bf16.mxu0 0
    %2341 = vmatpush1.bf16.msra.mxu0 0
    %2342 = vmatprep.subr.bf16.mxu0 0
    %2343 = vmatpush1.bf16.msra.mxu0 0
    %2344 = vmatprep.subr.bf16.mxu0 0
    %2345 = vmatpush1.bf16.msra.mxu0 0
    %2346 = vmatprep.subr.bf16.mxu0 0
    %2347 = vmatpush1.bf16.msra.mxu0 0
    %2348 = vmatprep.subr.bf16.mxu0 0
    %2349 = vmatpush1.bf16.msra.mxu0 0
    %2350 = vmatprep.subr.bf16.mxu0 0
    %2351 = vmatpush1.bf16.msra.mxu0 0
    %2352 = vmatprep.subr.bf16.mxu0 0
    %2353 = vmatpush1.bf16.msra.mxu0 0
    %2354 = vmatprep.subr.bf16.mxu0 0
    %2355 = vmatpush1.bf16.msra.mxu0 0
    %2356 = vmatprep.subr.bf16.mxu0 0
    %2357 = vmatpush1.bf16.msra.mxu0 0
    %2358 = vmatprep.subr.bf16.mxu0 0
    %2359 = vmatpush1.bf16.msra.mxu0 0
    %2360 = vmatprep.mubr.bf16.mxu0 0
    %2361 = vmatmul.mubr.bf16.gmra.mrb[0].mxu0 %v2326
    %v2362 = vpop.f32.mrb[0].mxu0
    %v2363 = vadd.f32 0.0, %v2362
    %v2364 = vpop.f32.mrb[0].mxu0
    %v2365 = vpop.f32.mrb[0].mxu0
    %v2366 = vadd.f32 0.0, %v2365
    %v2367 = vpop.f32.mrb[0].mxu0
    %2368 = vdwg.mxu0
    %2369 = vrot.lane.b32.xlu0 %v2244, 120
    %v2370 = vpop.permute.xlu0 %2369
    %2371 = vrot.lane.b32.xlu0 %v2244, 88
    %v2372 = vpop.permute.xlu0 %2371
    %v2374 = vsel %vm637, %v2370, 0
    %v2377 = vsel %vm637, %v2372, 0
    %2379 = vmatprep.subr.bf16.mxu0 0
    %2380 = vmatpush1.bf16.xpose.msra.mxu0 %v2377
    %2381 = vmatprep.subr.bf16.mxu0 0
    %2382 = vmatpush1.bf16.xpose.msra.mxu0 0
    %2383 = vmatprep.subr.bf16.mxu0 0
    %2384 = vmatpush1.bf16.xpose.msra.mxu0 0
    %2385 = vmatprep.subr.bf16.mxu0 0
    %2386 = vmatpush1.bf16.xpose.msra.mxu0 0
    %2387 = vmatprep.subr.bf16.mxu0 0
    %2388 = vmatpush1.bf16.xpose.msra.mxu0 0
    %2389 = vmatprep.subr.bf16.mxu0 0
    %2390 = vmatpush1.bf16.xpose.msra.mxu0 0
    %2391 = vmatprep.subr.bf16.mxu0 0
    %2392 = vmatpush1.bf16.xpose.msra.mxu0 0
    %2393 = vmatprep.subr.bf16.mxu0 0
    %2394 = vmatpush1.bf16.xpose.msra.mxu0 0
    %2395 = vmatprep.subr.bf16.mxu0 0
    %2396 = vmatpush1.bf16.xpose.msra.mxu0 0
    %2397 = vmatprep.subr.bf16.mxu0 0
    %2398 = vmatpush1.bf16.xpose.msra.mxu0 0
    %2399 = vmatprep.subr.bf16.mxu0 0
    %2400 = vmatpush1.bf16.xpose.msra.mxu0 0
    %2401 = vmatprep.subr.bf16.mxu0 0
    %2402 = vmatpush1.bf16.xpose.msra.mxu0 0
    %2403 = vmatprep.subr.bf16.mxu0 0
    %2404 = vmatpush1.bf16.xpose.msra.mxu0 0
    %2405 = vmatprep.subr.bf16.mxu0 0
    %2406 = vmatpush1.bf16.xpose.msra.mxu0 0
    %2407 = vmatprep.subr.bf16.mxu0 0
    %2408 = vmatpush1.bf16.xpose.msra.mxu0 0
    %2409 = vmatprep.subr.bf16.mxu0 0
    %2410 = vmatpush1.bf16.xpose.msra.mxu0 0
    %2411 = vmatprep.mubr.bf16.mxu0 0
    %2412 = vmatmul.mubr.bf16.gmra.mrb[0].mxu0 %v2374
    %v2413 = vpop.f32.mrb[0].mxu0
    %v2414 = vadd.f32 0.0, %v2413
    %v2415 = vpop.f32.mrb[0].mxu0
    %v2416 = vpop.f32.mrb[0].mxu0
    %v2417 = vadd.f32 0.0, %v2416
    %v2418 = vpop.f32.mrb[0].mxu0
    %2419 = vdwg.mxu0
    %v2420 = vmul.f32 %v2414, 0.35355338
    %v2421 = vmul.f32 %v2417, 0.35355338
    %v2422 = vadd.f32 %v2420, %v430
    %v2423 = vadd.f32 %v2421, %v431
    %v2424 = vsel %vm689, %v2422, -inf
    %2425 = vmax.xlane.f32.xlu0 %v2424
    %v2426 = vpop.xlane.xlu0 %2425
    %v2427 = vsel %vm689, %v2423, -inf
    %2428 = vmax.xlane.f32.xlu0 %v2427
    %v2429 = vpop.xlane.xlu0 %2428
    %v2430 = vsub.f32 %v2422, %v2426
    %v2431 = vsub.f32 %v2423, %v2429
    %v2432 = vmul.f32 %v2430, 1.442695
    %v2433 = vpow.pop %v2432
    %v2434 = vmul.f32 %v2431, 1.442695
    %v2435 = vpow.pop %v2434
    %v2436 = vsel %vm689, %v2433, 0.0
    %2437 = vadd.xlane.f32.xlu0 %v2436
    %v2438 = vpop.xlane.xlu0 %2437
    %v2439 = vsel %vm689, %v2435, 0.0
    %2440 = vadd.xlane.f32.xlu0 %v2439
    %v2441 = vpop.xlane.xlu0 %2440
    %v2442 = vrcp.pop %v2438
    %v2443 = vmul.f32 %v2433, %v2442
    %v2444 = vrcp.pop %v2441
    %v2445 = vmul.f32 %v2435, %v2444
    %v2446 = vpack.c.bf16 %v2445, %v2443
    %2447 = vrot.lane.b32.xlu0 %v2244, 56
    %v2448 = vpop.permute.xlu0 %2447
    %v2451 = vsel %vm689, %v2446, 0
    %2453 = vmatprep.subr.bf16.mxu0 0
    %2454 = vmatpush1.bf16.msra.mxu0 %v2448
    %2455 = vmatprep.subr.bf16.mxu0 0
    %2456 = vmatpush1.bf16.msra.mxu0 0
    %2457 = vmatprep.subr.bf16.mxu0 0
    %2458 = vmatpush1.bf16.msra.mxu0 0
    %2459 = vmatprep.subr.bf16.mxu0 0
    %2460 = vmatpush1.bf16.msra.mxu0 0
    %2461 = vmatprep.subr.bf16.mxu0 0
    %2462 = vmatpush1.bf16.msra.mxu0 0
    %2463 = vmatprep.subr.bf16.mxu0 0
    %2464 = vmatpush1.bf16.msra.mxu0 0
    %2465 = vmatprep.subr.bf16.mxu0 0
    %2466 = vmatpush1.bf16.msra.mxu0 0
    %2467 = vmatprep.subr.bf16.mxu0 0
    %2468 = vmatpush1.bf16.msra.mxu0 0
    %2469 = vmatprep.subr.bf16.mxu0 0
    %2470 = vmatpush1.bf16.msra.mxu0 0
    %2471 = vmatprep.subr.bf16.mxu0 0
    %2472 = vmatpush1.bf16.msra.mxu0 0
    %2473 = vmatprep.subr.bf16.mxu0 0
    %2474 = vmatpush1.bf16.msra.mxu0 0
    %2475 = vmatprep.subr.bf16.mxu0 0
    %2476 = vmatpush1.bf16.msra.mxu0 0
    %2477 = vmatprep.subr.bf16.mxu0 0
    %2478 = vmatpush1.bf16.msra.mxu0 0
    %2479 = vmatprep.subr.bf16.mxu0 0
    %2480 = vmatpush1.bf16.msra.mxu0 0
    %2481 = vmatprep.subr.bf16.mxu0 0
    %2482 = vmatpush1.bf16.msra.mxu0 0
    %2483 = vmatprep.subr.bf16.mxu0 0
    %2484 = vmatpush1.bf16.msra.mxu0 0
    %2485 = vmatprep.mubr.bf16.mxu0 0
    %2486 = vmatmul.mubr.bf16.gmra.mrb[0].mxu0 %v2451
    %v2487 = vpop.f32.mrb[0].mxu0
    %v2488 = vadd.f32 0.0, %v2487
    %v2489 = vpop.f32.mrb[0].mxu0
    %v2490 = vpop.f32.mrb[0].mxu0
    %v2491 = vadd.f32 0.0, %v2490
    %v2492 = vpop.f32.mrb[0].mxu0
    %2493 = vdwg.mxu0
    %2494 = vrot.lane.b32.xlu0 %v2244, 112
    %v2495 = vpop.permute.xlu0 %2494
    %2496 = vrot.lane.b32.xlu0 %v2244, 80
    %v2497 = vpop.permute.xlu0 %2496
    %v2499 = vsel %vm637, %v2495, 0
    %v2502 = vsel %vm637, %v2497, 0
    %2504 = vmatprep.subr.bf16.mxu0 0
    %2505 = vmatpush1.bf16.xpose.msra.mxu0 %v2502
    %2506 = vmatprep.subr.bf16.mxu0 0
    %2507 = vmatpush1.bf16.xpose.msra.mxu0 0
    %2508 = vmatprep.subr.bf16.mxu0 0
    %2509 = vmatpush1.bf16.xpose.msra.mxu0 0
    %2510 = vmatprep.subr.bf16.mxu0 0
    %2511 = vmatpush1.bf16.xpose.msra.mxu0 0
    %2512 = vmatprep.subr.bf16.mxu0 0
    %2513 = vmatpush1.bf16.xpose.msra.mxu0 0
    %2514 = vmatprep.subr.bf16.mxu0 0
    %2515 = vmatpush1.bf16.xpose.msra.mxu0 0
    %2516 = vmatprep.subr.bf16.mxu0 0
    %2517 = vmatpush1.bf16.xpose.msra.mxu0 0
    %2518 = vmatprep.subr.bf16.mxu0 0
    %2519 = vmatpush1.bf16.xpose.msra.mxu0 0
    %2520 = vmatprep.subr.bf16.mxu0 0
    %2521 = vmatpush1.bf16.xpose.msra.mxu0 0
    %2522 = vmatprep.subr.bf16.mxu0 0
    %2523 = vmatpush1.bf16.xpose.msra.mxu0 0
    %2524 = vmatprep.subr.bf16.mxu0 0
    %2525 = vmatpush1.bf16.xpose.msra.mxu0 0
    %2526 = vmatprep.subr.bf16.mxu0 0
    %2527 = vmatpush1.bf16.xpose.msra.mxu0 0
    %2528 = vmatprep.subr.bf16.mxu0 0
    %2529 = vmatpush1.bf16.xpose.msra.mxu0 0
    %2530 = vmatprep.subr.bf16.mxu0 0
    %2531 = vmatpush1.bf16.xpose.msra.mxu0 0
    %2532 = vmatprep.subr.bf16.mxu0 0
    %2533 = vmatpush1.bf16.xpose.msra.mxu0 0
    %2534 = vmatprep.subr.bf16.mxu0 0
    %2535 = vmatpush1.bf16.xpose.msra.mxu0 0
    %2536 = vmatprep.mubr.bf16.mxu0 0
    %2537 = vmatmul.mubr.bf16.gmra.mrb[0].mxu0 %v2499
    %v2538 = vpop.f32.mrb[0].mxu0
    %v2539 = vadd.f32 0.0, %v2538
    %v2540 = vpop.f32.mrb[0].mxu0
    %v2541 = vpop.f32.mrb[0].mxu0
    %v2542 = vadd.f32 0.0, %v2541
    %v2543 = vpop.f32.mrb[0].mxu0
    %2544 = vdwg.mxu0
    %v2545 = vmul.f32 %v2539, 0.35355338
    %v2546 = vmul.f32 %v2542, 0.35355338
    %v2547 = vadd.f32 %v2545, %v430
    %v2548 = vadd.f32 %v2546, %v431
    %v2549 = vsel %vm689, %v2547, -inf
    %2550 = vmax.xlane.f32.xlu0 %v2549
    %v2551 = vpop.xlane.xlu0 %2550
    %v2552 = vsel %vm689, %v2548, -inf
    %2553 = vmax.xlane.f32.xlu0 %v2552
    %v2554 = vpop.xlane.xlu0 %2553
    %v2555 = vsub.f32 %v2547, %v2551
    %v2556 = vsub.f32 %v2548, %v2554
    %v2557 = vmul.f32 %v2555, 1.442695
    %v2558 = vpow.pop %v2557
    %v2559 = vmul.f32 %v2556, 1.442695
    %v2560 = vpow.pop %v2559
    %v2561 = vsel %vm689, %v2558, 0.0
    %2562 = vadd.xlane.f32.xlu0 %v2561
    %v2563 = vpop.xlane.xlu0 %2562
    %v2564 = vsel %vm689, %v2560, 0.0
    %2565 = vadd.xlane.f32.xlu0 %v2564
    %v2566 = vpop.xlane.xlu0 %2565
    %v2567 = vrcp.pop %v2563
    %v2568 = vmul.f32 %v2558, %v2567
    %v2569 = vrcp.pop %v2566
    %v2570 = vmul.f32 %v2560, %v2569
    %v2571 = vpack.c.bf16 %v2570, %v2568
    %2572 = vrot.lane.b32.xlu0 %v2244, 48
    %v2573 = vpop.permute.xlu0 %2572
    %v2576 = vsel %vm689, %v2571, 0
    %2578 = vmatprep.subr.bf16.mxu0 0
    %2579 = vmatpush1.bf16.msra.mxu0 %v2573
    %2580 = vmatprep.subr.bf16.mxu0 0
    %2581 = vmatpush1.bf16.msra.mxu0 0
    %2582 = vmatprep.subr.bf16.mxu0 0
    %2583 = vmatpush1.bf16.msra.mxu0 0
    %2584 = vmatprep.subr.bf16.mxu0 0
    %2585 = vmatpush1.bf16.msra.mxu0 0
    %2586 = vmatprep.subr.bf16.mxu0 0
    %2587 = vmatpush1.bf16.msra.mxu0 0
    %2588 = vmatprep.subr.bf16.mxu0 0
    %2589 = vmatpush1.bf16.msra.mxu0 0
    %2590 = vmatprep.subr.bf16.mxu0 0
    %2591 = vmatpush1.bf16.msra.mxu0 0
    %2592 = vmatprep.subr.bf16.mxu0 0
    %2593 = vmatpush1.bf16.msra.mxu0 0
    %2594 = vmatprep.subr.bf16.mxu0 0
    %2595 = vmatpush1.bf16.msra.mxu0 0
    %2596 = vmatprep.subr.bf16.mxu0 0
    %2597 = vmatpush1.bf16.msra.mxu0 0
    %2598 = vmatprep.subr.bf16.mxu0 0
    %2599 = vmatpush1.bf16.msra.mxu0 0
    %2600 = vmatprep.subr.bf16.mxu0 0
    %2601 = vmatpush1.bf16.msra.mxu0 0
    %2602 = vmatprep.subr.bf16.mxu0 0
    %2603 = vmatpush1.bf16.msra.mxu0 0
    %2604 = vmatprep.subr.bf16.mxu0 0
    %2605 = vmatpush1.bf16.msra.mxu0 0
    %2606 = vmatprep.subr.bf16.mxu0 0
    %2607 = vmatpush1.bf16.msra.mxu0 0
    %2608 = vmatprep.subr.bf16.mxu0 0
    %2609 = vmatpush1.bf16.msra.mxu0 0
    %2610 = vmatprep.mubr.bf16.mxu0 0
    %2611 = vmatmul.mubr.bf16.gmra.mrb[0].mxu0 %v2576
    %v2612 = vpop.f32.mrb[0].mxu0
    %v2613 = vadd.f32 0.0, %v2612
    %v2614 = vpop.f32.mrb[0].mxu0
    %v2615 = vpop.f32.mrb[0].mxu0
    %v2616 = vadd.f32 0.0, %v2615
    %v2617 = vpop.f32.mrb[0].mxu0
    %2618 = vdwg.mxu0
    %2619 = vrot.lane.b32.xlu0 %v2244, 104
    %v2620 = vpop.permute.xlu0 %2619
    %2621 = vrot.lane.b32.xlu0 %v2244, 72
    %v2622 = vpop.permute.xlu0 %2621
    %v2624 = vsel %vm637, %v2620, 0
    %v2627 = vsel %vm637, %v2622, 0
    %2629 = vmatprep.subr.bf16.mxu0 0
    %2630 = vmatpush1.bf16.xpose.msra.mxu0 %v2627
    %2631 = vmatprep.subr.bf16.mxu0 0
    %2632 = vmatpush1.bf16.xpose.msra.mxu0 0
    %2633 = vmatprep.subr.bf16.mxu0 0
    %2634 = vmatpush1.bf16.xpose.msra.mxu0 0
    %2635 = vmatprep.subr.bf16.mxu0 0
    %2636 = vmatpush1.bf16.xpose.msra.mxu0 0
    %2637 = vmatprep.subr.bf16.mxu0 0
    %2638 = vmatpush1.bf16.xpose.msra.mxu0 0
    %2639 = vmatprep.subr.bf16.mxu0 0
    %2640 = vmatpush1.bf16.xpose.msra.mxu0 0
    %2641 = vmatprep.subr.bf16.mxu0 0
    %2642 = vmatpush1.bf16.xpose.msra.mxu0 0
    %2643 = vmatprep.subr.bf16.mxu0 0
    %2644 = vmatpush1.bf16.xpose.msra.mxu0 0
    %2645 = vmatprep.subr.bf16.mxu0 0
    %2646 = vmatpush1.bf16.xpose.msra.mxu0 0
    %2647 = vmatprep.subr.bf16.mxu0 0
    %2648 = vmatpush1.bf16.xpose.msra.mxu0 0
    %2649 = vmatprep.subr.bf16.mxu0 0
    %2650 = vmatpush1.bf16.xpose.msra.mxu0 0
    %2651 = vmatprep.subr.bf16.mxu0 0
    %2652 = vmatpush1.bf16.xpose.msra.mxu0 0
    %2653 = vmatprep.subr.bf16.mxu0 0
    %2654 = vmatpush1.bf16.xpose.msra.mxu0 0
    %2655 = vmatprep.subr.bf16.mxu0 0
    %2656 = vmatpush1.bf16.xpose.msra.mxu0 0
    %2657 = vmatprep.subr.bf16.mxu0 0
    %2658 = vmatpush1.bf16.xpose.msra.mxu0 0
    %2659 = vmatprep.subr.bf16.mxu0 0
    %2660 = vmatpush1.bf16.xpose.msra.mxu0 0
    %2661 = vmatprep.mubr.bf16.mxu0 0
    %2662 = vmatmul.mubr.bf16.gmra.mrb[0].mxu0 %v2624
    %v2663 = vpop.f32.mrb[0].mxu0
    %v2664 = vadd.f32 0.0, %v2663
    %v2665 = vpop.f32.mrb[0].mxu0
    %v2666 = vpop.f32.mrb[0].mxu0
    %v2667 = vadd.f32 0.0, %v2666
    %v2668 = vpop.f32.mrb[0].mxu0
    %2669 = vdwg.mxu0
    %v2670 = vmul.f32 %v2664, 0.35355338
    %v2671 = vmul.f32 %v2667, 0.35355338
    %v2672 = vadd.f32 %v2670, %v430
    %v2673 = vadd.f32 %v2671, %v431
    %v2674 = vsel %vm689, %v2672, -inf
    %2675 = vmax.xlane.f32.xlu0 %v2674
    %v2676 = vpop.xlane.xlu0 %2675
    %v2677 = vsel %vm689, %v2673, -inf
    %2678 = vmax.xlane.f32.xlu0 %v2677
    %v2679 = vpop.xlane.xlu0 %2678
    %v2680 = vsub.f32 %v2672, %v2676
    %v2681 = vsub.f32 %v2673, %v2679
    %v2682 = vmul.f32 %v2680, 1.442695
    %v2683 = vpow.pop %v2682
    %v2684 = vmul.f32 %v2681, 1.442695
    %v2685 = vpow.pop %v2684
    %v2686 = vsel %vm689, %v2683, 0.0
    %2687 = vadd.xlane.f32.xlu0 %v2686
    %v2688 = vpop.xlane.xlu0 %2687
    %v2689 = vsel %vm689, %v2685, 0.0
    %2690 = vadd.xlane.f32.xlu0 %v2689
    %v2691 = vpop.xlane.xlu0 %2690
    %v2692 = vrcp.pop %v2688
    %v2693 = vmul.f32 %v2683, %v2692
    %v2694 = vrcp.pop %v2691
    %v2695 = vmul.f32 %v2685, %v2694
    %v2696 = vpack.c.bf16 %v2695, %v2693
    %2697 = vrot.lane.b32.xlu0 %v2244, 40
    %v2698 = vpop.permute.xlu0 %2697
    %v2701 = vsel %vm689, %v2696, 0
    %2703 = vmatprep.subr.bf16.mxu0 0
    %2704 = vmatpush1.bf16.msra.mxu0 %v2698
    %2705 = vmatprep.subr.bf16.mxu0 0
    %2706 = vmatpush1.bf16.msra.mxu0 0
    %2707 = vmatprep.subr.bf16.mxu0 0
    %2708 = vmatpush1.bf16.msra.mxu0 0
    %2709 = vmatprep.subr.bf16.mxu0 0
    %2710 = vmatpush1.bf16.msra.mxu0 0
    %2711 = vmatprep.subr.bf16.mxu0 0
    %2712 = vmatpush1.bf16.msra.mxu0 0
    %2713 = vmatprep.subr.bf16.mxu0 0
    %2714 = vmatpush1.bf16.msra.mxu0 0
    %2715 = vmatprep.subr.bf16.mxu0 0
    %2716 = vmatpush1.bf16.msra.mxu0 0
    %2717 = vmatprep.subr.bf16.mxu0 0
    %2718 = vmatpush1.bf16.msra.mxu0 0
    %2719 = vmatprep.subr.bf16.mxu0 0
    %2720 = vmatpush1.bf16.msra.mxu0 0
    %2721 = vmatprep.subr.bf16.mxu0 0
    %2722 = vmatpush1.bf16.msra.mxu0 0
    %2723 = vmatprep.subr.bf16.mxu0 0
    %2724 = vmatpush1.bf16.msra.mxu0 0
    %2725 = vmatprep.subr.bf16.mxu0 0
    %2726 = vmatpush1.bf16.msra.mxu0 0
    %2727 = vmatprep.subr.bf16.mxu0 0
    %2728 = vmatpush1.bf16.msra.mxu0 0
    %2729 = vmatprep.subr.bf16.mxu0 0
    %2730 = vmatpush1.bf16.msra.mxu0 0
    %2731 = vmatprep.subr.bf16.mxu0 0
    %2732 = vmatpush1.bf16.msra.mxu0 0
    %2733 = vmatprep.subr.bf16.mxu0 0
    %2734 = vmatpush1.bf16.msra.mxu0 0
    %2735 = vmatprep.mubr.bf16.mxu0 0
    %2736 = vmatmul.mubr.bf16.gmra.mrb[0].mxu0 %v2701
    %v2737 = vpop.f32.mrb[0].mxu0
    %v2738 = vadd.f32 0.0, %v2737
    %v2739 = vpop.f32.mrb[0].mxu0
    %v2740 = vpop.f32.mrb[0].mxu0
    %v2741 = vadd.f32 0.0, %v2740
    %v2742 = vpop.f32.mrb[0].mxu0
    %2743 = vdwg.mxu0
    %2746 = vrot.lane.b32.xlu0 %v2488, 8
    %v2747 = vpop.permute.xlu0 %2746
    %2748 = vrot.lane.b32.xlu0 %v2491, 8
    %v2749 = vpop.permute.xlu0 %2748
    %2754 = vrot.lane.b32.xlu0 %v2613, 16
    %v2755 = vpop.permute.xlu0 %2754
    %2756 = vrot.lane.b32.xlu0 %v2616, 16
    %v2757 = vpop.permute.xlu0 %2756
    %2762 = vrot.lane.b32.xlu0 %v2738, 24
    %v2763 = vpop.permute.xlu0 %2762
    %2764 = vrot.lane.b32.xlu0 %v2741, 24
    %v2765 = vpop.permute.xlu0 %2764
    %v2768 = vsel %vm637, %v2363, %v2747
    %v2769 = vsel %vm637, %v2366, %v2749
    %v2770 = vsel %vm689, %v2768, %v2755
    %v2771 = vsel %vm689, %v2769, %v2757
    %v2772 = vsel %vm1163, %v2770, %v2763
    %v2773 = vsel %vm1163, %v2771, %v2765
    %v2774 = vpack.c.bf16 %v2773, %v2772
    %v2775 = vpack.c.bf16 %v2157, %v2156
    %v2776 = vpack.c.bf16 %v2159, %v2158
    %v2778 = vlaneseq
    %v2779 = vshrl.u32 %v2778, 7
    %v2780 = vsub.s32 0, %v2779
    %v2781 = vrot.slane %v2160, %v2780
    %v2784 = vsel %vm588, %v2774, 0
    %2786 = vmatprep.subr.bf16.mxu0 0
    %2787 = vmatpush1.bf16.msra.mxu0 %v2775
    %2788 = vmatprep.subr.bf16.mxu0 0
    %2789 = vmatpush1.bf16.msra.mxu0 %v2776
    %2790 = vmatprep.subr.bf16.mxu0 0
    %2791 = vmatpush1.bf16.msra.mxu0 0
    %2792 = vmatprep.subr.bf16.mxu0 0
    %2793 = vmatpush1.bf16.msra.mxu0 0
    %2794 = vmatprep.subr.bf16.mxu0 0
    %2795 = vmatpush1.bf16.msra.mxu0 0
    %2796 = vmatprep.subr.bf16.mxu0 0
    %2797 = vmatpush1.bf16.msra.mxu0 0
    %2798 = vmatprep.subr.bf16.mxu0 0
    %2799 = vmatpush1.bf16.msra.mxu0 0
    %2800 = vmatprep.subr.bf16.mxu0 0
    %2801 = vmatpush1.bf16.msra.mxu0 0
    %2802 = vmatprep.subr.bf16.mxu0 0
    %2803 = vmatpush1.bf16.msra.mxu0 0
    %2804 = vmatprep.subr.bf16.mxu0 0
    %2805 = vmatpush1.bf16.msra.mxu0 0
    %2806 = vmatprep.subr.bf16.mxu0 0
    %2807 = vmatpush1.bf16.msra.mxu0 0
    %2808 = vmatprep.subr.bf16.mxu0 0
    %2809 = vmatpush1.bf16.msra.mxu0 0
    %2810 = vmatprep.subr.bf16.mxu0 0
    %2811 = vmatpush1.bf16.msra.mxu0 0
    %2812 = vmatprep.subr.bf16.mxu0 0
    %2813 = vmatpush1.bf16.msra.mxu0 0
    %2814 = vmatprep.subr.bf16.mxu0 0
    %2815 = vmatpush1.bf16.msra.mxu0 0
    %2816 = vmatprep.subr.bf16.mxu0 0
    %2817 = vmatpush1.bf16.msra.mxu0 0
    %2818 = vmatprep.mubr.bf16.mxu0 0
    %2819 = vmatmul.mubr.bf16.gmra.mrb[0].mxu0 %v2784
    %v2820 = vpop.f32.mrb[0].mxu0
    %v2821 = vadd.f32 %v2781, %v2820
    %v2822 = vpop.f32.mrb[0].mxu0
    %v2823 = vpop.f32.mrb[0].mxu0
    %v2824 = vadd.f32 %v2781, %v2823
    %v2825 = vpop.f32.mrb[0].mxu0
    %2826 = vdwg.mxu0
    %v2827 = vadd.f32 %v2149, %v2821
    %v2828 = vadd.f32 %v2150, %v2824
    %v2829 = vsel %vm588, %v2827, 0.0
    %2830 = vadd.xlane.f32.xlu0 %v2829
    %v2831 = vpop.xlane.xlu0 %2830
    %v2832 = vsel %vm588, %v2828, 0.0
    %2833 = vadd.xlane.f32.xlu0 %v2832
    %v2834 = vpop.xlane.xlu0 %2833
    %v2835 = vmul.f32 %v2831, %v1227
    %v2836 = vmul.f32 %v2834, %v1227
    %v2837 = vsub.f32 %v2827, %v2835
    %v2838 = vsub.f32 %v2828, %v2836
    %v2839 = vmul.f32 %v2837, %v2837
    %v2840 = vmul.f32 %v2838, %v2838
    %v2841 = vsel %vm588, %v2839, 0.0
    %2842 = vadd.xlane.f32.xlu0 %v2841
    %v2843 = vpop.xlane.xlu0 %2842
    %v2844 = vsel %vm588, %v2840, 0.0
    %2845 = vadd.xlane.f32.xlu0 %v2844
    %v2846 = vpop.xlane.xlu0 %2845
    %v2847 = vmul.f32 %v2843, %v1227
    %v2848 = vmul.f32 %v2846, %v1227
    %v2849 = vadd.f32 %v2847, 1e-05
    %v2850 = vadd.f32 %v2848, 1e-05
    %v2851 = vrsqrt.pop %v2849
    %v2852 = vrsqrt.pop %v2850
    %v2853 = vmul.f32 %v2837, %v2851
    %v2854 = vmul.f32 %v2838, %v2852
    %v2856 = vlaneseq
    %v2857 = vshrl.u32 %v2856, 7
    %v2858 = vsub.s32 0, %v2857
    %v2859 = vrot.slane %v2185, %v2858
    %v2861 = vmul.f32 %v2853, %v2859
    %v2862 = vmul.f32 %v2854, %v2859
    %v2864 = vlaneseq
    %v2865 = vshrl.u32 %v2864, 7
    %v2866 = vsub.s32 0, %v2865
    %v2867 = vrot.slane %v2186, %v2866
    %v2869 = vadd.f32 %v2861, %v2867
    %v2870 = vadd.f32 %v2862, %v2867
    %v2871 = vpack.c.bf16 %v2870, %v2869
    %v2872 = vpack.c.bf16 %v2162, %v2161
    %v2873 = vpack.c.bf16 %v2164, %v2163
    %v2875 = vlaneseq
    %v2876 = vshrl.u32 %v2875, 7
    %v2877 = vsub.s32 0, %v2876
    %v2878 = vrot.slane %v2165, %v2877
    %v2881 = vsel %vm588, %v2871, 0
    %2883 = vmatprep.subr.bf16.mxu0 0
    %2884 = vmatpush1.bf16.msra.mxu0 %v2872
    %2885 = vmatprep.subr.bf16.mxu0 0
    %2886 = vmatpush1.bf16.msra.mxu0 %v2873
    %2887 = vmatprep.subr.bf16.mxu0 0
    %2888 = vmatpush1.bf16.msra.mxu0 0
    %2889 = vmatprep.subr.bf16.mxu0 0
    %2890 = vmatpush1.bf16.msra.mxu0 0
    %2891 = vmatprep.subr.bf16.mxu0 0
    %2892 = vmatpush1.bf16.msra.mxu0 0
    %2893 = vmatprep.subr.bf16.mxu0 0
    %2894 = vmatpush1.bf16.msra.mxu0 0
    %2895 = vmatprep.subr.bf16.mxu0 0
    %2896 = vmatpush1.bf16.msra.mxu0 0
    %2897 = vmatprep.subr.bf16.mxu0 0
    %2898 = vmatpush1.bf16.msra.mxu0 0
    %2899 = vmatprep.subr.bf16.mxu0 0
    %2900 = vmatpush1.bf16.msra.mxu0 0
    %2901 = vmatprep.subr.bf16.mxu0 0
    %2902 = vmatpush1.bf16.msra.mxu0 0
    %2903 = vmatprep.subr.bf16.mxu0 0
    %2904 = vmatpush1.bf16.msra.mxu0 0
    %2905 = vmatprep.subr.bf16.mxu0 0
    %2906 = vmatpush1.bf16.msra.mxu0 0
    %2907 = vmatprep.subr.bf16.mxu0 0
    %2908 = vmatpush1.bf16.msra.mxu0 0
    %2909 = vmatprep.subr.bf16.mxu0 0
    %2910 = vmatpush1.bf16.msra.mxu0 0
    %2911 = vmatprep.subr.bf16.mxu0 0
    %2912 = vmatpush1.bf16.msra.mxu0 0
    %2913 = vmatprep.subr.bf16.mxu0 0
    %2914 = vmatpush1.bf16.msra.mxu0 0
    %2915 = vmatprep.mubr.bf16.mxu0 0
    %2916 = vmatmul.mubr.bf16.gmra.mrb[0].mxu0 %v2881
    %v2917 = vpop.f32.mrb[0].mxu0
    %v2918 = vadd.f32 %v2878, %v2917
    %v2919 = vpop.f32.mrb[0].mxu0
    %v2920 = vpop.f32.mrb[0].mxu0
    %v2921 = vadd.f32 %v2878, %v2920
    %v2922 = vpop.f32.mrb[0].mxu0
    %2923 = vdwg.mxu0
    %2926 = vrot.lane.b32.xlu0 %v2872, 96
    %v2927 = vpop.permute.xlu0 %2926
    %2928 = vrot.lane.b32.xlu0 %v2873, 96
    %v2929 = vpop.permute.xlu0 %2928
    %2932 = vrot.lane.b32.xlu0 %v2878, 96
    %v2933 = vpop.permute.xlu0 %2932
    %2935 = vmatprep.subr.bf16.mxu0 0
    %2936 = vmatpush1.bf16.msra.mxu0 %v2927
    %2937 = vmatprep.subr.bf16.mxu0 0
    %2938 = vmatpush1.bf16.msra.mxu0 %v2929
    %2939 = vmatprep.subr.bf16.mxu0 0
    %2940 = vmatpush1.bf16.msra.mxu0 0
    %2941 = vmatprep.subr.bf16.mxu0 0
    %2942 = vmatpush1.bf16.msra.mxu0 0
    %2943 = vmatprep.subr.bf16.mxu0 0
    %2944 = vmatpush1.bf16.msra.mxu0 0
    %2945 = vmatprep.subr.bf16.mxu0 0
    %2946 = vmatpush1.bf16.msra.mxu0 0
    %2947 = vmatprep.subr.bf16.mxu0 0
    %2948 = vmatpush1.bf16.msra.mxu0 0
    %2949 = vmatprep.subr.bf16.mxu0 0
    %2950 = vmatpush1.bf16.msra.mxu0 0
    %2951 = vmatprep.subr.bf16.mxu0 0
    %2952 = vmatpush1.bf16.msra.mxu0 0
    %2953 = vmatprep.subr.bf16.mxu0 0
    %2954 = vmatpush1.bf16.msra.mxu0 0
    %2955 = vmatprep.subr.bf16.mxu0 0
    %2956 = vmatpush1.bf16.msra.mxu0 0
    %2957 = vmatprep.subr.bf16.mxu0 0
    %2958 = vmatpush1.bf16.msra.mxu0 0
    %2959 = vmatprep.subr.bf16.mxu0 0
    %2960 = vmatpush1.bf16.msra.mxu0 0
    %2961 = vmatprep.subr.bf16.mxu0 0
    %2962 = vmatpush1.bf16.msra.mxu0 0
    %2963 = vmatprep.subr.bf16.mxu0 0
    %2964 = vmatpush1.bf16.msra.mxu0 0
    %2965 = vmatprep.subr.bf16.mxu0 0
    %2966 = vmatpush1.bf16.msra.mxu0 0
    %2967 = vmatprep.mubr.bf16.mxu0 0
    %2968 = vmatmul.mubr.bf16.gmra.mrb[0].mxu0 %v590
    %v2969 = vpop.f32.mrb[0].mxu0
    %v2970 = vadd.f32 %v2933, %v2969
    %v2971 = vpop.f32.mrb[0].mxu0
    %v2972 = vpop.f32.mrb[0].mxu0
    %v2973 = vadd.f32 %v2933, %v2972
    %v2974 = vpop.f32.mrb[0].mxu0
    %2975 = vdwg.mxu0
    %v2976 = vpack.c.bf16 %v2921, %v2918
    %v2977 = vpack.c.bf16 %v2973, %v2970
    %v2979 = vsel %vm637, %v2976, 0
    %v2982 = vsel %vm637, %v2977, 0
    %2984 = vmatprep.subr.bf16.mxu0 0
    %2985 = vmatpush1.bf16.xpose.msra.mxu0 %v2982
    %2986 = vmatprep.subr.bf16.mxu0 0
    %2987 = vmatpush1.bf16.xpose.msra.mxu0 0
    %2988 = vmatprep.subr.bf16.mxu0 0
    %2989 = vmatpush1.bf16.xpose.msra.mxu0 0
    %2990 = vmatprep.subr.bf16.mxu0 0
    %2991 = vmatpush1.bf16.xpose.msra.mxu0 0
    %2992 = vmatprep.subr.bf16.mxu0 0
    %2993 = vmatpush1.bf16.xpose.msra.mxu0 0
    %2994 = vmatprep.subr.bf16.mxu0 0
    %2995 = vmatpush1.bf16.xpose.msra.mxu0 0
    %2996 = vmatprep.subr.bf16.mxu0 0
    %2997 = vmatpush1.bf16.xpose.msra.mxu0 0
    %2998 = vmatprep.subr.bf16.mxu0 0
    %2999 = vmatpush1.bf16.xpose.msra.mxu0 0
    %3000 = vmatprep.subr.bf16.mxu0 0
    %3001 = vmatpush1.bf16.xpose.msra.mxu0 0
    %3002 = vmatprep.subr.bf16.mxu0 0
    %3003 = vmatpush1.bf16.xpose.msra.mxu0 0
    %3004 = vmatprep.subr.bf16.mxu0 0
    %3005 = vmatpush1.bf16.xpose.msra.mxu0 0
    %3006 = vmatprep.subr.bf16.mxu0 0
    %3007 = vmatpush1.bf16.xpose.msra.mxu0 0
    %3008 = vmatprep.subr.bf16.mxu0 0
    %3009 = vmatpush1.bf16.xpose.msra.mxu0 0
    %3010 = vmatprep.subr.bf16.mxu0 0
    %3011 = vmatpush1.bf16.xpose.msra.mxu0 0
    %3012 = vmatprep.subr.bf16.mxu0 0
    %3013 = vmatpush1.bf16.xpose.msra.mxu0 0
    %3014 = vmatprep.subr.bf16.mxu0 0
    %3015 = vmatpush1.bf16.xpose.msra.mxu0 0
    %3016 = vmatprep.mubr.bf16.mxu0 0
    %3017 = vmatmul.mubr.bf16.gmra.mrb[0].mxu0 %v2979
    %v3018 = vpop.f32.mrb[0].mxu0
    %v3019 = vadd.f32 0.0, %v3018
    %v3020 = vpop.f32.mrb[0].mxu0
    %v3021 = vpop.f32.mrb[0].mxu0
    %v3022 = vadd.f32 0.0, %v3021
    %v3023 = vpop.f32.mrb[0].mxu0
    %3024 = vdwg.mxu0
    %v3025 = vmul.f32 %v3019, 0.35355338
    %v3026 = vmul.f32 %v3022, 0.35355338
    %v3027 = vadd.f32 %v3025, %v432
    %v3028 = vadd.f32 %v3026, %v433
    %v3029 = vsel %vm689, %v3027, -inf
    %3030 = vmax.xlane.f32.xlu0 %v3029
    %v3031 = vpop.xlane.xlu0 %3030
    %v3032 = vsel %vm689, %v3028, -inf
    %3033 = vmax.xlane.f32.xlu0 %v3032
    %v3034 = vpop.xlane.xlu0 %3033
    %v3035 = vsub.f32 %v3027, %v3031
    %v3036 = vsub.f32 %v3028, %v3034
    %v3037 = vmul.f32 %v3035, 1.442695
    %v3038 = vpow.pop %v3037
    %v3039 = vmul.f32 %v3036, 1.442695
    %v3040 = vpow.pop %v3039
    %v3041 = vsel %vm689, %v3038, 0.0
    %3042 = vadd.xlane.f32.xlu0 %v3041
    %v3043 = vpop.xlane.xlu0 %3042
    %v3044 = vsel %vm689, %v3040, 0.0
    %3045 = vadd.xlane.f32.xlu0 %v3044
    %v3046 = vpop.xlane.xlu0 %3045
    %v3047 = vrcp.pop %v3043
    %v3048 = vmul.f32 %v3038, %v3047
    %v3049 = vrcp.pop %v3046
    %v3050 = vmul.f32 %v3040, %v3049
    %v3051 = vpack.c.bf16 %v3050, %v3048
    %3053 = vrot.lane.b32.xlu0 %v2977, 96
    %v3054 = vpop.permute.xlu0 %3053
    %v3057 = vsel %vm689, %v3051, 0
    %3059 = vmatprep.subr.bf16.mxu0 0
    %3060 = vmatpush1.bf16.msra.mxu0 %v3054
    %3061 = vmatprep.subr.bf16.mxu0 0
    %3062 = vmatpush1.bf16.msra.mxu0 0
    %3063 = vmatprep.subr.bf16.mxu0 0
    %3064 = vmatpush1.bf16.msra.mxu0 0
    %3065 = vmatprep.subr.bf16.mxu0 0
    %3066 = vmatpush1.bf16.msra.mxu0 0
    %3067 = vmatprep.subr.bf16.mxu0 0
    %3068 = vmatpush1.bf16.msra.mxu0 0
    %3069 = vmatprep.subr.bf16.mxu0 0
    %3070 = vmatpush1.bf16.msra.mxu0 0
    %3071 = vmatprep.subr.bf16.mxu0 0
    %3072 = vmatpush1.bf16.msra.mxu0 0
    %3073 = vmatprep.subr.bf16.mxu0 0
    %3074 = vmatpush1.bf16.msra.mxu0 0
    %3075 = vmatprep.subr.bf16.mxu0 0
    %3076 = vmatpush1.bf16.msra.mxu0 0
    %3077 = vmatprep.subr.bf16.mxu0 0
    %3078 = vmatpush1.bf16.msra.mxu0 0
    %3079 = vmatprep.subr.bf16.mxu0 0
    %3080 = vmatpush1.bf16.msra.mxu0 0
    %3081 = vmatprep.subr.bf16.mxu0 0
    %3082 = vmatpush1.bf16.msra.mxu0 0
    %3083 = vmatprep.subr.bf16.mxu0 0
    %3084 = vmatpush1.bf16.msra.mxu0 0
    %3085 = vmatprep.subr.bf16.mxu0 0
    %3086 = vmatpush1.bf16.msra.mxu0 0
    %3087 = vmatprep.subr.bf16.mxu0 0
    %3088 = vmatpush1.bf16.msra.mxu0 0
    %3089 = vmatprep.subr.bf16.mxu0 0
    %3090 = vmatpush1.bf16.msra.mxu0 0
    %3091 = vmatprep.mubr.bf16.mxu0 0
    %3092 = vmatmul.mubr.bf16.gmra.mrb[0].mxu0 %v3057
    %v3093 = vpop.f32.mrb[0].mxu0
    %v3094 = vadd.f32 0.0, %v3093
    %v3095 = vpop.f32.mrb[0].mxu0
    %v3096 = vpop.f32.mrb[0].mxu0
    %v3097 = vadd.f32 0.0, %v3096
    %v3098 = vpop.f32.mrb[0].mxu0
    %3099 = vdwg.mxu0
    %3101 = vrot.lane.b32.xlu0 %v2976, 120
    %v3102 = vpop.permute.xlu0 %3101
    %3103 = vrot.lane.b32.xlu0 %v2977, 120
    %v3104 = vpop.permute.xlu0 %3103
    %v3106 = vsel %vm637, %v3102, 0
    %v3109 = vsel %vm637, %v3104, 0
    %3111 = vmatprep.subr.bf16.mxu0 0
    %3112 = vmatpush1.bf16.xpose.msra.mxu0 %v3109
    %3113 = vmatprep.subr.bf16.mxu0 0
    %3114 = vmatpush1.bf16.xpose.msra.mxu0 0
    %3115 = vmatprep.subr.bf16.mxu0 0
    %3116 = vmatpush1.bf16.xpose.msra.mxu0 0
    %3117 = vmatprep.subr.bf16.mxu0 0
    %3118 = vmatpush1.bf16.xpose.msra.mxu0 0
    %3119 = vmatprep.subr.bf16.mxu0 0
    %3120 = vmatpush1.bf16.xpose.msra.mxu0 0
    %3121 = vmatprep.subr.bf16.mxu0 0
    %3122 = vmatpush1.bf16.xpose.msra.mxu0 0
    %3123 = vmatprep.subr.bf16.mxu0 0
    %3124 = vmatpush1.bf16.xpose.msra.mxu0 0
    %3125 = vmatprep.subr.bf16.mxu0 0
    %3126 = vmatpush1.bf16.xpose.msra.mxu0 0
    %3127 = vmatprep.subr.bf16.mxu0 0
    %3128 = vmatpush1.bf16.xpose.msra.mxu0 0
    %3129 = vmatprep.subr.bf16.mxu0 0
    %3130 = vmatpush1.bf16.xpose.msra.mxu0 0
    %3131 = vmatprep.subr.bf16.mxu0 0
    %3132 = vmatpush1.bf16.xpose.msra.mxu0 0
    %3133 = vmatprep.subr.bf16.mxu0 0
    %3134 = vmatpush1.bf16.xpose.msra.mxu0 0
    %3135 = vmatprep.subr.bf16.mxu0 0
    %3136 = vmatpush1.bf16.xpose.msra.mxu0 0
    %3137 = vmatprep.subr.bf16.mxu0 0
    %3138 = vmatpush1.bf16.xpose.msra.mxu0 0
    %3139 = vmatprep.subr.bf16.mxu0 0
    %3140 = vmatpush1.bf16.xpose.msra.mxu0 0
    %3141 = vmatprep.subr.bf16.mxu0 0
    %3142 = vmatpush1.bf16.xpose.msra.mxu0 0
    %3143 = vmatprep.mubr.bf16.mxu0 0
    %3144 = vmatmul.mubr.bf16.gmra.mrb[0].mxu0 %v3106
    %v3145 = vpop.f32.mrb[0].mxu0
    %v3146 = vadd.f32 0.0, %v3145
    %v3147 = vpop.f32.mrb[0].mxu0
    %v3148 = vpop.f32.mrb[0].mxu0
    %v3149 = vadd.f32 0.0, %v3148
    %v3150 = vpop.f32.mrb[0].mxu0
    %3151 = vdwg.mxu0
    %v3152 = vmul.f32 %v3146, 0.35355338
    %v3153 = vmul.f32 %v3149, 0.35355338
    %v3154 = vadd.f32 %v3152, %v432
    %v3155 = vadd.f32 %v3153, %v433
    %v3156 = vsel %vm689, %v3154, -inf
    %3157 = vmax.xlane.f32.xlu0 %v3156
    %v3158 = vpop.xlane.xlu0 %3157
    %v3159 = vsel %vm689, %v3155, -inf
    %3160 = vmax.xlane.f32.xlu0 %v3159
    %v3161 = vpop.xlane.xlu0 %3160
    %v3162 = vsub.f32 %v3154, %v3158
    %v3163 = vsub.f32 %v3155, %v3161
    %v3164 = vmul.f32 %v3162, 1.442695
    %v3165 = vpow.pop %v3164
    %v3166 = vmul.f32 %v3163, 1.442695
    %v3167 = vpow.pop %v3166
    %v3168 = vsel %vm689, %v3165, 0.0
    %3169 = vadd.xlane.f32.xlu0 %v3168
    %v3170 = vpop.xlane.xlu0 %3169
    %v3171 = vsel %vm689, %v3167, 0.0
    %3172 = vadd.xlane.f32.xlu0 %v3171
    %v3173 = vpop.xlane.xlu0 %3172
    %v3174 = vrcp.pop %v3170
    %v3175 = vmul.f32 %v3165, %v3174
    %v3176 = vrcp.pop %v3173
    %v3177 = vmul.f32 %v3167, %v3176
    %v3178 = vpack.c.bf16 %v3177, %v3175
    %3179 = vrot.lane.b32.xlu0 %v2977, 88
    %v3180 = vpop.permute.xlu0 %3179
    %v3183 = vsel %vm689, %v3178, 0
    %3185 = vmatprep.subr.bf16.mxu0 0
    %3186 = vmatpush1.bf16.msra.mxu0 %v3180
    %3187 = vmatprep.subr.bf16.mxu0 0
    %3188 = vmatpush1.bf16.msra.mxu0 0
    %3189 = vmatprep.subr.bf16.mxu0 0
    %3190 = vmatpush1.bf16.msra.mxu0 0
    %3191 = vmatprep.subr.bf16.mxu0 0
    %3192 = vmatpush1.bf16.msra.mxu0 0
    %3193 = vmatprep.subr.bf16.mxu0 0
    %3194 = vmatpush1.bf16.msra.mxu0 0
    %3195 = vmatprep.subr.bf16.mxu0 0
    %3196 = vmatpush1.bf16.msra.mxu0 0
    %3197 = vmatprep.subr.bf16.mxu0 0
    %3198 = vmatpush1.bf16.msra.mxu0 0
    %3199 = vmatprep.subr.bf16.mxu0 0
    %3200 = vmatpush1.bf16.msra.mxu0 0
    %3201 = vmatprep.subr.bf16.mxu0 0
    %3202 = vmatpush1.bf16.msra.mxu0 0
    %3203 = vmatprep.subr.bf16.mxu0 0
    %3204 = vmatpush1.bf16.msra.mxu0 0
    %3205 = vmatprep.subr.bf16.mxu0 0
    %3206 = vmatpush1.bf16.msra.mxu0 0
    %3207 = vmatprep.subr.bf16.mxu0 0
    %3208 = vmatpush1.bf16.msra.mxu0 0
    %3209 = vmatprep.subr.bf16.mxu0 0
    %3210 = vmatpush1.bf16.msra.mxu0 0
    %3211 = vmatprep.subr.bf16.mxu0 0
    %3212 = vmatpush1.bf16.msra.mxu0 0
    %3213 = vmatprep.subr.bf16.mxu0 0
    %3214 = vmatpush1.bf16.msra.mxu0 0
    %3215 = vmatprep.subr.bf16.mxu0 0
    %3216 = vmatpush1.bf16.msra.mxu0 0
    %3217 = vmatprep.mubr.bf16.mxu0 0
    %3218 = vmatmul.mubr.bf16.gmra.mrb[0].mxu0 %v3183
    %v3219 = vpop.f32.mrb[0].mxu0
    %v3220 = vadd.f32 0.0, %v3219
    %v3221 = vpop.f32.mrb[0].mxu0
    %v3222 = vpop.f32.mrb[0].mxu0
    %v3223 = vadd.f32 0.0, %v3222
    %v3224 = vpop.f32.mrb[0].mxu0
    %3225 = vdwg.mxu0
    %3226 = vrot.lane.b32.xlu0 %v2976, 112
    %v3227 = vpop.permute.xlu0 %3226
    %3228 = vrot.lane.b32.xlu0 %v2977, 112
    %v3229 = vpop.permute.xlu0 %3228
    %v3231 = vsel %vm637, %v3227, 0
    %v3234 = vsel %vm637, %v3229, 0
    %3236 = vmatprep.subr.bf16.mxu0 0
    %3237 = vmatpush1.bf16.xpose.msra.mxu0 %v3234
    %3238 = vmatprep.subr.bf16.mxu0 0
    %3239 = vmatpush1.bf16.xpose.msra.mxu0 0
    %3240 = vmatprep.subr.bf16.mxu0 0
    %3241 = vmatpush1.bf16.xpose.msra.mxu0 0
    %3242 = vmatprep.subr.bf16.mxu0 0
    %3243 = vmatpush1.bf16.xpose.msra.mxu0 0
    %3244 = vmatprep.subr.bf16.mxu0 0
    %3245 = vmatpush1.bf16.xpose.msra.mxu0 0
    %3246 = vmatprep.subr.bf16.mxu0 0
    %3247 = vmatpush1.bf16.xpose.msra.mxu0 0
    %3248 = vmatprep.subr.bf16.mxu0 0
    %3249 = vmatpush1.bf16.xpose.msra.mxu0 0
    %3250 = vmatprep.subr.bf16.mxu0 0
    %3251 = vmatpush1.bf16.xpose.msra.mxu0 0
    %3252 = vmatprep.subr.bf16.mxu0 0
    %3253 = vmatpush1.bf16.xpose.msra.mxu0 0
    %3254 = vmatprep.subr.bf16.mxu0 0
    %3255 = vmatpush1.bf16.xpose.msra.mxu0 0
    %3256 = vmatprep.subr.bf16.mxu0 0
    %3257 = vmatpush1.bf16.xpose.msra.mxu0 0
    %3258 = vmatprep.subr.bf16.mxu0 0
    %3259 = vmatpush1.bf16.xpose.msra.mxu0 0
    %3260 = vmatprep.subr.bf16.mxu0 0
    %3261 = vmatpush1.bf16.xpose.msra.mxu0 0
    %3262 = vmatprep.subr.bf16.mxu0 0
    %3263 = vmatpush1.bf16.xpose.msra.mxu0 0
    %3264 = vmatprep.subr.bf16.mxu0 0
    %3265 = vmatpush1.bf16.xpose.msra.mxu0 0
    %3266 = vmatprep.subr.bf16.mxu0 0
    %3267 = vmatpush1.bf16.xpose.msra.mxu0 0
    %3268 = vmatprep.mubr.bf16.mxu0 0
    %3269 = vmatmul.mubr.bf16.gmra.mrb[0].mxu0 %v3231
    %v3270 = vpop.f32.mrb[0].mxu0
    %v3271 = vadd.f32 0.0, %v3270
    %v3272 = vpop.f32.mrb[0].mxu0
    %v3273 = vpop.f32.mrb[0].mxu0
    %v3274 = vadd.f32 0.0, %v3273
    %v3275 = vpop.f32.mrb[0].mxu0
    %3276 = vdwg.mxu0
    %v3277 = vmul.f32 %v3271, 0.35355338
    %v3278 = vmul.f32 %v3274, 0.35355338
    %v3279 = vadd.f32 %v3277, %v432
    %v3280 = vadd.f32 %v3278, %v433
    %v3281 = vsel %vm689, %v3279, -inf
    %3282 = vmax.xlane.f32.xlu0 %v3281
    %v3283 = vpop.xlane.xlu0 %3282
    %v3284 = vsel %vm689, %v3280, -inf
    %3285 = vmax.xlane.f32.xlu0 %v3284
    %v3286 = vpop.xlane.xlu0 %3285
    %v3287 = vsub.f32 %v3279, %v3283
    %v3288 = vsub.f32 %v3280, %v3286
    %v3289 = vmul.f32 %v3287, 1.442695
    %v3290 = vpow.pop %v3289
    %v3291 = vmul.f32 %v3288, 1.442695
    %v3292 = vpow.pop %v3291
    %v3293 = vsel %vm689, %v3290, 0.0
    %3294 = vadd.xlane.f32.xlu0 %v3293
    %v3295 = vpop.xlane.xlu0 %3294
    %v3296 = vsel %vm689, %v3292, 0.0
    %3297 = vadd.xlane.f32.xlu0 %v3296
    %v3298 = vpop.xlane.xlu0 %3297
    %v3299 = vrcp.pop %v3295
    %v3300 = vmul.f32 %v3290, %v3299
    %v3301 = vrcp.pop %v3298
    %v3302 = vmul.f32 %v3292, %v3301
    %v3303 = vpack.c.bf16 %v3302, %v3300
    %3304 = vrot.lane.b32.xlu0 %v2977, 80
    %v3305 = vpop.permute.xlu0 %3304
    %v3308 = vsel %vm689, %v3303, 0
    %3310 = vmatprep.subr.bf16.mxu0 0
    %3311 = vmatpush1.bf16.msra.mxu0 %v3305
    %3312 = vmatprep.subr.bf16.mxu0 0
    %3313 = vmatpush1.bf16.msra.mxu0 0
    %3314 = vmatprep.subr.bf16.mxu0 0
    %3315 = vmatpush1.bf16.msra.mxu0 0
    %3316 = vmatprep.subr.bf16.mxu0 0
    %3317 = vmatpush1.bf16.msra.mxu0 0
    %3318 = vmatprep.subr.bf16.mxu0 0
    %3319 = vmatpush1.bf16.msra.mxu0 0
    %3320 = vmatprep.subr.bf16.mxu0 0
    %3321 = vmatpush1.bf16.msra.mxu0 0
    %3322 = vmatprep.subr.bf16.mxu0 0
    %3323 = vmatpush1.bf16.msra.mxu0 0
    %3324 = vmatprep.subr.bf16.mxu0 0
    %3325 = vmatpush1.bf16.msra.mxu0 0
    %3326 = vmatprep.subr.bf16.mxu0 0
    %3327 = vmatpush1.bf16.msra.mxu0 0
    %3328 = vmatprep.subr.bf16.mxu0 0
    %3329 = vmatpush1.bf16.msra.mxu0 0
    %3330 = vmatprep.subr.bf16.mxu0 0
    %3331 = vmatpush1.bf16.msra.mxu0 0
    %3332 = vmatprep.subr.bf16.mxu0 0
    %3333 = vmatpush1.bf16.msra.mxu0 0
    %3334 = vmatprep.subr.bf16.mxu0 0
    %3335 = vmatpush1.bf16.msra.mxu0 0
    %3336 = vmatprep.subr.bf16.mxu0 0
    %3337 = vmatpush1.bf16.msra.mxu0 0
    %3338 = vmatprep.subr.bf16.mxu0 0
    %3339 = vmatpush1.bf16.msra.mxu0 0
    %3340 = vmatprep.subr.bf16.mxu0 0
    %3341 = vmatpush1.bf16.msra.mxu0 0
    %3342 = vmatprep.mubr.bf16.mxu0 0
    %3343 = vmatmul.mubr.bf16.gmra.mrb[0].mxu0 %v3308
    %v3344 = vpop.f32.mrb[0].mxu0
    %v3345 = vadd.f32 0.0, %v3344
    %v3346 = vpop.f32.mrb[0].mxu0
    %v3347 = vpop.f32.mrb[0].mxu0
    %v3348 = vadd.f32 0.0, %v3347
    %v3349 = vpop.f32.mrb[0].mxu0
    %3350 = vdwg.mxu0
    %3351 = vrot.lane.b32.xlu0 %v2976, 104
    %v3352 = vpop.permute.xlu0 %3351
    %3353 = vrot.lane.b32.xlu0 %v2977, 104
    %v3354 = vpop.permute.xlu0 %3353
    %v3356 = vsel %vm637, %v3352, 0
    %v3359 = vsel %vm637, %v3354, 0
    %3361 = vmatprep.subr.bf16.mxu0 0
    %3362 = vmatpush1.bf16.xpose.msra.mxu0 %v3359
    %3363 = vmatprep.subr.bf16.mxu0 0
    %3364 = vmatpush1.bf16.xpose.msra.mxu0 0
    %3365 = vmatprep.subr.bf16.mxu0 0
    %3366 = vmatpush1.bf16.xpose.msra.mxu0 0
    %3367 = vmatprep.subr.bf16.mxu0 0
    %3368 = vmatpush1.bf16.xpose.msra.mxu0 0
    %3369 = vmatprep.subr.bf16.mxu0 0
    %3370 = vmatpush1.bf16.xpose.msra.mxu0 0
    %3371 = vmatprep.subr.bf16.mxu0 0
    %3372 = vmatpush1.bf16.xpose.msra.mxu0 0
    %3373 = vmatprep.subr.bf16.mxu0 0
    %3374 = vmatpush1.bf16.xpose.msra.mxu0 0
    %3375 = vmatprep.subr.bf16.mxu0 0
    %3376 = vmatpush1.bf16.xpose.msra.mxu0 0
    %3377 = vmatprep.subr.bf16.mxu0 0
    %3378 = vmatpush1.bf16.xpose.msra.mxu0 0
    %3379 = vmatprep.subr.bf16.mxu0 0
    %3380 = vmatpush1.bf16.xpose.msra.mxu0 0
    %3381 = vmatprep.subr.bf16.mxu0 0
    %3382 = vmatpush1.bf16.xpose.msra.mxu0 0
    %3383 = vmatprep.subr.bf16.mxu0 0
    %3384 = vmatpush1.bf16.xpose.msra.mxu0 0
    %3385 = vmatprep.subr.bf16.mxu0 0
    %3386 = vmatpush1.bf16.xpose.msra.mxu0 0
    %3387 = vmatprep.subr.bf16.mxu0 0
    %3388 = vmatpush1.bf16.xpose.msra.mxu0 0
    %3389 = vmatprep.subr.bf16.mxu0 0
    %3390 = vmatpush1.bf16.xpose.msra.mxu0 0
    %3391 = vmatprep.subr.bf16.mxu0 0
    %3392 = vmatpush1.bf16.xpose.msra.mxu0 0
    %3393 = vmatprep.mubr.bf16.mxu0 0
    %3394 = vmatmul.mubr.bf16.gmra.mrb[0].mxu0 %v3356
    %v3395 = vpop.f32.mrb[0].mxu0
    %v3396 = vadd.f32 0.0, %v3395
    %v3397 = vpop.f32.mrb[0].mxu0
    %v3398 = vpop.f32.mrb[0].mxu0
    %v3399 = vadd.f32 0.0, %v3398
    %v3400 = vpop.f32.mrb[0].mxu0
    %3401 = vdwg.mxu0
    %v3402 = vmul.f32 %v3396, 0.35355338
    %v3403 = vmul.f32 %v3399, 0.35355338
    %v3404 = vadd.f32 %v3402, %v432
    %v3405 = vadd.f32 %v3403, %v433
    %v3406 = vsel %vm689, %v3404, -inf
    %3407 = vmax.xlane.f32.xlu0 %v3406
    %v3408 = vpop.xlane.xlu0 %3407
    %v3409 = vsel %vm689, %v3405, -inf
    %3410 = vmax.xlane.f32.xlu0 %v3409
    %v3411 = vpop.xlane.xlu0 %3410
    %v3412 = vsub.f32 %v3404, %v3408
    %v3413 = vsub.f32 %v3405, %v3411
    %v3414 = vmul.f32 %v3412, 1.442695
    %v3415 = vpow.pop %v3414
    %v3416 = vmul.f32 %v3413, 1.442695
    %v3417 = vpow.pop %v3416
    %v3418 = vsel %vm689, %v3415, 0.0
    %3419 = vadd.xlane.f32.xlu0 %v3418
    %v3420 = vpop.xlane.xlu0 %3419
    %v3421 = vsel %vm689, %v3417, 0.0
    %3422 = vadd.xlane.f32.xlu0 %v3421
    %v3423 = vpop.xlane.xlu0 %3422
    %v3424 = vrcp.pop %v3420
    %v3425 = vmul.f32 %v3415, %v3424
    %v3426 = vrcp.pop %v3423
    %v3427 = vmul.f32 %v3417, %v3426
    %v3428 = vpack.c.bf16 %v3427, %v3425
    %3429 = vrot.lane.b32.xlu0 %v2977, 72
    %v3430 = vpop.permute.xlu0 %3429
    %v3433 = vsel %vm689, %v3428, 0
    %3435 = vmatprep.subr.bf16.mxu0 0
    %3436 = vmatpush1.bf16.msra.mxu0 %v3430
    %3437 = vmatprep.subr.bf16.mxu0 0
    %3438 = vmatpush1.bf16.msra.mxu0 0
    %3439 = vmatprep.subr.bf16.mxu0 0
    %3440 = vmatpush1.bf16.msra.mxu0 0
    %3441 = vmatprep.subr.bf16.mxu0 0
    %3442 = vmatpush1.bf16.msra.mxu0 0
    %3443 = vmatprep.subr.bf16.mxu0 0
    %3444 = vmatpush1.bf16.msra.mxu0 0
    %3445 = vmatprep.subr.bf16.mxu0 0
    %3446 = vmatpush1.bf16.msra.mxu0 0
    %3447 = vmatprep.subr.bf16.mxu0 0
    %3448 = vmatpush1.bf16.msra.mxu0 0
    %3449 = vmatprep.subr.bf16.mxu0 0
    %3450 = vmatpush1.bf16.msra.mxu0 0
    %3451 = vmatprep.subr.bf16.mxu0 0
    %3452 = vmatpush1.bf16.msra.mxu0 0
    %3453 = vmatprep.subr.bf16.mxu0 0
    %3454 = vmatpush1.bf16.msra.mxu0 0
    %3455 = vmatprep.subr.bf16.mxu0 0
    %3456 = vmatpush1.bf16.msra.mxu0 0
    %3457 = vmatprep.subr.bf16.mxu0 0
    %3458 = vmatpush1.bf16.msra.mxu0 0
    %3459 = vmatprep.subr.bf16.mxu0 0
    %3460 = vmatpush1.bf16.msra.mxu0 0
    %3461 = vmatprep.subr.bf16.mxu0 0
    %3462 = vmatpush1.bf16.msra.mxu0 0
    %3463 = vmatprep.subr.bf16.mxu0 0
    %3464 = vmatpush1.bf16.msra.mxu0 0
    %3465 = vmatprep.subr.bf16.mxu0 0
    %3466 = vmatpush1.bf16.msra.mxu0 0
    %3467 = vmatprep.mubr.bf16.mxu0 0
    %3468 = vmatmul.mubr.bf16.gmra.mrb[0].mxu0 %v3433
    %v3469 = vpop.f32.mrb[0].mxu0
    %v3470 = vadd.f32 0.0, %v3469
    %v3471 = vpop.f32.mrb[0].mxu0
    %v3472 = vpop.f32.mrb[0].mxu0
    %v3473 = vadd.f32 0.0, %v3472
    %v3474 = vpop.f32.mrb[0].mxu0
    %3475 = vdwg.mxu0
    %3478 = vrot.lane.b32.xlu0 %v3220, 8
    %v3479 = vpop.permute.xlu0 %3478
    %3480 = vrot.lane.b32.xlu0 %v3223, 8
    %v3481 = vpop.permute.xlu0 %3480
    %3486 = vrot.lane.b32.xlu0 %v3345, 16
    %v3487 = vpop.permute.xlu0 %3486
    %3488 = vrot.lane.b32.xlu0 %v3348, 16
    %v3489 = vpop.permute.xlu0 %3488
    %3494 = vrot.lane.b32.xlu0 %v3470, 24
    %v3495 = vpop.permute.xlu0 %3494
    %3496 = vrot.lane.b32.xlu0 %v3473, 24
    %v3497 = vpop.permute.xlu0 %3496
    %v3500 = vsel %vm637, %v3094, %v3479
    %v3501 = vsel %vm637, %v3097, %v3481
    %v3502 = vsel %vm689, %v3500, %v3487
    %v3503 = vsel %vm689, %v3501, %v3489
    %v3504 = vsel %vm1163, %v3502, %v3495
    %v3505 = vsel %vm1163, %v3503, %v3497
    %v3506 = vpack.c.bf16 %v3505, %v3504
    %v3507 = vpack.c.bf16 %v2167, %v2166
    %v3508 = vpack.c.bf16 %v2169, %v2168
    %v3510 = vlaneseq
    %v3511 = vshrl.u32 %v3510, 7
    %v3512 = vsub.s32 0, %v3511
    %v3513 = vrot.slane %v2170, %v3512
    %v3516 = vsel %vm588, %v3506, 0
    %3518 = vmatprep.subr.bf16.mxu0 0
    %3519 = vmatpush1.bf16.msra.mxu0 %v3507
    %3520 = vmatprep.subr.bf16.mxu0 0
    %3521 = vmatpush1.bf16.msra.mxu0 %v3508
    %3522 = vmatprep.subr.bf16.mxu0 0
    %3523 = vmatpush1.bf16.msra.mxu0 0
    %3524 = vmatprep.subr.bf16.mxu0 0
    %3525 = vmatpush1.bf16.msra.mxu0 0
    %3526 = vmatprep.subr.bf16.mxu0 0
    %3527 = vmatpush1.bf16.msra.mxu0 0
    %3528 = vmatprep.subr.bf16.mxu0 0
    %3529 = vmatpush1.bf16.msra.mxu0 0
    %3530 = vmatprep.subr.bf16.mxu0 0
    %3531 = vmatpush1.bf16.msra.mxu0 0
    %3532 = vmatprep.subr.bf16.mxu0 0
    %3533 = vmatpush1.bf16.msra.mxu0 0
    %3534 = vmatprep.subr.bf16.mxu0 0
    %3535 = vmatpush1.bf16.msra.mxu0 0
    %3536 = vmatprep.subr.bf16.mxu0 0
    %3537 = vmatpush1.bf16.msra.mxu0 0
    %3538 = vmatprep.subr.bf16.mxu0 0
    %3539 = vmatpush1.bf16.msra.mxu0 0
    %3540 = vmatprep.subr.bf16.mxu0 0
    %3541 = vmatpush1.bf16.msra.mxu0 0
    %3542 = vmatprep.subr.bf16.mxu0 0
    %3543 = vmatpush1.bf16.msra.mxu0 0
    %3544 = vmatprep.subr.bf16.mxu0 0
    %3545 = vmatpush1.bf16.msra.mxu0 0
    %3546 = vmatprep.subr.bf16.mxu0 0
    %3547 = vmatpush1.bf16.msra.mxu0 0
    %3548 = vmatprep.subr.bf16.mxu0 0
    %3549 = vmatpush1.bf16.msra.mxu0 0
    %3550 = vmatprep.mubr.bf16.mxu0 0
    %3551 = vmatmul.mubr.bf16.gmra.mrb[0].mxu0 %v3516
    %v3552 = vpop.f32.mrb[0].mxu0
    %v3553 = vadd.f32 %v3513, %v3552
    %v3554 = vpop.f32.mrb[0].mxu0
    %v3555 = vpop.f32.mrb[0].mxu0
    %v3556 = vadd.f32 %v3513, %v3555
    %v3557 = vpop.f32.mrb[0].mxu0
    %3558 = vdwg.mxu0
    %v3559 = vadd.f32 %v2869, %v3553
    %v3560 = vadd.f32 %v2870, %v3556
    %v3561 = vsel %vm588, %v3559, 0.0
    %3562 = vadd.xlane.f32.xlu0 %v3561
    %v3563 = vpop.xlane.xlu0 %3562
    %v3564 = vsel %vm588, %v3560, 0.0
    %3565 = vadd.xlane.f32.xlu0 %v3564
    %v3566 = vpop.xlane.xlu0 %3565
    %v3567 = vmul.f32 %v3563, %v1227
    %v3568 = vmul.f32 %v3566, %v1227
    %v3569 = vsub.f32 %v3559, %v3567
    %v3570 = vsub.f32 %v3560, %v3568
    %v3571 = vmul.f32 %v3569, %v3569
    %v3572 = vmul.f32 %v3570, %v3570
    %v3573 = vsel %vm588, %v3571, 0.0
    %3574 = vadd.xlane.f32.xlu0 %v3573
    %v3575 = vpop.xlane.xlu0 %3574
    %v3576 = vsel %vm588, %v3572, 0.0
    %3577 = vadd.xlane.f32.xlu0 %v3576
    %v3578 = vpop.xlane.xlu0 %3577
    %v3579 = vmul.f32 %v3575, %v1227
    %v3580 = vmul.f32 %v3578, %v1227
    %v3581 = vadd.f32 %v3579, 1e-05
    %v3582 = vadd.f32 %v3580, 1e-05
    %v3583 = vrsqrt.pop %v3581
    %v3584 = vrsqrt.pop %v3582
    %v3585 = vmul.f32 %v3569, %v3583
    %v3586 = vmul.f32 %v3570, %v3584
    %v3588 = vlaneseq
    %v3589 = vshrl.u32 %v3588, 7
    %v3590 = vsub.s32 0, %v3589
    %v3591 = vrot.slane %v2187, %v3590
    %v3593 = vmul.f32 %v3585, %v3591
    %v3594 = vmul.f32 %v3586, %v3591
    %v3596 = vlaneseq
    %v3597 = vshrl.u32 %v3596, 7
    %v3598 = vsub.s32 0, %v3597
    %v3599 = vrot.slane %v2188, %v3598
    %v3601 = vadd.f32 %v3593, %v3599
    %v3602 = vadd.f32 %v3594, %v3599
    %v3603 = vpack.c.bf16 %v3602, %v3601
    %v3604 = vpack.c.bf16 %v2172, %v2171
    %v3605 = vpack.c.bf16 %v2174, %v2173
    %v3607 = vlaneseq
    %v3608 = vshrl.u32 %v3607, 7
    %v3609 = vsub.s32 0, %v3608
    %v3610 = vrot.slane %v2175, %v3609
    %v3613 = vsel %vm588, %v3603, 0
    %3615 = vmatprep.subr.bf16.mxu0 0
    %3616 = vmatpush1.bf16.msra.mxu0 %v3604
    %3617 = vmatprep.subr.bf16.mxu0 0
    %3618 = vmatpush1.bf16.msra.mxu0 %v3605
    %3619 = vmatprep.subr.bf16.mxu0 0
    %3620 = vmatpush1.bf16.msra.mxu0 0
    %3621 = vmatprep.subr.bf16.mxu0 0
    %3622 = vmatpush1.bf16.msra.mxu0 0
    %3623 = vmatprep.subr.bf16.mxu0 0
    %3624 = vmatpush1.bf16.msra.mxu0 0
    %3625 = vmatprep.subr.bf16.mxu0 0
    %3626 = vmatpush1.bf16.msra.mxu0 0
    %3627 = vmatprep.subr.bf16.mxu0 0
    %3628 = vmatpush1.bf16.msra.mxu0 0
    %3629 = vmatprep.subr.bf16.mxu0 0
    %3630 = vmatpush1.bf16.msra.mxu0 0
    %3631 = vmatprep.subr.bf16.mxu0 0
    %3632 = vmatpush1.bf16.msra.mxu0 0
    %3633 = vmatprep.subr.bf16.mxu0 0
    %3634 = vmatpush1.bf16.msra.mxu0 0
    %3635 = vmatprep.subr.bf16.mxu0 0
    %3636 = vmatpush1.bf16.msra.mxu0 0
    %3637 = vmatprep.subr.bf16.mxu0 0
    %3638 = vmatpush1.bf16.msra.mxu0 0
    %3639 = vmatprep.subr.bf16.mxu0 0
    %3640 = vmatpush1.bf16.msra.mxu0 0
    %3641 = vmatprep.subr.bf16.mxu0 0
    %3642 = vmatpush1.bf16.msra.mxu0 0
    %3643 = vmatprep.subr.bf16.mxu0 0
    %3644 = vmatpush1.bf16.msra.mxu0 0
    %3645 = vmatprep.subr.bf16.mxu0 0
    %3646 = vmatpush1.bf16.msra.mxu0 0
    %3647 = vmatprep.mubr.bf16.mxu0 0
    %3648 = vmatmul.mubr.bf16.gmra.mrb[0].mxu0 %v3613
    %v3649 = vpop.f32.mrb[0].mxu0
    %v3650 = vadd.f32 %v3610, %v3649
    %v3651 = vpop.f32.mrb[0].mxu0
    %v3652 = vpop.f32.mrb[0].mxu0
    %v3653 = vadd.f32 %v3610, %v3652
    %v3654 = vpop.f32.mrb[0].mxu0
    %3655 = vdwg.mxu0
    %v3656 = vmax.f32 %v3650, 0.0
    %v3657 = vmax.f32 %v3653, 0.0
    %v3658 = vpack.c.bf16 %v3657, %v3656
    %v3659 = vpack.c.bf16 %v2177, %v2176
    %v3660 = vpack.c.bf16 %v2179, %v2178
    %v3661 = vpack.c.bf16 %v2181, %v2180
    %v3662 = vpack.c.bf16 %v2183, %v2182
    %v3664 = vlaneseq
    %v3665 = vshrl.u32 %v3664, 7
    %v3666 = vsub.s32 0, %v3665
    %v3667 = vrot.slane %v2184, %v3666
    %v3670 = vsel %vm2062, %v3658, 0
    %3672 = vmatprep.subr.bf16.mxu0 0
    %3673 = vmatpush1.bf16.msra.mxu0 %v3659
    %3674 = vmatprep.subr.bf16.mxu0 0
    %3675 = vmatpush1.bf16.msra.mxu0 %v3660
    %3676 = vmatprep.subr.bf16.mxu0 0
    %3677 = vmatpush1.bf16.msra.mxu0 %v3661
    %3678 = vmatprep.subr.bf16.mxu0 0
    %3679 = vmatpush1.bf16.msra.mxu0 %v3662
    %3680 = vmatprep.subr.bf16.mxu0 0
    %3681 = vmatpush1.bf16.msra.mxu0 0
    %3682 = vmatprep.subr.bf16.mxu0 0
    %3683 = vmatpush1.bf16.msra.mxu0 0
    %3684 = vmatprep.subr.bf16.mxu0 0
    %3685 = vmatpush1.bf16.msra.mxu0 0
    %3686 = vmatprep.subr.bf16.mxu0 0
    %3687 = vmatpush1.bf16.msra.mxu0 0
    %3688 = vmatprep.subr.bf16.mxu0 0
    %3689 = vmatpush1.bf16.msra.mxu0 0
    %3690 = vmatprep.subr.bf16.mxu0 0
    %3691 = vmatpush1.bf16.msra.mxu0 0
    %3692 = vmatprep.subr.bf16.mxu0 0
    %3693 = vmatpush1.bf16.msra.mxu0 0
    %3694 = vmatprep.subr.bf16.mxu0 0
    %3695 = vmatpush1.bf16.msra.mxu0 0
    %3696 = vmatprep.subr.bf16.mxu0 0
    %3697 = vmatpush1.bf16.msra.mxu0 0
    %3698 = vmatprep.subr.bf16.mxu0 0
    %3699 = vmatpush1.bf16.msra.mxu0 0
    %3700 = vmatprep.subr.bf16.mxu0 0
    %3701 = vmatpush1.bf16.msra.mxu0 0
    %3702 = vmatprep.subr.bf16.mxu0 0
    %3703 = vmatpush1.bf16.msra.mxu0 0
    %3704 = vmatprep.mubr.bf16.mxu0 0
    %3705 = vmatmul.mubr.bf16.gmra.mrb[0].mxu0 %v3670
    %v3706 = vpop.f32.mrb[0].mxu0
    %v3707 = vadd.f32 %v3667, %v3706
    %v3708 = vpop.f32.mrb[0].mxu0
    %v3709 = vpop.f32.mrb[0].mxu0
    %v3710 = vadd.f32 %v3667, %v3709
    %v3711 = vpop.f32.mrb[0].mxu0
    %3712 = vdwg.mxu0
    %v3713 = vadd.f32 %v3601, %v3707
    %v3714 = vadd.f32 %v3602, %v3710
    %v3715 = vsel %vm588, %v3713, 0.0
    %3716 = vadd.xlane.f32.xlu0 %v3715
    %v3717 = vpop.xlane.xlu0 %3716
    %v3718 = vsel %vm588, %v3714, 0.0
    %3719 = vadd.xlane.f32.xlu0 %v3718
    %v3720 = vpop.xlane.xlu0 %3719
    %v3721 = vmul.f32 %v3717, %v1227
    %v3722 = vmul.f32 %v3720, %v1227
    %v3723 = vsub.f32 %v3713, %v3721
    %v3724 = vsub.f32 %v3714, %v3722
    %v3725 = vmul.f32 %v3723, %v3723
    %v3726 = vmul.f32 %v3724, %v3724
    %v3727 = vsel %vm588, %v3725, 0.0
    %3728 = vadd.xlane.f32.xlu0 %v3727
    %v3729 = vpop.xlane.xlu0 %3728
    %v3730 = vsel %vm588, %v3726, 0.0
    %3731 = vadd.xlane.f32.xlu0 %v3730
    %v3732 = vpop.xlane.xlu0 %3731
    %v3733 = vmul.f32 %v3729, %v1227
    %v3734 = vmul.f32 %v3732, %v1227
    %v3735 = vadd.f32 %v3733, 1e-05
    %v3736 = vadd.f32 %v3734, 1e-05
    %v3737 = vrsqrt.pop %v3735
    %v3738 = vrsqrt.pop %v3736
    %v3739 = vmul.f32 %v3723, %v3737
    %v3740 = vmul.f32 %v3724, %v3738
    %v3742 = vlaneseq
    %v3743 = vshrl.u32 %v3742, 7
    %v3744 = vsub.s32 0, %v3743
    %v3745 = vrot.slane %v2189, %v3744
    %v3747 = vmul.f32 %v3739, %v3745
    %v3748 = vmul.f32 %v3740, %v3745
    %v3750 = vlaneseq
    %v3751 = vshrl.u32 %v3750, 7
    %v3752 = vsub.s32 0, %v3751
    %v3753 = vrot.slane %v2190, %v3752
    %v3755 = vadd.f32 %v3747, %v3753
    %v3756 = vadd.f32 %v3748, %v3753
    %v3757 = vld [vmem:[%s7] sm:$0xff]
    %v3758 = vld [vmem:[%s7 + $0x8] sm:$0xff]
    %v3759 = vld [vmem:[%s7 + $0x10] sm:$0xff]
    %v3760 = vld [vmem:[%s7 + $0x18] sm:$0xff]
    %v3761 = vpack.c.bf16 %v3756, %v3755
    %v3762 = vpack.c.bf16 %v3758, %v3757
    %v3763 = vpack.c.bf16 %v3760, %v3759
    %v3764 = vld [vmem:[#allocation7] sm:$0x1]
    %v3766 = vlaneseq
    %v3767 = vshrl.u32 %v3766, 7
    %v3768 = vsub.s32 0, %v3767
    %v3769 = vrot.slane %v3764, %v3768
    %v3772 = vsel %vm588, %v3761, 0
    %3774 = vmatprep.subr.bf16.mxu0 0
    %3775 = vmatpush1.bf16.msra.mxu0 %v3762
    %3776 = vmatprep.subr.bf16.mxu0 0
    %3777 = vmatpush1.bf16.msra.mxu0 %v3763
    %3778 = vmatprep.subr.bf16.mxu0 0
    %3779 = vmatpush1.bf16.msra.mxu0 0
    %3780 = vmatprep.subr.bf16.mxu0 0
    %3781 = vmatpush1.bf16.msra.mxu0 0
    %3782 = vmatprep.subr.bf16.mxu0 0
    %3783 = vmatpush1.bf16.msra.mxu0 0
    %3784 = vmatprep.subr.bf16.mxu0 0
    %3785 = vmatpush1.bf16.msra.mxu0 0
    %3786 = vmatprep.subr.bf16.mxu0 0
    %3787 = vmatpush1.bf16.msra.mxu0 0
    %3788 = vmatprep.subr.bf16.mxu0 0
    %3789 = vmatpush1.bf16.msra.mxu0 0
    %3790 = vmatprep.subr.bf16.mxu0 0
    %3791 = vmatpush1.bf16.msra.mxu0 0
    %3792 = vmatprep.subr.bf16.mxu0 0
    %3793 = vmatpush1.bf16.msra.mxu0 0
    %3794 = vmatprep.subr.bf16.mxu0 0
    %3795 = vmatpush1.bf16.msra.mxu0 0
    %3796 = vmatprep.subr.bf16.mxu0 0
    %3797 = vmatpush1.bf16.msra.mxu0 0
    %3798 = vmatprep.subr.bf16.mxu0 0
    %3799 = vmatpush1.bf16.msra.mxu0 0
    %3800 = vmatprep.subr.bf16.mxu0 0
    %3801 = vmatpush1.bf16.msra.mxu0 0
    %3802 = vmatprep.subr.bf16.mxu0 0
    %3803 = vmatpush1.bf16.msra.mxu0 0
    %3804 = vmatprep.subr.bf16.mxu0 0
    %3805 = vmatpush1.bf16.msra.mxu0 0
    %3806 = vmatprep.mubr.bf16.mxu0 0
    %3807 = vmatmul.mubr.bf16.gmra.mrb[0].mxu0 %v3772
    %v3808 = vpop.f32.mrb[0].mxu0
    %v3809 = vadd.f32 %v3769, %v3808
    %v3810 = vpop.f32.mrb[0].mxu0
    %v3811 = vpop.f32.mrb[0].mxu0
    %v3812 = vadd.f32 %v3769, %v3811
    %v3813 = vpop.f32.mrb[0].mxu0
    %3814 = vdwg.mxu0
    %3815 = vst [vmem:[#allocation34] sm:$0xff] %v3809
    %3816 = vst [vmem:[#allocation34 + $0x8] sm:$0xff] %v3812
    // Predicated region
    $region246: #{tpu_custom_call.1} parent=1 // pred_check
      _
    $region247: #{tpu_custom_call.1} parent=1 // pred_check_branch
      %3818 = sbr.rel (0) target = $region249
    $region248: #{tpu_custom_call.1} parent=1 // pred_region
      %s3820 = ssub.s32 256, 256
      %3821 = vsyncadd [#allocation4], %s3820
      %s3822 = sshll.u32 [#allocation34], 4
      %s3823 = int_to_ptr.vmem [resolvable:$true] %s3822
      %3828 = dma.vmem_to_hbm [thread:$0]  %s3823, 256, %s83, [#allocation4], 128, 128, 8
    $region249: #{tpu_custom_call.1} parent=1 // pred_fallthru
      _
    // Predicated region
    $region250: #{tpu_custom_call.1} parent=1 // pred_check
      _
    $region251: #{tpu_custom_call.1} parent=1 // pred_check_branch
      %3830 = sbr.rel (0) target = $region253
    $region252: #{tpu_custom_call.1} parent=1 // pred_region
      %3831 = dma.done [#allocation4], 256
    $region253: #{tpu_custom_call.1} parent=1 // pred_fallthru
      _
    %3832 = vsyncpa [#allocation3], 1
    %3833 = vsyncpa [#allocation6], 1
    %3834 = vsyncpa [#allocation9], 1
    %3835 = vsyncpa [#allocation12], 1
    %3836 = vsyncpa [#allocation15], 1
    %3837 = vsyncpa [#allocation18], 1
    %3838 = vsyncpa [#allocation21], 1
    %3839 = vsyncpa [#allocation24], 1
    %3840 = vsyncpa [#allocation27], 1
    %3841 = vsyncpa [#allocation30], 1
    %3842 = vsyncpa [#allocation33], 1
    %3843 = vsyncpa [#allocation4], 1

</llo_original>
